<compile_context>
chip_gen: v7x
topology: tpu7x:2x2x1
jax: 0.10.0
libtpu: 0.0.40
codegen_flags: <defaults>
</compile_context>

<pallas_src>
import math

import jax
import jax.numpy as jnp
from jax.experimental import pallas as pl
from jax.experimental.pallas import tpu as pltpu

_GELU_C0 = 0.7978845608028654              # sqrt(2/pi)
_GELU_C1 = 0.7978845608028654 * 0.044715   # sqrt(2/pi) * 0.044715


# ----------------------------- Fused Pallas kernel ---------------------------- #

def _mlp_fused_kernel(x_ref, w1_ref, b1_ref, w2_ref, b2_ref, o_ref):
    # x_ref : (TM, Din)   streamed row tile of tokens
    # w1_ref: (Din, Dh)   resident fc1 weight
    # b1_ref: (1, Dh)     resident fc1 bias (f32)
    # w2_ref: (Dh, Dout)  resident fc2 weight
    # b2_ref: (1, Dout)   resident fc2 bias (f32)
    # o_ref : (TM, Dout)
    x = x_ref[...].astype(w1_ref.dtype)          # in-kernel cast: free on VPU
    h = jnp.dot(x, w1_ref[...], preferred_element_type=jnp.float32)
    h = h + b1_ref[...]
    # tanh-form GELU, FMA-friendly; elementwise math stays f32 on all chips.
    # TODO(synk): PyTorch nn.GELU() default is the exact erf form; Mosaic has no
    # guaranteed erf lowering, so this is the tanh approximation (<~1e-3 abs).
    h2 = h * h
    h = 0.5 * h * (1.0 + jnp.tanh(h * (_GELU_C0 + _GELU_C1 * h2)))
    h = h.astype(w2_ref.dtype)                   # MXU operand dtype for fc2
    y = jnp.dot(h, w2_ref[...], preferred_element_type=jnp.float32)
    y = y + b2_ref[...]
    o_ref[...] = y.astype(o_ref.dtype)


# ------------------------- One-time parameter preparation --------------------- #

def prepare_params(params, *, mxu_dtype=jnp.bfloat16):
    """One-time layout/dtype prep (do NOT call per forward step).

    Transposes the PyTorch (out, in) Linear weights to (in, out) and casts the
    matmul operands to `mxu_dtype` (bf16 by default: full MXU rate on
    v5e/v6e/v7x and half the weight HBM/VMEM traffic).  Biases are pre-cast to
    f32 (the accumulator dtype).  Pass mxu_dtype=None to keep f32 weights.
    """
    w1 = jnp.asarray(params['fc1_w']).T
    w2 = jnp.asarray(params['fc2_w']).T
    if mxu_dtype is not None:
        w1 = w1.astype(mxu_dtype)
        w2 = w2.astype(mxu_dtype)
    b1 = jnp.asarray(params['fc1_b']).reshape(1, -1).astype(jnp.float32)
    b2 = jnp.asarray(params['fc2_b']).reshape(1, -1).astype(jnp.float32)
    return {'w1': w1, 'b1': b1, 'w2': w2, 'b2': b2}


# --------------------------------- Wrapper ------------------------------------ #

def _vmem_limit_bytes():
    # Generation-aware VMEM cap: ~3/4 of physical (v7x 64 MiB -> 48 MiB,
    # v5e/v6e 128 MiB -> 96 MiB), never above 100 MiB.
    try:
        cap = int(pltpu.get_tpu_info().vmem_capacity_bytes)
    except Exception:
        cap = 64 * 1024 * 1024                   # conservative (v7x per-TC)
    return min(cap * 3 // 4, 100 * 1024 * 1024)


def _pick_row_tile(rows, din, dh, dout, x_itemsize, w_itemsize, out_itemsize,
                   block_rows, vmem_limit):
    # Per-step VMEM estimate: double-buffered streamed x/out tiles, f32 hidden
    # intermediates, plus resident weights (counted twice so the budget still
    # holds if the single-buffering fallback kicks in).
    weight_bytes = din * dh * w_itemsize + dh * dout * w_itemsize + (dh + dout) * 4
    per_row = (2 * din * x_itemsize + 2 * dout * out_itemsize
               + 2 * dh * 4 + dh * w_itemsize)
    budget = int(0.6 * vmem_limit) - 2 * weight_bytes
    tm_cap = max(8, (budget // max(per_row, 1)) // 8 * 8) if budget > 0 else 8
    rows8 = ((rows + 7) // 8) * 8
    tm = max(8, (min(block_rows, tm_cap, rows8) // 8) * 8)
    # v7x megacore: prefer an even number of grid steps when there is >1 step.
    n = pl.cdiv(rows, tm)
    if n > 1 and n % 2 == 1:
        tm = max(8, ((pl.cdiv(rows, n + 1) + 7) // 8) * 8)
    return tm


def mlp_forward(x, prepared, *, block_rows=512):
    """Fused Mlp forward: y = gelu(x @ w1 + b1) @ w2 + b2.

    x:        (..., Din) activation (cast to the weight dtype inside the kernel
              for the MXU; accumulation and elementwise math are f32).
    prepared: output of prepare_params().
    """
    w1, b1, w2, b2 = prepared['w1'], prepared['b1'], prepared['w2'], prepared['b2']
    orig_shape = x.shape
    din = orig_shape[-1]
    dh = w1.shape[1]
    dout = w2.shape[1]
    rows = math.prod(orig_shape[:-1]) if len(orig_shape) > 1 else 1
    x2 = x.reshape(rows, din)

    vmem_limit = _vmem_limit_bytes()
    tm = _pick_row_tile(rows, din, dh, dout,
                        x2.dtype.itemsize, w1.dtype.itemsize, x.dtype.itemsize,
                        block_rows, vmem_limit)
    n_tiles = pl.cdiv(rows, tm)   # ragged last block handled by Pallas (no pad/slice)

    # TODO(synk): for very large hidden_features (Dh >~ 4-8K, especially on
    # v7x's 64 MiB VMEM) add a K-tiling grid axis over Dh with an f32
    # accumulator scratch; not needed for HNCT-scale channel counts.
    # TODO(synk): pad Din/Dh/Dout to multiples of 128 for production shapes to
    # keep stores lane-dense (demo shapes already are).

    def build(single_buffer_weights):
        res = {'pipeline_mode': pl.Buffered(1)} if single_buffer_weights else {}
        return pl.pallas_call(
            _mlp_fused_kernel,
            out_shape=jax.ShapeDtypeStruct((rows, dout), x.dtype),
            grid=(n_tiles,),
            in_specs=[
                pl.BlockSpec((tm, din), lambda i: (i, 0)),          # streamed rows
                pl.BlockSpec((din, dh), lambda i: (0, 0), **res),   # resident fc1 w
                pl.BlockSpec((1, dh), lambda i: (0, 0), **res),     # resident fc1 b
                pl.BlockSpec((dh, dout), lambda i: (0, 0), **res),  # resident fc2 w
                pl.BlockSpec((1, dout), lambda i: (0, 0), **res),   # resident fc2 b
            ],
            out_specs=pl.BlockSpec((tm, dout), lambda i: (i, 0)),
            compiler_params=pltpu.CompilerParams(
                dimension_semantics=("parallel",),
                vmem_limit_bytes=vmem_limit,
            ),
        )

    try:
        out = build(True)(x2, w1, b1, w2, b2)
    except Exception:
        # Fallback if this JAX version rejects Buffered(1) on resident operands.
        out = build(False)(x2, w1, b1, w2, b2)

    return out.reshape(*orig_shape[:-1], dout)


# ---------------------------- Pure-JAX reference ------------------------------ #

def reference_forward(x, params, *, mxu_dtype=None):
    """Reference with PyTorch semantics (exact-erf GELU, f32 math).

    With mxu_dtype set, the matmul operands are rounded the same way the kernel
    rounds them (f32 accumulation kept), so the comparison does not hide real
    numeric drift behind loose tolerances.
    """
    def mm(a, b):
        if mxu_dtype is not None:
            a = a.astype(mxu_dtype)
            b = b.astype(mxu_dtype)
        return jnp.dot(a, b, preferred_element_type=jnp.float32)

    h = mm(x, params['fc1_w'].T) + params['fc1_b']
    h = jax.nn.gelu(h, approximate=False)        # exact erf, like torch nn.GELU()
    return mm(h, params['fc2_w'].T) + params['fc2_b']


# ------------------------------------ Main ------------------------------------ #

if __name__ == "__main__":
    B, N = 2, 512
    in_features, hidden_features, out_features = 128, 256, 128

    key = jax.random.PRNGKey(0)
    ks = jax.random.split(key, 5)
    params = {
        'fc1_w': 0.1 * jax.random.normal(ks[0], (hidden_features, in_features), jnp.float32),
        'fc1_b': 0.1 * jax.random.normal(ks[1], (hidden_features,), jnp.float32),
        'fc2_w': 0.1 * jax.random.normal(ks[2], (out_features, hidden_features), jnp.float32),
        'fc2_b': 0.1 * jax.random.normal(ks[3], (out_features,), jnp.float32),
    }
    x = jax.random.normal(ks[4], (B, N, in_features), jnp.float32)

    # Default path: bf16 MXU operands, f32 accumulate / bias / GELU.
    # rows = B*N = 1024, block_rows=512 -> 2 even, parallel grid steps.
    prepared_bf16 = prepare_params(params)                 # bf16 weights, once
    y = jax.block_until_ready(mlp_forward(x, prepared_bf16))
    assert y.shape == (B, N, out_features)
    y_ref_bf16 = reference_forward(x, params, mxu_dtype=jnp.bfloat16)
    assert jnp.allclose(y, y_ref_bf16, atol=1e-2, rtol=1e-2), "bf16 path mismatch"

    # Full-f32 operand path against the exact PyTorch-semantics reference.
    prepared_f32 = prepare_params(params, mxu_dtype=None)
    y32 = jax.block_until_ready(mlp_forward(x, prepared_f32))
    y_ref = reference_forward(x, params)
    assert jnp.allclose(y32, y_ref, atol=1e-2, rtol=1e-2), "f32 path mismatch"

    print("KERNEL_OK")
</pallas_src>

<mosaic_0001>
module attributes {stable_mosaic.version = 11 : i64} {
  func.func @_mlp_fused_kernel(%arg0: i32, %arg1: memref<512x128xf32, #tpu.memory_space<vmem>>, %arg2: memref<128x256xbf16, #tpu.memory_space<vmem>>, %arg3: memref<1x256xf32, #tpu.memory_space<vmem>>, %arg4: memref<256x128xbf16, #tpu.memory_space<vmem>>, %arg5: memref<1x128xf32, #tpu.memory_space<vmem>>, %arg6: memref<512x128xf32, #tpu.memory_space<vmem>>) attributes {dimension_semantics = [#tpu.dimension_semantics<parallel>], iteration_bounds = array<i64: 2>, scalar_prefetch = 0 : i64, scratch_operands = 0 : i64, tpu.core_type = #tpu.core_type<tc>, window_params = [{transform_indices = @transform_0, window_bounds = array<i64: 512, 128>}, {pipeline_mode = #tpu.pipeline_mode<synchronous>, transform_indices = @transform_1, window_bounds = array<i64: 128, 256>}, {pipeline_mode = #tpu.pipeline_mode<synchronous>, transform_indices = @transform_2, window_bounds = array<i64: 1, 256>}, {pipeline_mode = #tpu.pipeline_mode<synchronous>, transform_indices = @transform_3, window_bounds = array<i64: 256, 128>}, {pipeline_mode = #tpu.pipeline_mode<synchronous>, transform_indices = @transform_4, window_bounds = array<i64: 1, 128>}, {transform_indices = @transform_5, window_bounds = array<i64: 512, 128>}]} {
    %c0 = arith.constant 0 : index
    %c0_0 = arith.constant 0 : index
    %0 = vector.load %arg1[%c0, %c0_0] : memref<512x128xf32, #tpu.memory_space<vmem>>, vector<512x128xf32>
    %1 = arith.truncf %0 : vector<512x128xf32> to vector<512x128xbf16>
    %c0_1 = arith.constant 0 : index
    %c0_2 = arith.constant 0 : index
    %2 = vector.load %arg2[%c0_1, %c0_2] : memref<128x256xbf16, #tpu.memory_space<vmem>>, vector<128x256xbf16>
    %cst = arith.constant dense<0.000000e+00> : vector<512x256xf32>
    %3 = tpu.matmul %1, %2, %cst {dimension_numbers = #tpu.dot_dimension_numbers<[1], [0], [0], [1], [0, 0, 1, 1], [], []>} : vector<512x128xbf16>, vector<128x256xbf16>, vector<512x256xf32> -> vector<512x256xf32>
    %c0_3 = arith.constant 0 : index
    %c0_4 = arith.constant 0 : index
    %4 = vector.load %arg3[%c0_3, %c0_4] : memref<1x256xf32, #tpu.memory_space<vmem>>, vector<1x256xf32>
    %5 = vector.broadcast %4 : vector<1x256xf32> to vector<512x256xf32>
    %6 = arith.addf %3, %5 : vector<512x256xf32>
    %7 = arith.mulf %6, %6 : vector<512x256xf32>
    %cst_5 = arith.constant 5.000000e-01 : f32
    %8 = vector.broadcast %cst_5 : f32 to vector<512x256xf32>
    %9 = arith.mulf %8, %6 : vector<512x256xf32>
    %cst_6 = arith.constant 0.0356774069 : f32
    %10 = vector.broadcast %cst_6 : f32 to vector<512x256xf32>
    %11 = arith.mulf %10, %7 : vector<512x256xf32>
    %cst_7 = arith.constant 0.797884583 : f32
    %12 = vector.broadcast %cst_7 : f32 to vector<512x256xf32>
    %13 = arith.addf %12, %11 : vector<512x256xf32>
    %14 = arith.mulf %6, %13 : vector<512x256xf32>
    %15 = math.tanh %14 : vector<512x256xf32>
    %cst_8 = arith.constant 1.000000e+00 : f32
    %16 = vector.broadcast %cst_8 : f32 to vector<512x256xf32>
    %17 = arith.addf %16, %15 : vector<512x256xf32>
    %18 = arith.mulf %9, %17 : vector<512x256xf32>
    %19 = arith.truncf %18 : vector<512x256xf32> to vector<512x256xbf16>
    %c0_9 = arith.constant 0 : index
    %c0_10 = arith.constant 0 : index
    %20 = vector.load %arg4[%c0_9, %c0_10] : memref<256x128xbf16, #tpu.memory_space<vmem>>, vector<256x128xbf16>
    %cst_11 = arith.constant dense<0.000000e+00> : vector<512x128xf32>
    %21 = tpu.matmul %19, %20, %cst_11 {dimension_numbers = #tpu.dot_dimension_numbers<[1], [0], [0], [1], [0, 0, 1, 1], [], []>} : vector<512x256xbf16>, vector<256x128xbf16>, vector<512x128xf32> -> vector<512x128xf32>
    %c0_12 = arith.constant 0 : index
    %c0_13 = arith.constant 0 : index
    %22 = vector.load %arg5[%c0_12, %c0_13] : memref<1x128xf32, #tpu.memory_space<vmem>>, vector<1x128xf32>
    %23 = vector.broadcast %22 : vector<1x128xf32> to vector<512x128xf32>
    %24 = arith.addf %21, %23 : vector<512x128xf32>
    %c0_14 = arith.constant 0 : index
    %c0_15 = arith.constant 0 : index
    %25 = vector.load %arg6[%c0_14, %c0_15] : memref<512x128xf32, #tpu.memory_space<vmem>>, vector<512x128xf32>
    tpu.vector_store %arg6[%c0_14, %c0_15], %24 {strides = array<i32>} : memref<512x128xf32, #tpu.memory_space<vmem>>, vector<512x128xf32>,
    return
  }
  func.func @transform_0(%arg0: i32) -> (i32, i32) {
    %c0_i32 = arith.constant 0 : i32
    %c0_i32_0 = arith.constant 0 : i32
    return %arg0, %c0_i32 : i32, i32
  }
  func.func @transform_1(%arg0: i32) -> (i32, i32) {
    %c0_i32 = arith.constant 0 : i32
    %c0_i32_0 = arith.constant 0 : i32
    %c0_i32_1 = arith.constant 0 : i32
    return %c0_i32, %c0_i32_0 : i32, i32
  }
  func.func @transform_2(%arg0: i32) -> (i32, i32) {
    %c0_i32 = arith.constant 0 : i32
    %c0_i32_0 = arith.constant 0 : i32
    %c0_i32_1 = arith.constant 0 : i32
    return %c0_i32, %c0_i32_0 : i32, i32
  }
  func.func @transform_3(%arg0: i32) -> (i32, i32) {
    %c0_i32 = arith.constant 0 : i32
    %c0_i32_0 = arith.constant 0 : i32
    %c0_i32_1 = arith.constant 0 : i32
    return %c0_i32, %c0_i32_0 : i32, i32
  }
  func.func @transform_4(%arg0: i32) -> (i32, i32) {
    %c0_i32 = arith.constant 0 : i32
    %c0_i32_0 = arith.constant 0 : i32
    %c0_i32_1 = arith.constant 0 : i32
    return %c0_i32, %c0_i32_0 : i32, i32
  }
  func.func @transform_5(%arg0: i32) -> (i32, i32) {
    %c0_i32 = arith.constant 0 : i32
    %c0_i32_0 = arith.constant 0 : i32
    return %arg0, %c0_i32 : i32, i32
  }
}

module attributes {stable_mosaic.version = 11 : i64} {
  func.func @_mlp_fused_kernel(%arg0: i32, %arg1: memref<512x128xf32, #tpu.memory_space<vmem>>, %arg2: memref<128x256xbf16, #tpu.memory_space<vmem>>, %arg3: memref<1x256xf32, #tpu.memory_space<vmem>>, %arg4: memref<256x128xbf16, #tpu.memory_space<vmem>>, %arg5: memref<1x128xf32, #tpu.memory_space<vmem>>, %arg6: memref<512x128xf32, #tpu.memory_space<vmem>>) attributes {dimension_semantics = [#tpu.dimension_semantics<parallel>], iteration_bounds = array<i64: 2>, scalar_prefetch = 0 : i64, scratch_operands = 0 : i64, tpu.core_type = #tpu.core_type<tc>, window_params = [{transform_indices = @transform_0, window_bounds = array<i64: 512, 128>}, {pipeline_mode = #tpu.pipeline_mode<synchronous>, transform_indices = @transform_1, window_bounds = array<i64: 128, 256>}, {pipeline_mode = #tpu.pipeline_mode<synchronous>, transform_indices = @transform_2, window_bounds = array<i64: 1, 256>}, {pipeline_mode = #tpu.pipeline_mode<synchronous>, transform_indices = @transform_3, window_bounds = array<i64: 256, 128>}, {pipeline_mode = #tpu.pipeline_mode<synchronous>, transform_indices = @transform_4, window_bounds = array<i64: 1, 128>}, {transform_indices = @transform_5, window_bounds = array<i64: 512, 128>}]} {
    %c0 = arith.constant 0 : index
    %c0_0 = arith.constant 0 : index
    %0 = vector.load %arg1[%c0, %c0_0] : memref<512x128xf32, #tpu.memory_space<vmem>>, vector<512x128xf32>
    %1 = arith.truncf %0 : vector<512x128xf32> to vector<512x128xbf16>
    %c0_1 = arith.constant 0 : index
    %c0_2 = arith.constant 0 : index
    %2 = vector.load %arg2[%c0_1, %c0_2] : memref<128x256xbf16, #tpu.memory_space<vmem>>, vector<128x256xbf16>
    %cst = arith.constant dense<0.000000e+00> : vector<512x256xf32>
    %3 = tpu.matmul %1, %2, %cst {dimension_numbers = #tpu.dot_dimension_numbers<[1], [0], [0], [1], [0, 0, 1, 1], [], []>} : vector<512x128xbf16>, vector<128x256xbf16>, vector<512x256xf32> -> vector<512x256xf32>
    %c0_3 = arith.constant 0 : index
    %c0_4 = arith.constant 0 : index
    %4 = vector.load %arg3[%c0_3, %c0_4] : memref<1x256xf32, #tpu.memory_space<vmem>>, vector<1x256xf32>
    %5 = vector.broadcast %4 : vector<1x256xf32> to vector<512x256xf32>
    %6 = arith.addf %3, %5 : vector<512x256xf32>
    %7 = arith.mulf %6, %6 : vector<512x256xf32>
    %cst_5 = arith.constant 5.000000e-01 : f32
    %8 = vector.broadcast %cst_5 : f32 to vector<512x256xf32>
    %9 = arith.mulf %8, %6 : vector<512x256xf32>
    %cst_6 = arith.constant 0.0356774069 : f32
    %10 = vector.broadcast %cst_6 : f32 to vector<512x256xf32>
    %11 = arith.mulf %10, %7 : vector<512x256xf32>
    %cst_7 = arith.constant 0.797884583 : f32
    %12 = vector.broadcast %cst_7 : f32 to vector<512x256xf32>
    %13 = arith.addf %12, %11 : vector<512x256xf32>
    %14 = arith.mulf %6, %13 : vector<512x256xf32>
    %15 = math.tanh %14 : vector<512x256xf32>
    %cst_8 = arith.constant 1.000000e+00 : f32
    %16 = vector.broadcast %cst_8 : f32 to vector<512x256xf32>
    %17 = arith.addf %16, %15 : vector<512x256xf32>
    %18 = arith.mulf %9, %17 : vector<512x256xf32>
    %19 = arith.truncf %18 : vector<512x256xf32> to vector<512x256xbf16>
    %c0_9 = arith.constant 0 : index
    %c0_10 = arith.constant 0 : index
    %20 = vector.load %arg4[%c0_9, %c0_10] : memref<256x128xbf16, #tpu.memory_space<vmem>>, vector<256x128xbf16>
    %cst_11 = arith.constant dense<0.000000e+00> : vector<512x128xf32>
    %21 = tpu.matmul %19, %20, %cst_11 {dimension_numbers = #tpu.dot_dimension_numbers<[1], [0], [0], [1], [0, 0, 1, 1], [], []>} : vector<512x256xbf16>, vector<256x128xbf16>, vector<512x128xf32> -> vector<512x128xf32>
    %c0_12 = arith.constant 0 : index
    %c0_13 = arith.constant 0 : index
    %22 = vector.load %arg5[%c0_12, %c0_13] : memref<1x128xf32, #tpu.memory_space<vmem>>, vector<1x128xf32>
    %23 = vector.broadcast %22 : vector<1x128xf32> to vector<512x128xf32>
    %24 = arith.addf %21, %23 : vector<512x128xf32>
    %c0_14 = arith.constant 0 : index
    %c0_15 = arith.constant 0 : index
    %25 = vector.load %arg6[%c0_14, %c0_15] : memref<512x128xf32, #tpu.memory_space<vmem>>, vector<512x128xf32>
    tpu.vector_store %arg6[%c0_14, %c0_15], %24 {strides = array<i32>} : memref<512x128xf32, #tpu.memory_space<vmem>>, vector<512x128xf32>,
    return
  }
  func.func @transform_0(%arg0: i32) -> (i32, i32) {
    %c0_i32 = arith.constant 0 : i32
    %c0_i32_0 = arith.constant 0 : i32
    return %arg0, %c0_i32 : i32, i32
  }
  func.func @transform_1(%arg0: i32) -> (i32, i32) {
    %c0_i32 = arith.constant 0 : i32
    %c0_i32_0 = arith.constant 0 : i32
    %c0_i32_1 = arith.constant 0 : i32
    return %c0_i32, %c0_i32_0 : i32, i32
  }
  func.func @transform_2(%arg0: i32) -> (i32, i32) {
    %c0_i32 = arith.constant 0 : i32
    %c0_i32_0 = arith.constant 0 : i32
    %c0_i32_1 = arith.constant 0 : i32
    return %c0_i32, %c0_i32_0 : i32, i32
  }
  func.func @transform_3(%arg0: i32) -> (i32, i32) {
    %c0_i32 = arith.constant 0 : i32
    %c0_i32_0 = arith.constant 0 : i32
    %c0_i32_1 = arith.constant 0 : i32
    return %c0_i32, %c0_i32_0 : i32, i32
  }
  func.func @transform_4(%arg0: i32) -> (i32, i32) {
    %c0_i32 = arith.constant 0 : i32
    %c0_i32_0 = arith.constant 0 : i32
    %c0_i32_1 = arith.constant 0 : i32
    return %c0_i32, %c0_i32_0 : i32, i32
  }
  func.func @transform_5(%arg0: i32) -> (i32, i32) {
    %c0_i32 = arith.constant 0 : i32
    %c0_i32_0 = arith.constant 0 : i32
    return %arg0, %c0_i32 : i32, i32
  }
}

</mosaic_0001>

<llo_original>
// kernel: tpu_custom_call.1
$region0: #{tpu_custom_call.1}
  #allocation0 [shape = 'u32[]', space=smem, size = 0x4, offset = 0x4, fixed_abs, tag = 'smem constant byte address 0x4 - core index']
  #allocation1 [shape = 'u32[144,128]{1,0:T(1,128)}', space=vmem, size = 0x12000, scoped, tag = 'internal scratch']
  %s0 = inlined_call_operand.hbm [shape: f32[1024,128], index: 0, kind: input, shape index: {}]
  %s1 = inlined_call_operand.hbm [shape: bf16[128,256], index: 1, kind: input, shape index: {}]
  %s2 = inlined_call_operand.vmem [shape: f32[1,256], index: 2, kind: input, shape index: {}]
  %s3 = inlined_call_operand.hbm [shape: bf16[256,128], index: 3, kind: input, shape index: {}]
  %s4 = inlined_call_operand.vmem [shape: f32[1,128], index: 4, kind: input, shape index: {}]
  %s5 = inlined_call_operand.hbm [shape: f32[1024,128], index: 5, kind: output, shape index: {}]
  %s6 = sld [smem:[#allocation0]]
  $region65: #{tpu_custom_call.1} parent=0
    _
  %s8 = ssub.s32 1, %s6
  %s9 = scalar_select 0, %s8, %s6
  $region1: #{tpu_custom_call.1} parent=0
    #allocation2 [shape = 'u8[524288]{0}', space=vmem, size = 0x80000, scoped, tag = 'input window, operand 0']
    #allocation3 [shape = 's32[2]{0}', space=sflag, size = 0x8, scoped, tag = 'scoped memory for tpu_custom_call.1']
    #allocation4 [shape = 's32[2]{0}', space=sflag, size = 0x8, scoped, tag = 'scoped memory for tpu_custom_call.1']
    #allocation5 [shape = 'u8[65536]{0}', space=vmem, size = 0x10000, scoped, tag = 'input window, operand 1, single buffered']
    #allocation6 [shape = 's32[1]{0}', space=sflag, size = 0x4, scoped, tag = 'scoped memory for tpu_custom_call.1']
    #allocation7 [shape = 'u8[65536]{0}', space=vmem, size = 0x10000, scoped, tag = 'input window, operand 3, single buffered']
    #allocation8 [shape = 'u8[524288]{0}', space=vmem, size = 0x80000, scoped, tag = 'output window, operand 0']
    %10 = vsyncpa [#allocation3], 0
    %s11 = scalar_lea.sflag [#allocation3], 1
    %12 = vsyncpa %s11, 0
    %13 = vsyncpa [#allocation6], 0
    %14 = vsyncpa [#allocation4], 0
    %s15 = scalar_lea.sflag [#allocation4], 1
    %16 = vsyncpa %s15, 0
    loop: start=0, step=1, limit=4
    $region2: #{tpu_custom_call.1} parent=1 // loop_pre_header
      _
    $region3: #{tpu_custom_call.1} parent=1 // loop_header
      %s18 = sphi 0, %s22
      %p19 = scmp.ge.s32.totalorder %s18, 4
      %s28 = sphi 0, %s30
      %s31 = sphi 0, %s28
      %s32 = sphi 0, %s31
      %s48 = sphi 0, %s32
      %s52 = sphi 0, %s52
      %s54 = sphi 0, %s52
      %s55 = sphi 0, %s54
      %s69 = sphi 0, %s55
      %s73 = sphi 0, %s73
      %s75 = sphi 0, %s73
      %s76 = sphi 0, %s75
      %s90 = sphi 0, %s76
      %s94 = sphi 0, %s94
      %s96 = sphi 0, %s94
      %s97 = sphi 0, %s96
      %s111 = sphi 0, %s97
      %s115 = sphi 0, %s115
      %s117 = sphi 0, %s115
      %s118 = sphi 0, %s117
      %s132 = sphi 0, %s118
      %s138 = sphi 0, %s140
      %s141 = sphi 0, %s138
      %s142 = sphi 0, %s141
      %s158 = sphi 0, %s142
    $region4: #{tpu_custom_call.1} parent=1 // loop_header_branch
      %21 = sbr.rel (%p19) target = $region8
    $region5: #{tpu_custom_call.1} parent=1 // loop_body
      %s23 = ssub.s32 %s18, 1
      %s24 = ssub.s32 %s18, 2
      %s25 = sadd.s32 %s18, 1
      %s26 = ssub.s32 %s18, %s25
      %p27 = scmp.eq.s32.totalorder %s26, 0
      %s29 = sadd.s32 %s28, 1
      %s30 = scalar_select %p27, %s28, %s29
      %p33 = pneg %p27
      %p34 = scmp.eq.s32.totalorder %s18, 1
      %p35 = por %p33, %p34
      %p36 = scmp.ne.s32.totalorder %s28, %s31
      %p37 = scmp.eq.s32.totalorder %s18, 0
      %p38 = por %p36, %p37
      %p39 = scmp.ne.s32.totalorder %s28, %s31
      %p40 = scmp.eq.s32.totalorder %s23, 1
      %p41 = por %p39, %p40
      %p42 = scmp.ne.s32.totalorder %s31, %s32
      %p43 = scmp.eq.s32.totalorder %s23, 0
      %p44 = por %p42, %p43
      %p45 = scmp.ne.s32.totalorder %s31, %s32
      %p46 = scmp.eq.s32.totalorder %s24, 1
      %p47 = por %p45, %p46
      %p49 = scmp.ne.s32.totalorder %s32, %s48
      %p50 = scmp.eq.s32.totalorder %s24, 0
      %p51 = por %p49, %p50
      %s53 = sadd.s32 %s52, 1
      %p56 = scmp.eq.s32.totalorder %s18, 1
      %p57 = scmp.ne.s32.totalorder %s52, %s54
      %p58 = scmp.eq.s32.totalorder %s18, 0
      %p59 = por %p57, %p58
      %p60 = scmp.ne.s32.totalorder %s52, %s54
      %p61 = scmp.eq.s32.totalorder %s23, 1
      %p62 = por %p60, %p61
      %p63 = scmp.ne.s32.totalorder %s54, %s55
      %p64 = scmp.eq.s32.totalorder %s23, 0
      %p65 = por %p63, %p64
      %p66 = scmp.ne.s32.totalorder %s54, %s55
      %p67 = scmp.eq.s32.totalorder %s24, 1
      %p68 = por %p66, %p67
      %p70 = scmp.ne.s32.totalorder %s55, %s69
      %p71 = scmp.eq.s32.totalorder %s24, 0
      %p72 = por %p70, %p71
      %s74 = sadd.s32 %s73, 1
      %p77 = scmp.eq.s32.totalorder %s18, 1
      %p78 = scmp.ne.s32.totalorder %s73, %s75
      %p79 = scmp.eq.s32.totalorder %s18, 0
      %p80 = por %p78, %p79
      %p81 = scmp.ne.s32.totalorder %s73, %s75
      %p82 = scmp.eq.s32.totalorder %s23, 1
      %p83 = por %p81, %p82
      %p84 = scmp.ne.s32.totalorder %s75, %s76
      %p85 = scmp.eq.s32.totalorder %s23, 0
      %p86 = por %p84, %p85
      %p87 = scmp.ne.s32.totalorder %s75, %s76
      %p88 = scmp.eq.s32.totalorder %s24, 1
      %p89 = por %p87, %p88
      %p91 = scmp.ne.s32.totalorder %s76, %s90
      %p92 = scmp.eq.s32.totalorder %s24, 0
      %p93 = por %p91, %p92
      %s95 = sadd.s32 %s94, 1
      %p98 = scmp.eq.s32.totalorder %s18, 1
      %p99 = scmp.ne.s32.totalorder %s94, %s96
      %p100 = scmp.eq.s32.totalorder %s18, 0
      %p101 = por %p99, %p100
      %p102 = scmp.ne.s32.totalorder %s94, %s96
      %p103 = scmp.eq.s32.totalorder %s23, 1
      %p104 = por %p102, %p103
      %p105 = scmp.ne.s32.totalorder %s96, %s97
      %p106 = scmp.eq.s32.totalorder %s23, 0
      %p107 = por %p105, %p106
      %p108 = scmp.ne.s32.totalorder %s96, %s97
      %p109 = scmp.eq.s32.totalorder %s24, 1
      %p110 = por %p108, %p109
      %p112 = scmp.ne.s32.totalorder %s97, %s111
      %p113 = scmp.eq.s32.totalorder %s24, 0
      %p114 = por %p112, %p113
      %s116 = sadd.s32 %s115, 1
      %p119 = scmp.eq.s32.totalorder %s18, 1
      %p120 = scmp.ne.s32.totalorder %s115, %s117
      %p121 = scmp.eq.s32.totalorder %s18, 0
      %p122 = por %p120, %p121
      %p123 = scmp.ne.s32.totalorder %s115, %s117
      %p124 = scmp.eq.s32.totalorder %s23, 1
      %p125 = por %p123, %p124
      %p126 = scmp.ne.s32.totalorder %s117, %s118
      %p127 = scmp.eq.s32.totalorder %s23, 0
      %p128 = por %p126, %p127
      %p129 = scmp.ne.s32.totalorder %s117, %s118
      %p130 = scmp.eq.s32.totalorder %s24, 1
      %p131 = por %p129, %p130
      %p133 = scmp.ne.s32.totalorder %s118, %s132
      %p134 = scmp.eq.s32.totalorder %s24, 0
      %p135 = por %p133, %p134
      %s136 = ssub.s32 %s18, %s25
      %p137 = scmp.eq.s32.totalorder %s136, 0
      %s139 = sadd.s32 %s138, 1
      %s140 = scalar_select %p137, %s138, %s139
      %p143 = pneg %p137
      %p144 = scmp.eq.s32.totalorder %s18, 1
      %p145 = por %p143, %p144
      %p146 = scmp.ne.s32.totalorder %s138, %s141
      %p147 = scmp.eq.s32.totalorder %s18, 0
      %p148 = por %p146, %p147
      %p149 = scmp.ne.s32.totalorder %s138, %s141
      %p150 = scmp.eq.s32.totalorder %s23, 1
      %p151 = por %p149, %p150
      %p152 = scmp.ne.s32.totalorder %s141, %s142
      %p153 = scmp.eq.s32.totalorder %s23, 0
      %p154 = por %p152, %p153
      %p155 = scmp.ne.s32.totalorder %s141, %s142
      %p156 = scmp.eq.s32.totalorder %s24, 1
      %p157 = por %p155, %p156
      %p159 = scmp.ne.s32.totalorder %s142, %s158
      %p160 = scmp.eq.s32.totalorder %s24, 0
      %p161 = por %p159, %p160
      %p162 = scmp.le.s32.totalorder 1, %s18
      %p163 = scmp.lt.s32.totalorder %s18, 3
      %p164 = pnand %p162, %p163
      %p165 = pneg %p164
      // Predicated region
      $region9: #{tpu_custom_call.1} parent=5 // pred_check
        _
      $region10: #{tpu_custom_call.1} parent=5 // pred_check_branch
        %167 = sbr.rel (%p164) target = $region12
      $region11: #{tpu_custom_call.1} parent=5 // pred_region
        %s168 = ssub.s32 %s18, 1
        // Predicated region
        $region13: #{tpu_custom_call.1} parent=11 // pred_check
          %p169 = pneg %p65
        $region14: #{tpu_custom_call.1} parent=11 // pred_check_branch
          %171 = sbr.rel (%p169) target = $region16
        $region15: #{tpu_custom_call.1} parent=11 // pred_region
          %s173 = ssub.s32 2048, 2048
          %174 = vsyncadd [#allocation6], %s173
          %s175 = sshll.u32 [#allocation5], 4
          %s176 = int_to_ptr.vmem [resolvable:$true] %s175
          %181 = dma.hbm_to_vmem [thread:$0]  %s1, 2048, %s176, [#allocation6], 128, 128, 8
        $region16: #{tpu_custom_call.1} parent=11 // pred_fallthru
          _
        // Predicated region
        $region17: #{tpu_custom_call.1} parent=11 // pred_check
          %p182 = pneg %p86
        $region18: #{tpu_custom_call.1} parent=11 // pred_check_branch
          %184 = sbr.rel (%p182) target = $region20
        $region19: #{tpu_custom_call.1} parent=11 // pred_region
          _
        $region20: #{tpu_custom_call.1} parent=11 // pred_fallthru
          _
        // Predicated region
        $region21: #{tpu_custom_call.1} parent=11 // pred_check
          %p185 = pneg %p107
        $region22: #{tpu_custom_call.1} parent=11 // pred_check_branch
          %187 = sbr.rel (%p185) target = $region24
        $region23: #{tpu_custom_call.1} parent=11 // pred_region
          %s189 = ssub.s32 2048, 2048
          %190 = vsyncadd [#allocation6], %s189
          %s191 = sshll.u32 [#allocation7], 4
          %s192 = int_to_ptr.vmem [resolvable:$true] %s191
          %197 = dma.hbm_to_vmem [thread:$0]  %s3, 2048, %s192, [#allocation6], 64, 64, 4
        $region24: #{tpu_custom_call.1} parent=11 // pred_fallthru
          _
        // Predicated region
        $region25: #{tpu_custom_call.1} parent=11 // pred_check
          %p198 = pneg %p128
        $region26: #{tpu_custom_call.1} parent=11 // pred_check_branch
          %200 = sbr.rel (%p198) target = $region28
        $region27: #{tpu_custom_call.1} parent=11 // pred_region
          _
        $region28: #{tpu_custom_call.1} parent=11 // pred_fallthru
          _
      $region12: #{tpu_custom_call.1} parent=5 // pred_fallthru
        _
      %p201 = scmp.lt.s32.totalorder %s18, 2
      // Predicated region
      $region29: #{tpu_custom_call.1} parent=5 // pred_check
        %p202 = pneg %p201
      $region30: #{tpu_custom_call.1} parent=5 // pred_check_branch
        %204 = sbr.rel (%p202) target = $region32
      $region31: #{tpu_custom_call.1} parent=5 // pred_region
        // Predicated region
        $region33: #{tpu_custom_call.1} parent=31 // pred_check
          %p205 = pneg %p38
        $region34: #{tpu_custom_call.1} parent=31 // pred_check_branch
          %207 = sbr.rel (%p205) target = $region36
        $region35: #{tpu_custom_call.1} parent=31 // pred_region
          %s208 = sand.u32 %s28, 1
          %s209 = scalar_lea.sflag [#allocation3], %s208
          %s210 = sand.u32 %s28, 1
          %s211 = smul.addr %s210, 512
          %s212 = scalar_lea.vmem [#allocation2], %s211
          %s213 = smul.u32 64, %s18
          %s215 = ssub.s32 8192, 8192
          %216 = vsyncadd %s209, %s215
          %s217 = smul.addr %s213, 128
          %s218 = scalar_lea.hbm %s0, %s217
          %s219 = sshll.u32 %s212, 4
          %s220 = int_to_ptr.vmem [resolvable:$true] %s219
          %225 = dma.hbm_to_vmem [thread:$0]  %s218, 8192, %s220, %s209, 128, 128, 8
        $region36: #{tpu_custom_call.1} parent=31 // pred_fallthru
          _
      $region32: #{tpu_custom_call.1} parent=5 // pred_fallthru
        _
      %p226 = scmp.le.s32.totalorder 1, %s18
      %p227 = scmp.lt.s32.totalorder %s18, 3
      %p228 = pnand %p226, %p227
      %p229 = pneg %p228
      // Predicated region
      $region37: #{tpu_custom_call.1} parent=5 // pred_check
        _
      $region38: #{tpu_custom_call.1} parent=5 // pred_check_branch
        %231 = sbr.rel (%p228) target = $region40
      $region39: #{tpu_custom_call.1} parent=5 // pred_region
        %s232 = ssub.s32 %s18, 1
        %s233 = sand.u32 %s31, 1
        %s234 = scalar_lea.sflag [#allocation3], %s233
        %s235 = sand.u32 %s31, 1
        %s236 = smul.addr %s235, 512
        %s237 = scalar_lea.vmem [#allocation2], %s236
        // Predicated region
        $region41: #{tpu_custom_call.1} parent=39 // pred_check
          %p238 = pneg %p44
        $region42: #{tpu_custom_call.1} parent=39 // pred_check_branch
          %240 = sbr.rel (%p238) target = $region44
        $region43: #{tpu_custom_call.1} parent=39 // pred_region
          %241 = dma.done %s234, 8192
        $region44: #{tpu_custom_call.1} parent=39 // pred_fallthru
          _
        // Predicated region
        $region45: #{tpu_custom_call.1} parent=39 // pred_check
          %p242 = pneg %p65
        $region46: #{tpu_custom_call.1} parent=39 // pred_check_branch
          %244 = sbr.rel (%p242) target = $region48
        $region47: #{tpu_custom_call.1} parent=39 // pred_region
          %245 = dma.done [#allocation6], 2048
        $region48: #{tpu_custom_call.1} parent=39 // pred_fallthru
          _
        // Predicated region
        $region49: #{tpu_custom_call.1} parent=39 // pred_check
          %p246 = pneg %p107
        $region50: #{tpu_custom_call.1} parent=39 // pred_check_branch
          %248 = sbr.rel (%p246) target = $region52
        $region51: #{tpu_custom_call.1} parent=39 // pred_region
          %249 = dma.done [#allocation6], 2048
        $region52: #{tpu_custom_call.1} parent=39 // pred_fallthru
          _
        %s250 = sand.u32 %s31, 1
        %s251 = scalar_lea.sflag [#allocation3], %s250
        %s252 = sand.u32 %s31, 1
        %s253 = smul.addr %s252, 512
        %s254 = scalar_lea.vmem [#allocation2], %s253
        %p255 = pneg %p44
        %p256 = pneg %p41
        %p257 = pneg %p65
        %p258 = pneg %p62
        %p259 = pneg %p86
        %p260 = pneg %p83
        %p261 = pneg %p107
        %p262 = pneg %p104
        %p263 = pneg %p128
        %p264 = pneg %p125
        %p265 = pneg %p154
        %p266 = pneg %p151
        %s267 = sand.u32 %s141, 1
        %s268 = scalar_lea.sflag [#allocation4], %s267
        %s269 = sand.u32 %s141, 1
        %s270 = smul.addr %s269, 512
        %s271 = scalar_lea.vmem [#allocation8], %s270
        %s272 = smul.u32 64, %s23
        %s273 = smul.u32 64, %s23
        %v275 = vld [vmem:[%s237] sm:$0xff]
        %v276 = vld [vmem:[%s237 + $0x8] sm:$0xff]
        %v277 = vld [vmem:[%s237 + $0x10] sm:$0xff]
        %v278 = vld [vmem:[%s237 + $0x18] sm:$0xff]
        %v279 = vld [vmem:[%s237 + $0x20] sm:$0xff]
        %v280 = vld [vmem:[%s237 + $0x28] sm:$0xff]
        %v281 = vld [vmem:[%s237 + $0x30] sm:$0xff]
        %v282 = vld [vmem:[%s237 + $0x38] sm:$0xff]
        %v283 = vld [vmem:[%s237 + $0x40] sm:$0xff]
        %v284 = vld [vmem:[%s237 + $0x48] sm:$0xff]
        %v285 = vld [vmem:[%s237 + $0x50] sm:$0xff]
        %v286 = vld [vmem:[%s237 + $0x58] sm:$0xff]
        %v287 = vld [vmem:[%s237 + $0x60] sm:$0xff]
        %v288 = vld [vmem:[%s237 + $0x68] sm:$0xff]
        %v289 = vld [vmem:[%s237 + $0x70] sm:$0xff]
        %v290 = vld [vmem:[%s237 + $0x78] sm:$0xff]
        %v291 = vld [vmem:[%s237 + $0x80] sm:$0xff]
        %v292 = vld [vmem:[%s237 + $0x88] sm:$0xff]
        %v293 = vld [vmem:[%s237 + $0x90] sm:$0xff]
        %v294 = vld [vmem:[%s237 + $0x98] sm:$0xff]
        %v295 = vld [vmem:[%s237 + $0xa0] sm:$0xff]
        %v296 = vld [vmem:[%s237 + $0xa8] sm:$0xff]
        %v297 = vld [vmem:[%s237 + $0xb0] sm:$0xff]
        %v298 = vld [vmem:[%s237 + $0xb8] sm:$0xff]
        %v299 = vld [vmem:[%s237 + $0xc0] sm:$0xff]
        %v300 = vld [vmem:[%s237 + $0xc8] sm:$0xff]
        %v301 = vld [vmem:[%s237 + $0xd0] sm:$0xff]
        %v302 = vld [vmem:[%s237 + $0xd8] sm:$0xff]
        %v303 = vld [vmem:[%s237 + $0xe0] sm:$0xff]
        %v304 = vld [vmem:[%s237 + $0xe8] sm:$0xff]
        %v305 = vld [vmem:[%s237 + $0xf0] sm:$0xff]
        %v306 = vld [vmem:[%s237 + $0xf8] sm:$0xff]
        %v307 = vld [vmem:[%s237 + $0x100] sm:$0xff]
        %v308 = vld [vmem:[%s237 + $0x108] sm:$0xff]
        %v309 = vld [vmem:[%s237 + $0x110] sm:$0xff]
        %v310 = vld [vmem:[%s237 + $0x118] sm:$0xff]
        %v311 = vld [vmem:[%s237 + $0x120] sm:$0xff]
        %v312 = vld [vmem:[%s237 + $0x128] sm:$0xff]
        %v313 = vld [vmem:[%s237 + $0x130] sm:$0xff]
        %v314 = vld [vmem:[%s237 + $0x138] sm:$0xff]
        %v315 = vld [vmem:[%s237 + $0x140] sm:$0xff]
        %v316 = vld [vmem:[%s237 + $0x148] sm:$0xff]
        %v317 = vld [vmem:[%s237 + $0x150] sm:$0xff]
        %v318 = vld [vmem:[%s237 + $0x158] sm:$0xff]
        %v319 = vld [vmem:[%s237 + $0x160] sm:$0xff]
        %v320 = vld [vmem:[%s237 + $0x168] sm:$0xff]
        %v321 = vld [vmem:[%s237 + $0x170] sm:$0xff]
        %v322 = vld [vmem:[%s237 + $0x178] sm:$0xff]
        %v323 = vld [vmem:[%s237 + $0x180] sm:$0xff]
        %v324 = vld [vmem:[%s237 + $0x188] sm:$0xff]
        %v325 = vld [vmem:[%s237 + $0x190] sm:$0xff]
        %v326 = vld [vmem:[%s237 + $0x198] sm:$0xff]
        %v327 = vld [vmem:[%s237 + $0x1a0] sm:$0xff]
        %v328 = vld [vmem:[%s237 + $0x1a8] sm:$0xff]
        %v329 = vld [vmem:[%s237 + $0x1b0] sm:$0xff]
        %v330 = vld [vmem:[%s237 + $0x1b8] sm:$0xff]
        %v331 = vld [vmem:[%s237 + $0x1c0] sm:$0xff]
        %v332 = vld [vmem:[%s237 + $0x1c8] sm:$0xff]
        %v333 = vld [vmem:[%s237 + $0x1d0] sm:$0xff]
        %v334 = vld [vmem:[%s237 + $0x1d8] sm:$0xff]
        %v335 = vld [vmem:[%s237 + $0x1e0] sm:$0xff]
        %v336 = vld [vmem:[%s237 + $0x1e8] sm:$0xff]
        %v337 = vld [vmem:[%s237 + $0x1f0] sm:$0xff]
        %v338 = vld [vmem:[%s237 + $0x1f8] sm:$0xff]
        %v339 = vpack.c.bf16 %v276, %v275
        %v340 = vpack.c.bf16 %v278, %v277
        %v341 = vpack.c.bf16 %v280, %v279
        %v342 = vpack.c.bf16 %v282, %v281
        %v343 = vpack.c.bf16 %v284, %v283
        %v344 = vpack.c.bf16 %v286, %v285
        %v345 = vpack.c.bf16 %v288, %v287
        %v346 = vpack.c.bf16 %v290, %v289
        %v347 = vpack.c.bf16 %v292, %v291
        %v348 = vpack.c.bf16 %v294, %v293
        %v349 = vpack.c.bf16 %v296, %v295
        %v350 = vpack.c.bf16 %v298, %v297
        %v351 = vpack.c.bf16 %v300, %v299
        %v352 = vpack.c.bf16 %v302, %v301
        %v353 = vpack.c.bf16 %v304, %v303
        %v354 = vpack.c.bf16 %v306, %v305
        %v355 = vpack.c.bf16 %v308, %v307
        %v356 = vpack.c.bf16 %v310, %v309
        %v357 = vpack.c.bf16 %v312, %v311
        %v358 = vpack.c.bf16 %v314, %v313
        %v359 = vpack.c.bf16 %v316, %v315
        %v360 = vpack.c.bf16 %v318, %v317
        %v361 = vpack.c.bf16 %v320, %v319
        %v362 = vpack.c.bf16 %v322, %v321
        %v363 = vpack.c.bf16 %v324, %v323
        %v364 = vpack.c.bf16 %v326, %v325
        %v365 = vpack.c.bf16 %v328, %v327
        %v366 = vpack.c.bf16 %v330, %v329
        %v367 = vpack.c.bf16 %v332, %v331
        %v368 = vpack.c.bf16 %v334, %v333
        %v369 = vpack.c.bf16 %v336, %v335
        %v370 = vpack.c.bf16 %v338, %v337
        %v371 = vld [vmem:[#allocation5] sm:$0xff]
        %v372 = vld [vmem:[#allocation5 + $0x8] sm:$0xff]
        %v373 = vld [vmem:[#allocation5 + $0x10] sm:$0xff]
        %v374 = vld [vmem:[#allocation5 + $0x18] sm:$0xff]
        %v375 = vld [vmem:[#allocation5 + $0x20] sm:$0xff]
        %v376 = vld [vmem:[#allocation5 + $0x28] sm:$0xff]
        %v377 = vld [vmem:[#allocation5 + $0x30] sm:$0xff]
        %v378 = vld [vmem:[#allocation5 + $0x38] sm:$0xff]
        %v379 = vld [vmem:[#allocation5 + $0x40] sm:$0xff]
        %v380 = vld [vmem:[#allocation5 + $0x48] sm:$0xff]
        %v381 = vld [vmem:[#allocation5 + $0x50] sm:$0xff]
        %v382 = vld [vmem:[#allocation5 + $0x58] sm:$0xff]
        %v383 = vld [vmem:[#allocation5 + $0x60] sm:$0xff]
        %v384 = vld [vmem:[#allocation5 + $0x68] sm:$0xff]
        %v385 = vld [vmem:[#allocation5 + $0x70] sm:$0xff]
        %v386 = vld [vmem:[#allocation5 + $0x78] sm:$0xff]
        %v387 = vld [vmem:[%s2] sm:$0x3]
        %v389 = vlaneseq
        %v390 = vshrl.u32 %v389, 7
        %v391 = vsub.s32 0, %v390
        %v392 = vrot.slane %v387, %v391
        %v393 = vlaneseq
        %v394 = vshrl.u32 %v393, 7
        %v395 = vsub.s32 1, %v394
        %v396 = vrot.slane %v387, %v395
        %v415 = vunpack.c.l.b16 %v371
        %v416 = vunpack.c.h.b16 %v371
        %v417 = vunpack.c.l.b16 %v372
        %v418 = vunpack.c.h.b16 %v372
        %v419 = vunpack.c.l.b16 %v373
        %v420 = vunpack.c.h.b16 %v373
        %v421 = vunpack.c.l.b16 %v374
        %v422 = vunpack.c.h.b16 %v374
        %v423 = vunpack.c.l.b16 %v375
        %v424 = vunpack.c.h.b16 %v375
        %v425 = vunpack.c.l.b16 %v376
        %v426 = vunpack.c.h.b16 %v376
        %v427 = vunpack.c.l.b16 %v377
        %v428 = vunpack.c.h.b16 %v377
        %v429 = vunpack.c.l.b16 %v378
        %v430 = vunpack.c.h.b16 %v378
        %v431 = vunpack.c.l.b16 %v379
        %v432 = vunpack.c.h.b16 %v379
        %v433 = vunpack.c.l.b16 %v380
        %v434 = vunpack.c.h.b16 %v380
        %v435 = vunpack.c.l.b16 %v381
        %v436 = vunpack.c.h.b16 %v381
        %v437 = vunpack.c.l.b16 %v382
        %v438 = vunpack.c.h.b16 %v382
        %v439 = vunpack.c.l.b16 %v383
        %v440 = vunpack.c.h.b16 %v383
        %v441 = vunpack.c.l.b16 %v384
        %v442 = vunpack.c.h.b16 %v384
        %v443 = vunpack.c.l.b16 %v385
        %v444 = vunpack.c.h.b16 %v385
        %v445 = vunpack.c.l.b16 %v386
        %v446 = vunpack.c.h.b16 %v386
        %v447 = vpack.c.b16 %v417, %v415
        %v448 = vpack.c.b16 %v418, %v416
        %v449 = vpack.c.b16 %v421, %v419
        %v450 = vpack.c.b16 %v422, %v420
        %v451 = vpack.c.b16 %v425, %v423
        %v452 = vpack.c.b16 %v426, %v424
        %v453 = vpack.c.b16 %v429, %v427
        %v454 = vpack.c.b16 %v430, %v428
        %v455 = vpack.c.b16 %v433, %v431
        %v456 = vpack.c.b16 %v434, %v432
        %v457 = vpack.c.b16 %v437, %v435
        %v458 = vpack.c.b16 %v438, %v436
        %v459 = vpack.c.b16 %v441, %v439
        %v460 = vpack.c.b16 %v442, %v440
        %v461 = vpack.c.b16 %v445, %v443
        %v462 = vpack.c.b16 %v446, %v444
        %479 = vmatprep.subr.bf16.mxu0 %v448
        %480 = vmatpush1.bf16.msra.mxu0 %v447
        %481 = vmatprep.subr.bf16.mxu0 %v450
        %482 = vmatpush1.bf16.msra.mxu0 %v449
        %483 = vmatprep.subr.bf16.mxu0 %v452
        %484 = vmatpush1.bf16.msra.mxu0 %v451
        %485 = vmatprep.subr.bf16.mxu0 %v454
        %486 = vmatpush1.bf16.msra.mxu0 %v453
        %487 = vmatprep.subr.bf16.mxu0 %v456
        %488 = vmatpush1.bf16.msra.mxu0 %v455
        %489 = vmatprep.subr.bf16.mxu0 %v458
        %490 = vmatpush1.bf16.msra.mxu0 %v457
        %491 = vmatprep.subr.bf16.mxu0 %v460
        %492 = vmatpush1.bf16.msra.mxu0 %v459
        %493 = vmatprep.subr.bf16.mxu0 %v462
        %494 = vmatpush1.bf16.msra.mxu0 %v461
        %495 = vmatprep.subr.bf16.mxu0 0
        %496 = vmatpush1.bf16.msra.mxu0 0
        %497 = vmatprep.subr.bf16.mxu0 0
        %498 = vmatpush1.bf16.msra.mxu0 0
        %499 = vmatprep.subr.bf16.mxu0 0
        %500 = vmatpush1.bf16.msra.mxu0 0
        %501 = vmatprep.subr.bf16.mxu0 0
        %502 = vmatpush1.bf16.msra.mxu0 0
        %503 = vmatprep.subr.bf16.mxu0 0
        %504 = vmatpush1.bf16.msra.mxu0 0
        %505 = vmatprep.subr.bf16.mxu0 0
        %506 = vmatpush1.bf16.msra.mxu0 0
        %507 = vmatprep.subr.bf16.mxu0 0
        %508 = vmatpush1.bf16.msra.mxu0 0
        %509 = vmatprep.subr.bf16.mxu0 0
        %510 = vmatpush1.bf16.msra.mxu0 0
        %511 = vmatprep.mubr.bf16.mxu0 0
        %512 = vmatmul.mubr.bf16.gmra.mrb[0].mxu0 %v339
        %v513 = vpop.f32.mrb[0].mxu0
        %v514 = vadd.f32 %v392, %v513
        %v515 = vpop.f32.mrb[0].mxu0
        %v516 = vadd.f32 %v396, %v515
        %v517 = vpop.f32.mrb[0].mxu0
        %v518 = vadd.f32 %v392, %v517
        %v519 = vpop.f32.mrb[0].mxu0
        %v520 = vadd.f32 %v396, %v519
        %521 = vmatprep.mubr.bf16.mxu0 0
        %522 = vmatmul.mubr.bf16.gmra.mrb[0].mxu0 %v340
        %v523 = vpop.f32.mrb[0].mxu0
        %v524 = vadd.f32 %v392, %v523
        %v525 = vpop.f32.mrb[0].mxu0
        %v526 = vadd.f32 %v396, %v525
        %v527 = vpop.f32.mrb[0].mxu0
        %v528 = vadd.f32 %v392, %v527
        %v529 = vpop.f32.mrb[0].mxu0
        %v530 = vadd.f32 %v396, %v529
        %531 = vmatprep.mubr.bf16.mxu0 0
        %532 = vmatmul.mubr.bf16.gmra.mrb[0].mxu0 %v341
        %v533 = vpop.f32.mrb[0].mxu0
        %v534 = vadd.f32 %v392, %v533
        %v535 = vpop.f32.mrb[0].mxu0
        %v536 = vadd.f32 %v396, %v535
        %v537 = vpop.f32.mrb[0].mxu0
        %v538 = vadd.f32 %v392, %v537
        %v539 = vpop.f32.mrb[0].mxu0
        %v540 = vadd.f32 %v396, %v539
        %541 = vmatprep.mubr.bf16.mxu0 0
        %542 = vmatmul.mubr.bf16.gmra.mrb[0].mxu0 %v342
        %v543 = vpop.f32.mrb[0].mxu0
        %v544 = vadd.f32 %v392, %v543
        %v545 = vpop.f32.mrb[0].mxu0
        %v546 = vadd.f32 %v396, %v545
        %v547 = vpop.f32.mrb[0].mxu0
        %v548 = vadd.f32 %v392, %v547
        %v549 = vpop.f32.mrb[0].mxu0
        %v550 = vadd.f32 %v396, %v549
        %551 = vmatprep.mubr.bf16.mxu0 0
        %552 = vmatmul.mubr.bf16.gmra.mrb[0].mxu0 %v343
        %v553 = vpop.f32.mrb[0].mxu0
        %v554 = vadd.f32 %v392, %v553
        %v555 = vpop.f32.mrb[0].mxu0
        %v556 = vadd.f32 %v396, %v555
        %v557 = vpop.f32.mrb[0].mxu0
        %v558 = vadd.f32 %v392, %v557
        %v559 = vpop.f32.mrb[0].mxu0
        %v560 = vadd.f32 %v396, %v559
        %561 = vmatprep.mubr.bf16.mxu0 0
        %562 = vmatmul.mubr.bf16.gmra.mrb[0].mxu0 %v344
        %v563 = vpop.f32.mrb[0].mxu0
        %v564 = vadd.f32 %v392, %v563
        %v565 = vpop.f32.mrb[0].mxu0
        %v566 = vadd.f32 %v396, %v565
        %v567 = vpop.f32.mrb[0].mxu0
        %v568 = vadd.f32 %v392, %v567
        %v569 = vpop.f32.mrb[0].mxu0
        %v570 = vadd.f32 %v396, %v569
        %571 = vmatprep.mubr.bf16.mxu0 0
        %572 = vmatmul.mubr.bf16.gmra.mrb[0].mxu0 %v345
        %v573 = vpop.f32.mrb[0].mxu0
        %v574 = vadd.f32 %v392, %v573
        %v575 = vpop.f32.mrb[0].mxu0
        %v576 = vadd.f32 %v396, %v575
        %v577 = vpop.f32.mrb[0].mxu0
        %v578 = vadd.f32 %v392, %v577
        %v579 = vpop.f32.mrb[0].mxu0
        %v580 = vadd.f32 %v396, %v579
        %581 = vmatprep.mubr.bf16.mxu0 0
        %582 = vmatmul.mubr.bf16.gmra.mrb[0].mxu0 %v346
        %v583 = vpop.f32.mrb[0].mxu0
        %v584 = vadd.f32 %v392, %v583
        %v585 = vpop.f32.mrb[0].mxu0
        %v586 = vadd.f32 %v396, %v585
        %v587 = vpop.f32.mrb[0].mxu0
        %v588 = vadd.f32 %v392, %v587
        %v589 = vpop.f32.mrb[0].mxu0
        %v590 = vadd.f32 %v396, %v589
        %591 = vmatprep.mubr.bf16.mxu0 0
        %592 = vmatmul.mubr.bf16.gmra.mrb[0].mxu0 %v347
        %v593 = vpop.f32.mrb[0].mxu0
        %v594 = vadd.f32 %v392, %v593
        %v595 = vpop.f32.mrb[0].mxu0
        %v596 = vadd.f32 %v396, %v595
        %v597 = vpop.f32.mrb[0].mxu0
        %v598 = vadd.f32 %v392, %v597
        %v599 = vpop.f32.mrb[0].mxu0
        %v600 = vadd.f32 %v396, %v599
        %601 = vmatprep.mubr.bf16.mxu0 0
        %602 = vmatmul.mubr.bf16.gmra.mrb[0].mxu0 %v348
        %v603 = vpop.f32.mrb[0].mxu0
        %v604 = vadd.f32 %v392, %v603
        %v605 = vpop.f32.mrb[0].mxu0
        %v606 = vadd.f32 %v396, %v605
        %v607 = vpop.f32.mrb[0].mxu0
        %v608 = vadd.f32 %v392, %v607
        %v609 = vpop.f32.mrb[0].mxu0
        %v610 = vadd.f32 %v396, %v609
        %611 = vmatprep.mubr.bf16.mxu0 0
        %612 = vmatmul.mubr.bf16.gmra.mrb[0].mxu0 %v349
        %v613 = vpop.f32.mrb[0].mxu0
        %v614 = vadd.f32 %v392, %v613
        %v615 = vpop.f32.mrb[0].mxu0
        %v616 = vadd.f32 %v396, %v615
        %v617 = vpop.f32.mrb[0].mxu0
        %v618 = vadd.f32 %v392, %v617
        %v619 = vpop.f32.mrb[0].mxu0
        %v620 = vadd.f32 %v396, %v619
        %621 = vmatprep.mubr.bf16.mxu0 0
        %622 = vmatmul.mubr.bf16.gmra.mrb[0].mxu0 %v350
        %v623 = vpop.f32.mrb[0].mxu0
        %v624 = vadd.f32 %v392, %v623
        %v625 = vpop.f32.mrb[0].mxu0
        %v626 = vadd.f32 %v396, %v625
        %v627 = vpop.f32.mrb[0].mxu0
        %v628 = vadd.f32 %v392, %v627
        %v629 = vpop.f32.mrb[0].mxu0
        %v630 = vadd.f32 %v396, %v629
        %631 = vmatprep.mubr.bf16.mxu0 0
        %632 = vmatmul.mubr.bf16.gmra.mrb[0].mxu0 %v351
        %v633 = vpop.f32.mrb[0].mxu0
        %v634 = vadd.f32 %v392, %v633
        %v635 = vpop.f32.mrb[0].mxu0
        %v636 = vadd.f32 %v396, %v635
        %v637 = vpop.f32.mrb[0].mxu0
        %v638 = vadd.f32 %v392, %v637
        %v639 = vpop.f32.mrb[0].mxu0
        %v640 = vadd.f32 %v396, %v639
        %641 = vmatprep.mubr.bf16.mxu0 0
        %642 = vmatmul.mubr.bf16.gmra.mrb[0].mxu0 %v352
        %v643 = vpop.f32.mrb[0].mxu0
        %v644 = vadd.f32 %v392, %v643
        %v645 = vpop.f32.mrb[0].mxu0
        %v646 = vadd.f32 %v396, %v645
        %v647 = vpop.f32.mrb[0].mxu0
        %v648 = vadd.f32 %v392, %v647
        %v649 = vpop.f32.mrb[0].mxu0
        %v650 = vadd.f32 %v396, %v649
        %651 = vmatprep.mubr.bf16.mxu0 0
        %652 = vmatmul.mubr.bf16.gmra.mrb[0].mxu0 %v353
        %v653 = vpop.f32.mrb[0].mxu0
        %v654 = vadd.f32 %v392, %v653
        %v655 = vpop.f32.mrb[0].mxu0
        %v656 = vadd.f32 %v396, %v655
        %v657 = vpop.f32.mrb[0].mxu0
        %v658 = vadd.f32 %v392, %v657
        %v659 = vpop.f32.mrb[0].mxu0
        %v660 = vadd.f32 %v396, %v659
        %661 = vmatprep.mubr.bf16.mxu0 0
        %662 = vmatmul.mubr.bf16.gmra.mrb[0].mxu0 %v354
        %v663 = vpop.f32.mrb[0].mxu0
        %v664 = vadd.f32 %v392, %v663
        %v665 = vpop.f32.mrb[0].mxu0
        %v666 = vadd.f32 %v396, %v665
        %v667 = vpop.f32.mrb[0].mxu0
        %v668 = vadd.f32 %v392, %v667
        %v669 = vpop.f32.mrb[0].mxu0
        %v670 = vadd.f32 %v396, %v669
        %671 = vmatprep.mubr.bf16.mxu0 0
        %672 = vmatmul.mubr.bf16.gmra.mrb[0].mxu0 %v355
        %v673 = vpop.f32.mrb[0].mxu0
        %v674 = vadd.f32 %v392, %v673
        %v675 = vpop.f32.mrb[0].mxu0
        %v676 = vadd.f32 %v396, %v675
        %v677 = vpop.f32.mrb[0].mxu0
        %v678 = vadd.f32 %v392, %v677
        %v679 = vpop.f32.mrb[0].mxu0
        %v680 = vadd.f32 %v396, %v679
        %681 = vmatprep.mubr.bf16.mxu0 0
        %682 = vmatmul.mubr.bf16.gmra.mrb[0].mxu0 %v356
        %v683 = vpop.f32.mrb[0].mxu0
        %v684 = vadd.f32 %v392, %v683
        %v685 = vpop.f32.mrb[0].mxu0
        %v686 = vadd.f32 %v396, %v685
        %v687 = vpop.f32.mrb[0].mxu0
        %v688 = vadd.f32 %v392, %v687
        %v689 = vpop.f32.mrb[0].mxu0
        %v690 = vadd.f32 %v396, %v689
        %691 = vmatprep.mubr.bf16.mxu0 0
        %692 = vmatmul.mubr.bf16.gmra.mrb[0].mxu0 %v357
        %v693 = vpop.f32.mrb[0].mxu0
        %v694 = vadd.f32 %v392, %v693
        %v695 = vpop.f32.mrb[0].mxu0
        %v696 = vadd.f32 %v396, %v695
        %v697 = vpop.f32.mrb[0].mxu0
        %v698 = vadd.f32 %v392, %v697
        %v699 = vpop.f32.mrb[0].mxu0
        %v700 = vadd.f32 %v396, %v699
        %701 = vmatprep.mubr.bf16.mxu0 0
        %702 = vmatmul.mubr.bf16.gmra.mrb[0].mxu0 %v358
        %v703 = vpop.f32.mrb[0].mxu0
        %v704 = vadd.f32 %v392, %v703
        %v705 = vpop.f32.mrb[0].mxu0
        %v706 = vadd.f32 %v396, %v705
        %v707 = vpop.f32.mrb[0].mxu0
        %v708 = vadd.f32 %v392, %v707
        %v709 = vpop.f32.mrb[0].mxu0
        %v710 = vadd.f32 %v396, %v709
        %711 = vmatprep.mubr.bf16.mxu0 0
        %712 = vmatmul.mubr.bf16.gmra.mrb[0].mxu0 %v359
        %v713 = vpop.f32.mrb[0].mxu0
        %v714 = vadd.f32 %v392, %v713
        %v715 = vpop.f32.mrb[0].mxu0
        %v716 = vadd.f32 %v396, %v715
        %v717 = vpop.f32.mrb[0].mxu0
        %v718 = vadd.f32 %v392, %v717
        %v719 = vpop.f32.mrb[0].mxu0
        %v720 = vadd.f32 %v396, %v719
        %721 = vmatprep.mubr.bf16.mxu0 0
        %722 = vmatmul.mubr.bf16.gmra.mrb[0].mxu0 %v360
        %v723 = vpop.f32.mrb[0].mxu0
        %v724 = vadd.f32 %v392, %v723
        %v725 = vpop.f32.mrb[0].mxu0
        %v726 = vadd.f32 %v396, %v725
        %v727 = vpop.f32.mrb[0].mxu0
        %v728 = vadd.f32 %v392, %v727
        %v729 = vpop.f32.mrb[0].mxu0
        %v730 = vadd.f32 %v396, %v729
        %731 = vmatprep.mubr.bf16.mxu0 0
        %732 = vmatmul.mubr.bf16.gmra.mrb[0].mxu0 %v361
        %v733 = vpop.f32.mrb[0].mxu0
        %v734 = vadd.f32 %v392, %v733
        %v735 = vpop.f32.mrb[0].mxu0
        %v736 = vadd.f32 %v396, %v735
        %v737 = vpop.f32.mrb[0].mxu0
        %v738 = vadd.f32 %v392, %v737
        %v739 = vpop.f32.mrb[0].mxu0
        %v740 = vadd.f32 %v396, %v739
        %741 = vmatprep.mubr.bf16.mxu0 0
        %742 = vmatmul.mubr.bf16.gmra.mrb[0].mxu0 %v362
        %v743 = vpop.f32.mrb[0].mxu0
        %v744 = vadd.f32 %v392, %v743
        %v745 = vpop.f32.mrb[0].mxu0
        %v746 = vadd.f32 %v396, %v745
        %v747 = vpop.f32.mrb[0].mxu0
        %v748 = vadd.f32 %v392, %v747
        %v749 = vpop.f32.mrb[0].mxu0
        %v750 = vadd.f32 %v396, %v749
        %751 = vmatprep.mubr.bf16.mxu0 0
        %752 = vmatmul.mubr.bf16.gmra.mrb[0].mxu0 %v363
        %v753 = vpop.f32.mrb[0].mxu0
        %v754 = vadd.f32 %v392, %v753
        %v755 = vpop.f32.mrb[0].mxu0
        %v756 = vadd.f32 %v396, %v755
        %v757 = vpop.f32.mrb[0].mxu0
        %v758 = vadd.f32 %v392, %v757
        %v759 = vpop.f32.mrb[0].mxu0
        %v760 = vadd.f32 %v396, %v759
        %761 = vmatprep.mubr.bf16.mxu0 0
        %762 = vmatmul.mubr.bf16.gmra.mrb[0].mxu0 %v364
        %v763 = vpop.f32.mrb[0].mxu0
        %v764 = vadd.f32 %v392, %v763
        %v765 = vpop.f32.mrb[0].mxu0
        %v766 = vadd.f32 %v396, %v765
        %v767 = vpop.f32.mrb[0].mxu0
        %v768 = vadd.f32 %v392, %v767
        %v769 = vpop.f32.mrb[0].mxu0
        %v770 = vadd.f32 %v396, %v769
        %771 = vmatprep.mubr.bf16.mxu0 0
        %772 = vmatmul.mubr.bf16.gmra.mrb[0].mxu0 %v365
        %v773 = vpop.f32.mrb[0].mxu0
        %v774 = vadd.f32 %v392, %v773
        %v775 = vpop.f32.mrb[0].mxu0
        %v776 = vadd.f32 %v396, %v775
        %v777 = vpop.f32.mrb[0].mxu0
        %v778 = vadd.f32 %v392, %v777
        %v779 = vpop.f32.mrb[0].mxu0
        %v780 = vadd.f32 %v396, %v779
        %781 = vmatprep.mubr.bf16.mxu0 0
        %782 = vmatmul.mubr.bf16.gmra.mrb[0].mxu0 %v366
        %v783 = vpop.f32.mrb[0].mxu0
        %v784 = vadd.f32 %v392, %v783
        %v785 = vpop.f32.mrb[0].mxu0
        %v786 = vadd.f32 %v396, %v785
        %v787 = vpop.f32.mrb[0].mxu0
        %v788 = vadd.f32 %v392, %v787
        %v789 = vpop.f32.mrb[0].mxu0
        %v790 = vadd.f32 %v396, %v789
        %791 = vmatprep.mubr.bf16.mxu0 0
        %792 = vmatmul.mubr.bf16.gmra.mrb[0].mxu0 %v367
        %v793 = vpop.f32.mrb[0].mxu0
        %v794 = vadd.f32 %v392, %v793
        %v795 = vpop.f32.mrb[0].mxu0
        %v796 = vadd.f32 %v396, %v795
        %v797 = vpop.f32.mrb[0].mxu0
        %v798 = vadd.f32 %v392, %v797
        %v799 = vpop.f32.mrb[0].mxu0
        %v800 = vadd.f32 %v396, %v799
        %801 = vmatprep.mubr.bf16.mxu0 0
        %802 = vmatmul.mubr.bf16.gmra.mrb[0].mxu0 %v368
        %v803 = vpop.f32.mrb[0].mxu0
        %v804 = vadd.f32 %v392, %v803
        %v805 = vpop.f32.mrb[0].mxu0
        %v806 = vadd.f32 %v396, %v805
        %v807 = vpop.f32.mrb[0].mxu0
        %v808 = vadd.f32 %v392, %v807
        %v809 = vpop.f32.mrb[0].mxu0
        %v810 = vadd.f32 %v396, %v809
        %811 = vmatprep.mubr.bf16.mxu0 0
        %812 = vmatmul.mubr.bf16.gmra.mrb[0].mxu0 %v369
        %v813 = vpop.f32.mrb[0].mxu0
        %v814 = vadd.f32 %v392, %v813
        %v815 = vpop.f32.mrb[0].mxu0
        %v816 = vadd.f32 %v396, %v815
        %v817 = vpop.f32.mrb[0].mxu0
        %v818 = vadd.f32 %v392, %v817
        %v819 = vpop.f32.mrb[0].mxu0
        %v820 = vadd.f32 %v396, %v819
        %821 = vmatprep.mubr.bf16.mxu0 0
        %822 = vmatmul.mubr.bf16.gmra.mrb[0].mxu0 %v370
        %v823 = vpop.f32.mrb[0].mxu0
        %v824 = vadd.f32 %v392, %v823
        %v825 = vpop.f32.mrb[0].mxu0
        %v826 = vadd.f32 %v396, %v825
        %v827 = vpop.f32.mrb[0].mxu0
        %v828 = vadd.f32 %v392, %v827
        %v829 = vpop.f32.mrb[0].mxu0
        %v830 = vadd.f32 %v396, %v829
        %831 = vdwg.mxu0
        %v832 = vmul.f32 %v514, %v514
        %v833 = vmul.f32 %v516, %v516
        %v834 = vmul.f32 %v518, %v518
        %v835 = vmul.f32 %v520, %v520
        %v836 = vmul.f32 %v524, %v524
        %v837 = vmul.f32 %v526, %v526
        %v838 = vmul.f32 %v528, %v528
        %v839 = vmul.f32 %v530, %v530
        %v840 = vmul.f32 %v534, %v534
        %v841 = vmul.f32 %v536, %v536
        %v842 = vmul.f32 %v538, %v538
        %v843 = vmul.f32 %v540, %v540
        %v844 = vmul.f32 %v544, %v544
        %v845 = vmul.f32 %v546, %v546
        %v846 = vmul.f32 %v548, %v548
        %v847 = vmul.f32 %v550, %v550
        %v848 = vmul.f32 %v554, %v554
        %v849 = vmul.f32 %v556, %v556
        %v850 = vmul.f32 %v558, %v558
        %v851 = vmul.f32 %v560, %v560
        %v852 = vmul.f32 %v564, %v564
        %v853 = vmul.f32 %v566, %v566
        %v854 = vmul.f32 %v568, %v568
        %v855 = vmul.f32 %v570, %v570
        %v856 = vmul.f32 %v574, %v574
        %v857 = vmul.f32 %v576, %v576
        %v858 = vmul.f32 %v578, %v578
        %v859 = vmul.f32 %v580, %v580
        %v860 = vmul.f32 %v584, %v584
        %v861 = vmul.f32 %v586, %v586
        %v862 = vmul.f32 %v588, %v588
        %v863 = vmul.f32 %v590, %v590
        %v864 = vmul.f32 %v594, %v594
        %v865 = vmul.f32 %v596, %v596
        %v866 = vmul.f32 %v598, %v598
        %v867 = vmul.f32 %v600, %v600
        %v868 = vmul.f32 %v604, %v604
        %v869 = vmul.f32 %v606, %v606
        %v870 = vmul.f32 %v608, %v608
        %v871 = vmul.f32 %v610, %v610
        %v872 = vmul.f32 %v614, %v614
        %v873 = vmul.f32 %v616, %v616
        %v874 = vmul.f32 %v618, %v618
        %v875 = vmul.f32 %v620, %v620
        %v876 = vmul.f32 %v624, %v624
        %v877 = vmul.f32 %v626, %v626
        %v878 = vmul.f32 %v628, %v628
        %v879 = vmul.f32 %v630, %v630
        %v880 = vmul.f32 %v634, %v634
        %v881 = vmul.f32 %v636, %v636
        %v882 = vmul.f32 %v638, %v638
        %v883 = vmul.f32 %v640, %v640
        %v884 = vmul.f32 %v644, %v644
        %v885 = vmul.f32 %v646, %v646
        %v886 = vmul.f32 %v648, %v648
        %v887 = vmul.f32 %v650, %v650
        %v888 = vmul.f32 %v654, %v654
        %v889 = vmul.f32 %v656, %v656
        %v890 = vmul.f32 %v658, %v658
        %v891 = vmul.f32 %v660, %v660
        %v892 = vmul.f32 %v664, %v664
        %v893 = vmul.f32 %v666, %v666
        %v894 = vmul.f32 %v668, %v668
        %v895 = vmul.f32 %v670, %v670
        %v896 = vmul.f32 %v674, %v674
        %v897 = vmul.f32 %v676, %v676
        %v898 = vmul.f32 %v678, %v678
        %v899 = vmul.f32 %v680, %v680
        %v900 = vmul.f32 %v684, %v684
        %v901 = vmul.f32 %v686, %v686
        %v902 = vmul.f32 %v688, %v688
        %v903 = vmul.f32 %v690, %v690
        %v904 = vmul.f32 %v694, %v694
        %v905 = vmul.f32 %v696, %v696
        %v906 = vmul.f32 %v698, %v698
        %v907 = vmul.f32 %v700, %v700
        %v908 = vmul.f32 %v704, %v704
        %v909 = vmul.f32 %v706, %v706
        %v910 = vmul.f32 %v708, %v708
        %v911 = vmul.f32 %v710, %v710
        %v912 = vmul.f32 %v714, %v714
        %v913 = vmul.f32 %v716, %v716
        %v914 = vmul.f32 %v718, %v718
        %v915 = vmul.f32 %v720, %v720
        %v916 = vmul.f32 %v724, %v724
        %v917 = vmul.f32 %v726, %v726
        %v918 = vmul.f32 %v728, %v728
        %v919 = vmul.f32 %v730, %v730
        %v920 = vmul.f32 %v734, %v734
        %v921 = vmul.f32 %v736, %v736
        %v922 = vmul.f32 %v738, %v738
        %v923 = vmul.f32 %v740, %v740
        %v924 = vmul.f32 %v744, %v744
        %v925 = vmul.f32 %v746, %v746
        %v926 = vmul.f32 %v748, %v748
        %v927 = vmul.f32 %v750, %v750
        %v928 = vmul.f32 %v754, %v754
        %v929 = vmul.f32 %v756, %v756
        %v930 = vmul.f32 %v758, %v758
        %v931 = vmul.f32 %v760, %v760
        %v932 = vmul.f32 %v764, %v764
        %v933 = vmul.f32 %v766, %v766
        %v934 = vmul.f32 %v768, %v768
        %v935 = vmul.f32 %v770, %v770
        %v936 = vmul.f32 %v774, %v774
        %v937 = vmul.f32 %v776, %v776
        %v938 = vmul.f32 %v778, %v778
        %v939 = vmul.f32 %v780, %v780
        %v940 = vmul.f32 %v784, %v784
        %v941 = vmul.f32 %v786, %v786
        %v942 = vmul.f32 %v788, %v788
        %v943 = vmul.f32 %v790, %v790
        %v944 = vmul.f32 %v794, %v794
        %v945 = vmul.f32 %v796, %v796
        %v946 = vmul.f32 %v798, %v798
        %v947 = vmul.f32 %v800, %v800
        %v948 = vmul.f32 %v804, %v804
        %v949 = vmul.f32 %v806, %v806
        %v950 = vmul.f32 %v808, %v808
        %v951 = vmul.f32 %v810, %v810
        %v952 = vmul.f32 %v814, %v814
        %v953 = vmul.f32 %v816, %v816
        %v954 = vmul.f32 %v818, %v818
        %v955 = vmul.f32 %v820, %v820
        %v956 = vmul.f32 %v824, %v824
        %v957 = vmul.f32 %v826, %v826
        %v958 = vmul.f32 %v828, %v828
        %v959 = vmul.f32 %v830, %v830
        %v960 = vmul.f32 %v514, 0.5
        %v961 = vmul.f32 %v516, 0.5
        %v962 = vmul.f32 %v518, 0.5
        %v963 = vmul.f32 %v520, 0.5
        %v964 = vmul.f32 %v524, 0.5
        %v965 = vmul.f32 %v526, 0.5
        %v966 = vmul.f32 %v528, 0.5
        %v967 = vmul.f32 %v530, 0.5
        %v968 = vmul.f32 %v534, 0.5
        %v969 = vmul.f32 %v536, 0.5
        %v970 = vmul.f32 %v538, 0.5
        %v971 = vmul.f32 %v540, 0.5
        %v972 = vmul.f32 %v544, 0.5
        %v973 = vmul.f32 %v546, 0.5
        %v974 = vmul.f32 %v548, 0.5
        %v975 = vmul.f32 %v550, 0.5
        %v976 = vmul.f32 %v554, 0.5
        %v977 = vmul.f32 %v556, 0.5
        %v978 = vmul.f32 %v558, 0.5
        %v979 = vmul.f32 %v560, 0.5
        %v980 = vmul.f32 %v564, 0.5
        %v981 = vmul.f32 %v566, 0.5
        %v982 = vmul.f32 %v568, 0.5
        %v983 = vmul.f32 %v570, 0.5
        %v984 = vmul.f32 %v574, 0.5
        %v985 = vmul.f32 %v576, 0.5
        %v986 = vmul.f32 %v578, 0.5
        %v987 = vmul.f32 %v580, 0.5
        %v988 = vmul.f32 %v584, 0.5
        %v989 = vmul.f32 %v586, 0.5
        %v990 = vmul.f32 %v588, 0.5
        %v991 = vmul.f32 %v590, 0.5
        %v992 = vmul.f32 %v594, 0.5
        %v993 = vmul.f32 %v596, 0.5
        %v994 = vmul.f32 %v598, 0.5
        %v995 = vmul.f32 %v600, 0.5
        %v996 = vmul.f32 %v604, 0.5
        %v997 = vmul.f32 %v606, 0.5
        %v998 = vmul.f32 %v608, 0.5
        %v999 = vmul.f32 %v610, 0.5
        %v1000 = vmul.f32 %v614, 0.5
        %v1001 = vmul.f32 %v616, 0.5
        %v1002 = vmul.f32 %v618, 0.5
        %v1003 = vmul.f32 %v620, 0.5
        %v1004 = vmul.f32 %v624, 0.5
        %v1005 = vmul.f32 %v626, 0.5
        %v1006 = vmul.f32 %v628, 0.5
        %v1007 = vmul.f32 %v630, 0.5
        %v1008 = vmul.f32 %v634, 0.5
        %v1009 = vmul.f32 %v636, 0.5
        %v1010 = vmul.f32 %v638, 0.5
        %v1011 = vmul.f32 %v640, 0.5
        %v1012 = vmul.f32 %v644, 0.5
        %v1013 = vmul.f32 %v646, 0.5
        %v1014 = vmul.f32 %v648, 0.5
        %v1015 = vmul.f32 %v650, 0.5
        %v1016 = vmul.f32 %v654, 0.5
        %v1017 = vmul.f32 %v656, 0.5
        %v1018 = vmul.f32 %v658, 0.5
        %v1019 = vmul.f32 %v660, 0.5
        %v1020 = vmul.f32 %v664, 0.5
        %v1021 = vmul.f32 %v666, 0.5
        %v1022 = vmul.f32 %v668, 0.5
        %v1023 = vmul.f32 %v670, 0.5
        %v1024 = vmul.f32 %v674, 0.5
        %v1025 = vmul.f32 %v676, 0.5
        %v1026 = vmul.f32 %v678, 0.5
        %v1027 = vmul.f32 %v680, 0.5
        %v1028 = vmul.f32 %v684, 0.5
        %v1029 = vmul.f32 %v686, 0.5
        %v1030 = vmul.f32 %v688, 0.5
        %v1031 = vmul.f32 %v690, 0.5
        %v1032 = vmul.f32 %v694, 0.5
        %v1033 = vmul.f32 %v696, 0.5
        %v1034 = vmul.f32 %v698, 0.5
        %v1035 = vmul.f32 %v700, 0.5
        %v1036 = vmul.f32 %v704, 0.5
        %v1037 = vmul.f32 %v706, 0.5
        %v1038 = vmul.f32 %v708, 0.5
        %v1039 = vmul.f32 %v710, 0.5
        %v1040 = vmul.f32 %v714, 0.5
        %v1041 = vmul.f32 %v716, 0.5
        %v1042 = vmul.f32 %v718, 0.5
        %v1043 = vmul.f32 %v720, 0.5
        %v1044 = vmul.f32 %v724, 0.5
        %v1045 = vmul.f32 %v726, 0.5
        %v1046 = vmul.f32 %v728, 0.5
        %v1047 = vmul.f32 %v730, 0.5
        %v1048 = vmul.f32 %v734, 0.5
        %v1049 = vmul.f32 %v736, 0.5
        %v1050 = vmul.f32 %v738, 0.5
        %v1051 = vmul.f32 %v740, 0.5
        %v1052 = vmul.f32 %v744, 0.5
        %v1053 = vmul.f32 %v746, 0.5
        %v1054 = vmul.f32 %v748, 0.5
        %v1055 = vmul.f32 %v750, 0.5
        %v1056 = vmul.f32 %v754, 0.5
        %v1057 = vmul.f32 %v756, 0.5
        %v1058 = vmul.f32 %v758, 0.5
        %v1059 = vmul.f32 %v760, 0.5
        %v1060 = vmul.f32 %v764, 0.5
        %v1061 = vmul.f32 %v766, 0.5
        %v1062 = vmul.f32 %v768, 0.5
        %v1063 = vmul.f32 %v770, 0.5
        %v1064 = vmul.f32 %v774, 0.5
        %v1065 = vmul.f32 %v776, 0.5
        %v1066 = vmul.f32 %v778, 0.5
        %v1067 = vmul.f32 %v780, 0.5
        %v1068 = vmul.f32 %v784, 0.5
        %v1069 = vmul.f32 %v786, 0.5
        %v1070 = vmul.f32 %v788, 0.5
        %v1071 = vmul.f32 %v790, 0.5
        %v1072 = vmul.f32 %v794, 0.5
        %v1073 = vmul.f32 %v796, 0.5
        %v1074 = vmul.f32 %v798, 0.5
        %v1075 = vmul.f32 %v800, 0.5
        %v1076 = vmul.f32 %v804, 0.5
        %v1077 = vmul.f32 %v806, 0.5
        %v1078 = vmul.f32 %v808, 0.5
        %v1079 = vmul.f32 %v810, 0.5
        %v1080 = vmul.f32 %v814, 0.5
        %v1081 = vmul.f32 %v816, 0.5
        %v1082 = vmul.f32 %v818, 0.5
        %v1083 = vmul.f32 %v820, 0.5
        %v1084 = vmul.f32 %v824, 0.5
        %v1085 = vmul.f32 %v826, 0.5
        %v1086 = vmul.f32 %v828, 0.5
        %v1087 = vmul.f32 %v830, 0.5
        %v1088 = vmul.f32 %v832, 0.035677407
        %v1089 = vmul.f32 %v833, 0.035677407
        %v1090 = vmul.f32 %v834, 0.035677407
        %v1091 = vmul.f32 %v835, 0.035677407
        %v1092 = vmul.f32 %v836, 0.035677407
        %v1093 = vmul.f32 %v837, 0.035677407
        %v1094 = vmul.f32 %v838, 0.035677407
        %v1095 = vmul.f32 %v839, 0.035677407
        %v1096 = vmul.f32 %v840, 0.035677407
        %v1097 = vmul.f32 %v841, 0.035677407
        %v1098 = vmul.f32 %v842, 0.035677407
        %v1099 = vmul.f32 %v843, 0.035677407
        %v1100 = vmul.f32 %v844, 0.035677407
        %v1101 = vmul.f32 %v845, 0.035677407
        %v1102 = vmul.f32 %v846, 0.035677407
        %v1103 = vmul.f32 %v847, 0.035677407
        %v1104 = vmul.f32 %v848, 0.035677407
        %v1105 = vmul.f32 %v849, 0.035677407
        %v1106 = vmul.f32 %v850, 0.035677407
        %v1107 = vmul.f32 %v851, 0.035677407
        %v1108 = vmul.f32 %v852, 0.035677407
        %v1109 = vmul.f32 %v853, 0.035677407
        %v1110 = vmul.f32 %v854, 0.035677407
        %v1111 = vmul.f32 %v855, 0.035677407
        %v1112 = vmul.f32 %v856, 0.035677407
        %v1113 = vmul.f32 %v857, 0.035677407
        %v1114 = vmul.f32 %v858, 0.035677407
        %v1115 = vmul.f32 %v859, 0.035677407
        %v1116 = vmul.f32 %v860, 0.035677407
        %v1117 = vmul.f32 %v861, 0.035677407
        %v1118 = vmul.f32 %v862, 0.035677407
        %v1119 = vmul.f32 %v863, 0.035677407
        %v1120 = vmul.f32 %v864, 0.035677407
        %v1121 = vmul.f32 %v865, 0.035677407
        %v1122 = vmul.f32 %v866, 0.035677407
        %v1123 = vmul.f32 %v867, 0.035677407
        %v1124 = vmul.f32 %v868, 0.035677407
        %v1125 = vmul.f32 %v869, 0.035677407
        %v1126 = vmul.f32 %v870, 0.035677407
        %v1127 = vmul.f32 %v871, 0.035677407
        %v1128 = vmul.f32 %v872, 0.035677407
        %v1129 = vmul.f32 %v873, 0.035677407
        %v1130 = vmul.f32 %v874, 0.035677407
        %v1131 = vmul.f32 %v875, 0.035677407
        %v1132 = vmul.f32 %v876, 0.035677407
        %v1133 = vmul.f32 %v877, 0.035677407
        %v1134 = vmul.f32 %v878, 0.035677407
        %v1135 = vmul.f32 %v879, 0.035677407
        %v1136 = vmul.f32 %v880, 0.035677407
        %v1137 = vmul.f32 %v881, 0.035677407
        %v1138 = vmul.f32 %v882, 0.035677407
        %v1139 = vmul.f32 %v883, 0.035677407
        %v1140 = vmul.f32 %v884, 0.035677407
        %v1141 = vmul.f32 %v885, 0.035677407
        %v1142 = vmul.f32 %v886, 0.035677407
        %v1143 = vmul.f32 %v887, 0.035677407
        %v1144 = vmul.f32 %v888, 0.035677407
        %v1145 = vmul.f32 %v889, 0.035677407
        %v1146 = vmul.f32 %v890, 0.035677407
        %v1147 = vmul.f32 %v891, 0.035677407
        %v1148 = vmul.f32 %v892, 0.035677407
        %v1149 = vmul.f32 %v893, 0.035677407
        %v1150 = vmul.f32 %v894, 0.035677407
        %v1151 = vmul.f32 %v895, 0.035677407
        %v1152 = vmul.f32 %v896, 0.035677407
        %v1153 = vmul.f32 %v897, 0.035677407
        %v1154 = vmul.f32 %v898, 0.035677407
        %v1155 = vmul.f32 %v899, 0.035677407
        %v1156 = vmul.f32 %v900, 0.035677407
        %v1157 = vmul.f32 %v901, 0.035677407
        %v1158 = vmul.f32 %v902, 0.035677407
        %v1159 = vmul.f32 %v903, 0.035677407
        %v1160 = vmul.f32 %v904, 0.035677407
        %v1161 = vmul.f32 %v905, 0.035677407
        %v1162 = vmul.f32 %v906, 0.035677407
        %v1163 = vmul.f32 %v907, 0.035677407
        %v1164 = vmul.f32 %v908, 0.035677407
        %v1165 = vmul.f32 %v909, 0.035677407
        %v1166 = vmul.f32 %v910, 0.035677407
        %v1167 = vmul.f32 %v911, 0.035677407
        %v1168 = vmul.f32 %v912, 0.035677407
        %v1169 = vmul.f32 %v913, 0.035677407
        %v1170 = vmul.f32 %v914, 0.035677407
        %v1171 = vmul.f32 %v915, 0.035677407
        %v1172 = vmul.f32 %v916, 0.035677407
        %v1173 = vmul.f32 %v917, 0.035677407
        %v1174 = vmul.f32 %v918, 0.035677407
        %v1175 = vmul.f32 %v919, 0.035677407
        %v1176 = vmul.f32 %v920, 0.035677407
        %v1177 = vmul.f32 %v921, 0.035677407
        %v1178 = vmul.f32 %v922, 0.035677407
        %v1179 = vmul.f32 %v923, 0.035677407
        %v1180 = vmul.f32 %v924, 0.035677407
        %v1181 = vmul.f32 %v925, 0.035677407
        %v1182 = vmul.f32 %v926, 0.035677407
        %v1183 = vmul.f32 %v927, 0.035677407
        %v1184 = vmul.f32 %v928, 0.035677407
        %v1185 = vmul.f32 %v929, 0.035677407
        %v1186 = vmul.f32 %v930, 0.035677407
        %v1187 = vmul.f32 %v931, 0.035677407
        %v1188 = vmul.f32 %v932, 0.035677407
        %v1189 = vmul.f32 %v933, 0.035677407
        %v1190 = vmul.f32 %v934, 0.035677407
        %v1191 = vmul.f32 %v935, 0.035677407
        %v1192 = vmul.f32 %v936, 0.035677407
        %v1193 = vmul.f32 %v937, 0.035677407
        %v1194 = vmul.f32 %v938, 0.035677407
        %v1195 = vmul.f32 %v939, 0.035677407
        %v1196 = vmul.f32 %v940, 0.035677407
        %v1197 = vmul.f32 %v941, 0.035677407
        %v1198 = vmul.f32 %v942, 0.035677407
        %v1199 = vmul.f32 %v943, 0.035677407
        %v1200 = vmul.f32 %v944, 0.035677407
        %v1201 = vmul.f32 %v945, 0.035677407
        %v1202 = vmul.f32 %v946, 0.035677407
        %v1203 = vmul.f32 %v947, 0.035677407
        %v1204 = vmul.f32 %v948, 0.035677407
        %v1205 = vmul.f32 %v949, 0.035677407
        %v1206 = vmul.f32 %v950, 0.035677407
        %v1207 = vmul.f32 %v951, 0.035677407
        %v1208 = vmul.f32 %v952, 0.035677407
        %v1209 = vmul.f32 %v953, 0.035677407
        %v1210 = vmul.f32 %v954, 0.035677407
        %v1211 = vmul.f32 %v955, 0.035677407
        %v1212 = vmul.f32 %v956, 0.035677407
        %v1213 = vmul.f32 %v957, 0.035677407
        %v1214 = vmul.f32 %v958, 0.035677407
        %v1215 = vmul.f32 %v959, 0.035677407
        %v1216 = vadd.f32 %v1088, 0.7978846
        %v1217 = vadd.f32 %v1089, 0.7978846
        %v1218 = vadd.f32 %v1090, 0.7978846
        %v1219 = vadd.f32 %v1091, 0.7978846
        %v1220 = vadd.f32 %v1092, 0.7978846
        %v1221 = vadd.f32 %v1093, 0.7978846
        %v1222 = vadd.f32 %v1094, 0.7978846
        %v1223 = vadd.f32 %v1095, 0.7978846
        %v1224 = vadd.f32 %v1096, 0.7978846
        %v1225 = vadd.f32 %v1097, 0.7978846
        %v1226 = vadd.f32 %v1098, 0.7978846
        %v1227 = vadd.f32 %v1099, 0.7978846
        %v1228 = vadd.f32 %v1100, 0.7978846
        %v1229 = vadd.f32 %v1101, 0.7978846
        %v1230 = vadd.f32 %v1102, 0.7978846
        %v1231 = vadd.f32 %v1103, 0.7978846
        %v1232 = vadd.f32 %v1104, 0.7978846
        %v1233 = vadd.f32 %v1105, 0.7978846
        %v1234 = vadd.f32 %v1106, 0.7978846
        %v1235 = vadd.f32 %v1107, 0.7978846
        %v1236 = vadd.f32 %v1108, 0.7978846
        %v1237 = vadd.f32 %v1109, 0.7978846
        %v1238 = vadd.f32 %v1110, 0.7978846
        %v1239 = vadd.f32 %v1111, 0.7978846
        %v1240 = vadd.f32 %v1112, 0.7978846
        %v1241 = vadd.f32 %v1113, 0.7978846
        %v1242 = vadd.f32 %v1114, 0.7978846
        %v1243 = vadd.f32 %v1115, 0.7978846
        %v1244 = vadd.f32 %v1116, 0.7978846
        %v1245 = vadd.f32 %v1117, 0.7978846
        %v1246 = vadd.f32 %v1118, 0.7978846
        %v1247 = vadd.f32 %v1119, 0.7978846
        %v1248 = vadd.f32 %v1120, 0.7978846
        %v1249 = vadd.f32 %v1121, 0.7978846
        %v1250 = vadd.f32 %v1122, 0.7978846
        %v1251 = vadd.f32 %v1123, 0.7978846
        %v1252 = vadd.f32 %v1124, 0.7978846
        %v1253 = vadd.f32 %v1125, 0.7978846
        %v1254 = vadd.f32 %v1126, 0.7978846
        %v1255 = vadd.f32 %v1127, 0.7978846
        %v1256 = vadd.f32 %v1128, 0.7978846
        %v1257 = vadd.f32 %v1129, 0.7978846
        %v1258 = vadd.f32 %v1130, 0.7978846
        %v1259 = vadd.f32 %v1131, 0.7978846
        %v1260 = vadd.f32 %v1132, 0.7978846
        %v1261 = vadd.f32 %v1133, 0.7978846
        %v1262 = vadd.f32 %v1134, 0.7978846
        %v1263 = vadd.f32 %v1135, 0.7978846
        %v1264 = vadd.f32 %v1136, 0.7978846
        %v1265 = vadd.f32 %v1137, 0.7978846
        %v1266 = vadd.f32 %v1138, 0.7978846
        %v1267 = vadd.f32 %v1139, 0.7978846
        %v1268 = vadd.f32 %v1140, 0.7978846
        %v1269 = vadd.f32 %v1141, 0.7978846
        %v1270 = vadd.f32 %v1142, 0.7978846
        %v1271 = vadd.f32 %v1143, 0.7978846
        %v1272 = vadd.f32 %v1144, 0.7978846
        %v1273 = vadd.f32 %v1145, 0.7978846
        %v1274 = vadd.f32 %v1146, 0.7978846
        %v1275 = vadd.f32 %v1147, 0.7978846
        %v1276 = vadd.f32 %v1148, 0.7978846
        %v1277 = vadd.f32 %v1149, 0.7978846
        %v1278 = vadd.f32 %v1150, 0.7978846
        %v1279 = vadd.f32 %v1151, 0.7978846
        %v1280 = vadd.f32 %v1152, 0.7978846
        %v1281 = vadd.f32 %v1153, 0.7978846
        %v1282 = vadd.f32 %v1154, 0.7978846
        %v1283 = vadd.f32 %v1155, 0.7978846
        %v1284 = vadd.f32 %v1156, 0.7978846
        %v1285 = vadd.f32 %v1157, 0.7978846
        %v1286 = vadd.f32 %v1158, 0.7978846
        %v1287 = vadd.f32 %v1159, 0.7978846
        %v1288 = vadd.f32 %v1160, 0.7978846
        %v1289 = vadd.f32 %v1161, 0.7978846
        %v1290 = vadd.f32 %v1162, 0.7978846
        %v1291 = vadd.f32 %v1163, 0.7978846
        %v1292 = vadd.f32 %v1164, 0.7978846
        %v1293 = vadd.f32 %v1165, 0.7978846
        %v1294 = vadd.f32 %v1166, 0.7978846
        %v1295 = vadd.f32 %v1167, 0.7978846
        %v1296 = vadd.f32 %v1168, 0.7978846
        %v1297 = vadd.f32 %v1169, 0.7978846
        %v1298 = vadd.f32 %v1170, 0.7978846
        %v1299 = vadd.f32 %v1171, 0.7978846
        %v1300 = vadd.f32 %v1172, 0.7978846
        %v1301 = vadd.f32 %v1173, 0.7978846
        %v1302 = vadd.f32 %v1174, 0.7978846
        %v1303 = vadd.f32 %v1175, 0.7978846
        %v1304 = vadd.f32 %v1176, 0.7978846
        %v1305 = vadd.f32 %v1177, 0.7978846
        %v1306 = vadd.f32 %v1178, 0.7978846
        %v1307 = vadd.f32 %v1179, 0.7978846
        %v1308 = vadd.f32 %v1180, 0.7978846
        %v1309 = vadd.f32 %v1181, 0.7978846
        %v1310 = vadd.f32 %v1182, 0.7978846
        %v1311 = vadd.f32 %v1183, 0.7978846
        %v1312 = vadd.f32 %v1184, 0.7978846
        %v1313 = vadd.f32 %v1185, 0.7978846
        %v1314 = vadd.f32 %v1186, 0.7978846
        %v1315 = vadd.f32 %v1187, 0.7978846
        %v1316 = vadd.f32 %v1188, 0.7978846
        %v1317 = vadd.f32 %v1189, 0.7978846
        %v1318 = vadd.f32 %v1190, 0.7978846
        %v1319 = vadd.f32 %v1191, 0.7978846
        %v1320 = vadd.f32 %v1192, 0.7978846
        %v1321 = vadd.f32 %v1193, 0.7978846
        %v1322 = vadd.f32 %v1194, 0.7978846
        %v1323 = vadd.f32 %v1195, 0.7978846
        %v1324 = vadd.f32 %v1196, 0.7978846
        %v1325 = vadd.f32 %v1197, 0.7978846
        %v1326 = vadd.f32 %v1198, 0.7978846
        %v1327 = vadd.f32 %v1199, 0.7978846
        %v1328 = vadd.f32 %v1200, 0.7978846
        %v1329 = vadd.f32 %v1201, 0.7978846
        %v1330 = vadd.f32 %v1202, 0.7978846
        %v1331 = vadd.f32 %v1203, 0.7978846
        %v1332 = vadd.f32 %v1204, 0.7978846
        %v1333 = vadd.f32 %v1205, 0.7978846
        %v1334 = vadd.f32 %v1206, 0.7978846
        %v1335 = vadd.f32 %v1207, 0.7978846
        %v1336 = vadd.f32 %v1208, 0.7978846
        %v1337 = vadd.f32 %v1209, 0.7978846
        %v1338 = vadd.f32 %v1210, 0.7978846
        %v1339 = vadd.f32 %v1211, 0.7978846
        %v1340 = vadd.f32 %v1212, 0.7978846
        %v1341 = vadd.f32 %v1213, 0.7978846
        %v1342 = vadd.f32 %v1214, 0.7978846
        %v1343 = vadd.f32 %v1215, 0.7978846
        %v1344 = vmul.f32 %v514, %v1216
        %v1345 = vmul.f32 %v516, %v1217
        %v1346 = vmul.f32 %v518, %v1218
        %v1347 = vmul.f32 %v520, %v1219
        %v1348 = vmul.f32 %v524, %v1220
        %v1349 = vmul.f32 %v526, %v1221
        %v1350 = vmul.f32 %v528, %v1222
        %v1351 = vmul.f32 %v530, %v1223
        %v1352 = vmul.f32 %v534, %v1224
        %v1353 = vmul.f32 %v536, %v1225
        %v1354 = vmul.f32 %v538, %v1226
        %v1355 = vmul.f32 %v540, %v1227
        %v1356 = vmul.f32 %v544, %v1228
        %v1357 = vmul.f32 %v546, %v1229
        %v1358 = vmul.f32 %v548, %v1230
        %v1359 = vmul.f32 %v550, %v1231
        %v1360 = vmul.f32 %v554, %v1232
        %v1361 = vmul.f32 %v556, %v1233
        %v1362 = vmul.f32 %v558, %v1234
        %v1363 = vmul.f32 %v560, %v1235
        %v1364 = vmul.f32 %v564, %v1236
        %v1365 = vmul.f32 %v566, %v1237
        %v1366 = vmul.f32 %v568, %v1238
        %v1367 = vmul.f32 %v570, %v1239
        %v1368 = vmul.f32 %v574, %v1240
        %v1369 = vmul.f32 %v576, %v1241
        %v1370 = vmul.f32 %v578, %v1242
        %v1371 = vmul.f32 %v580, %v1243
        %v1372 = vmul.f32 %v584, %v1244
        %v1373 = vmul.f32 %v586, %v1245
        %v1374 = vmul.f32 %v588, %v1246
        %v1375 = vmul.f32 %v590, %v1247
        %v1376 = vmul.f32 %v594, %v1248
        %v1377 = vmul.f32 %v596, %v1249
        %v1378 = vmul.f32 %v598, %v1250
        %v1379 = vmul.f32 %v600, %v1251
        %v1380 = vmul.f32 %v604, %v1252
        %v1381 = vmul.f32 %v606, %v1253
        %v1382 = vmul.f32 %v608, %v1254
        %v1383 = vmul.f32 %v610, %v1255
        %v1384 = vmul.f32 %v614, %v1256
        %v1385 = vmul.f32 %v616, %v1257
        %v1386 = vmul.f32 %v618, %v1258
        %v1387 = vmul.f32 %v620, %v1259
        %v1388 = vmul.f32 %v624, %v1260
        %v1389 = vmul.f32 %v626, %v1261
        %v1390 = vmul.f32 %v628, %v1262
        %v1391 = vmul.f32 %v630, %v1263
        %v1392 = vmul.f32 %v634, %v1264
        %v1393 = vmul.f32 %v636, %v1265
        %v1394 = vmul.f32 %v638, %v1266
        %v1395 = vmul.f32 %v640, %v1267
        %v1396 = vmul.f32 %v644, %v1268
        %v1397 = vmul.f32 %v646, %v1269
        %v1398 = vmul.f32 %v648, %v1270
        %v1399 = vmul.f32 %v650, %v1271
        %v1400 = vmul.f32 %v654, %v1272
        %v1401 = vmul.f32 %v656, %v1273
        %v1402 = vmul.f32 %v658, %v1274
        %v1403 = vmul.f32 %v660, %v1275
        %v1404 = vmul.f32 %v664, %v1276
        %v1405 = vmul.f32 %v666, %v1277
        %v1406 = vmul.f32 %v668, %v1278
        %v1407 = vmul.f32 %v670, %v1279
        %v1408 = vmul.f32 %v674, %v1280
        %v1409 = vmul.f32 %v676, %v1281
        %v1410 = vmul.f32 %v678, %v1282
        %v1411 = vmul.f32 %v680, %v1283
        %v1412 = vmul.f32 %v684, %v1284
        %v1413 = vmul.f32 %v686, %v1285
        %v1414 = vmul.f32 %v688, %v1286
        %v1415 = vmul.f32 %v690, %v1287
        %v1416 = vmul.f32 %v694, %v1288
        %v1417 = vmul.f32 %v696, %v1289
        %v1418 = vmul.f32 %v698, %v1290
        %v1419 = vmul.f32 %v700, %v1291
        %v1420 = vmul.f32 %v704, %v1292
        %v1421 = vmul.f32 %v706, %v1293
        %v1422 = vmul.f32 %v708, %v1294
        %v1423 = vmul.f32 %v710, %v1295
        %v1424 = vmul.f32 %v714, %v1296
        %v1425 = vmul.f32 %v716, %v1297
        %v1426 = vmul.f32 %v718, %v1298
        %v1427 = vmul.f32 %v720, %v1299
        %v1428 = vmul.f32 %v724, %v1300
        %v1429 = vmul.f32 %v726, %v1301
        %v1430 = vmul.f32 %v728, %v1302
        %v1431 = vmul.f32 %v730, %v1303
        %v1432 = vmul.f32 %v734, %v1304
        %v1433 = vmul.f32 %v736, %v1305
        %v1434 = vmul.f32 %v738, %v1306
        %v1435 = vmul.f32 %v740, %v1307
        %v1436 = vmul.f32 %v744, %v1308
        %v1437 = vmul.f32 %v746, %v1309
        %v1438 = vmul.f32 %v748, %v1310
        %v1439 = vmul.f32 %v750, %v1311
        %v1440 = vmul.f32 %v754, %v1312
        %v1441 = vmul.f32 %v756, %v1313
        %v1442 = vmul.f32 %v758, %v1314
        %v1443 = vmul.f32 %v760, %v1315
        %v1444 = vmul.f32 %v764, %v1316
        %v1445 = vmul.f32 %v766, %v1317
        %v1446 = vmul.f32 %v768, %v1318
        %v1447 = vmul.f32 %v770, %v1319
        %v1448 = vmul.f32 %v774, %v1320
        %v1449 = vmul.f32 %v776, %v1321
        %v1450 = vmul.f32 %v778, %v1322
        %v1451 = vmul.f32 %v780, %v1323
        %v1452 = vmul.f32 %v784, %v1324
        %v1453 = vmul.f32 %v786, %v1325
        %v1454 = vmul.f32 %v788, %v1326
        %v1455 = vmul.f32 %v790, %v1327
        %v1456 = vmul.f32 %v794, %v1328
        %v1457 = vmul.f32 %v796, %v1329
        %v1458 = vmul.f32 %v798, %v1330
        %v1459 = vmul.f32 %v800, %v1331
        %v1460 = vmul.f32 %v804, %v1332
        %v1461 = vmul.f32 %v806, %v1333
        %v1462 = vmul.f32 %v808, %v1334
        %v1463 = vmul.f32 %v810, %v1335
        %v1464 = vmul.f32 %v814, %v1336
        %v1465 = vmul.f32 %v816, %v1337
        %v1466 = vmul.f32 %v818, %v1338
        %v1467 = vmul.f32 %v820, %v1339
        %v1468 = vmul.f32 %v824, %v1340
        %v1469 = vmul.f32 %v826, %v1341
        %v1470 = vmul.f32 %v828, %v1342
        %v1471 = vmul.f32 %v830, %v1343
        %v1472 = vtanh.pop %v1344
        %v1473 = vtanh.pop %v1345
        %v1474 = vtanh.pop %v1346
        %v1475 = vtanh.pop %v1347
        %v1476 = vtanh.pop %v1348
        %v1477 = vtanh.pop %v1349
        %v1478 = vtanh.pop %v1350
        %v1479 = vtanh.pop %v1351
        %v1480 = vtanh.pop %v1352
        %v1481 = vtanh.pop %v1353
        %v1482 = vtanh.pop %v1354
        %v1483 = vtanh.pop %v1355
        %v1484 = vtanh.pop %v1356
        %v1485 = vtanh.pop %v1357
        %v1486 = vtanh.pop %v1358
        %v1487 = vtanh.pop %v1359
        %v1488 = vtanh.pop %v1360
        %v1489 = vtanh.pop %v1361
        %v1490 = vtanh.pop %v1362
        %v1491 = vtanh.pop %v1363
        %v1492 = vtanh.pop %v1364
        %v1493 = vtanh.pop %v1365
        %v1494 = vtanh.pop %v1366
        %v1495 = vtanh.pop %v1367
        %v1496 = vtanh.pop %v1368
        %v1497 = vtanh.pop %v1369
        %v1498 = vtanh.pop %v1370
        %v1499 = vtanh.pop %v1371
        %v1500 = vtanh.pop %v1372
        %v1501 = vtanh.pop %v1373
        %v1502 = vtanh.pop %v1374
        %v1503 = vtanh.pop %v1375
        %v1504 = vtanh.pop %v1376
        %v1505 = vtanh.pop %v1377
        %v1506 = vtanh.pop %v1378
        %v1507 = vtanh.pop %v1379
        %v1508 = vtanh.pop %v1380
        %v1509 = vtanh.pop %v1381
        %v1510 = vtanh.pop %v1382
        %v1511 = vtanh.pop %v1383
        %v1512 = vtanh.pop %v1384
        %v1513 = vtanh.pop %v1385
        %v1514 = vtanh.pop %v1386
        %v1515 = vtanh.pop %v1387
        %v1516 = vtanh.pop %v1388
        %v1517 = vtanh.pop %v1389
        %v1518 = vtanh.pop %v1390
        %v1519 = vtanh.pop %v1391
        %v1520 = vtanh.pop %v1392
        %v1521 = vtanh.pop %v1393
        %v1522 = vtanh.pop %v1394
        %v1523 = vtanh.pop %v1395
        %v1524 = vtanh.pop %v1396
        %v1525 = vtanh.pop %v1397
        %v1526 = vtanh.pop %v1398
        %v1527 = vtanh.pop %v1399
        %v1528 = vtanh.pop %v1400
        %v1529 = vtanh.pop %v1401
        %v1530 = vtanh.pop %v1402
        %v1531 = vtanh.pop %v1403
        %v1532 = vtanh.pop %v1404
        %v1533 = vtanh.pop %v1405
        %v1534 = vtanh.pop %v1406
        %v1535 = vtanh.pop %v1407
        %v1536 = vtanh.pop %v1408
        %v1537 = vtanh.pop %v1409
        %v1538 = vtanh.pop %v1410
        %v1539 = vtanh.pop %v1411
        %v1540 = vtanh.pop %v1412
        %v1541 = vtanh.pop %v1413
        %v1542 = vtanh.pop %v1414
        %v1543 = vtanh.pop %v1415
        %v1544 = vtanh.pop %v1416
        %v1545 = vtanh.pop %v1417
        %v1546 = vtanh.pop %v1418
        %v1547 = vtanh.pop %v1419
        %v1548 = vtanh.pop %v1420
        %v1549 = vtanh.pop %v1421
        %v1550 = vtanh.pop %v1422
        %v1551 = vtanh.pop %v1423
        %v1552 = vtanh.pop %v1424
        %v1553 = vtanh.pop %v1425
        %v1554 = vtanh.pop %v1426
        %v1555 = vtanh.pop %v1427
        %v1556 = vtanh.pop %v1428
        %v1557 = vtanh.pop %v1429
        %v1558 = vtanh.pop %v1430
        %v1559 = vtanh.pop %v1431
        %v1560 = vtanh.pop %v1432
        %v1561 = vtanh.pop %v1433
        %v1562 = vtanh.pop %v1434
        %v1563 = vtanh.pop %v1435
        %v1564 = vtanh.pop %v1436
        %v1565 = vtanh.pop %v1437
        %v1566 = vtanh.pop %v1438
        %v1567 = vtanh.pop %v1439
        %v1568 = vtanh.pop %v1440
        %v1569 = vtanh.pop %v1441
        %v1570 = vtanh.pop %v1442
        %v1571 = vtanh.pop %v1443
        %v1572 = vtanh.pop %v1444
        %v1573 = vtanh.pop %v1445
        %v1574 = vtanh.pop %v1446
        %v1575 = vtanh.pop %v1447
        %v1576 = vtanh.pop %v1448
        %v1577 = vtanh.pop %v1449
        %v1578 = vtanh.pop %v1450
        %v1579 = vtanh.pop %v1451
        %v1580 = vtanh.pop %v1452
        %v1581 = vtanh.pop %v1453
        %v1582 = vtanh.pop %v1454
        %v1583 = vtanh.pop %v1455
        %v1584 = vtanh.pop %v1456
        %v1585 = vtanh.pop %v1457
        %v1586 = vtanh.pop %v1458
        %v1587 = vtanh.pop %v1459
        %v1588 = vtanh.pop %v1460
        %v1589 = vtanh.pop %v1461
        %v1590 = vtanh.pop %v1462
        %v1591 = vtanh.pop %v1463
        %v1592 = vtanh.pop %v1464
        %v1593 = vtanh.pop %v1465
        %v1594 = vtanh.pop %v1466
        %v1595 = vtanh.pop %v1467
        %v1596 = vtanh.pop %v1468
        %v1597 = vtanh.pop %v1469
        %v1598 = vtanh.pop %v1470
        %v1599 = vtanh.pop %v1471
        %v1600 = vadd.f32 %v1472, 1.0
        %v1601 = vadd.f32 %v1473, 1.0
        %v1602 = vadd.f32 %v1474, 1.0
        %v1603 = vadd.f32 %v1475, 1.0
        %v1604 = vadd.f32 %v1476, 1.0
        %v1605 = vadd.f32 %v1477, 1.0
        %v1606 = vadd.f32 %v1478, 1.0
        %v1607 = vadd.f32 %v1479, 1.0
        %v1608 = vadd.f32 %v1480, 1.0
        %v1609 = vadd.f32 %v1481, 1.0
        %v1610 = vadd.f32 %v1482, 1.0
        %v1611 = vadd.f32 %v1483, 1.0
        %v1612 = vadd.f32 %v1484, 1.0
        %v1613 = vadd.f32 %v1485, 1.0
        %v1614 = vadd.f32 %v1486, 1.0
        %v1615 = vadd.f32 %v1487, 1.0
        %v1616 = vadd.f32 %v1488, 1.0
        %v1617 = vadd.f32 %v1489, 1.0
        %v1618 = vadd.f32 %v1490, 1.0
        %v1619 = vadd.f32 %v1491, 1.0
        %v1620 = vadd.f32 %v1492, 1.0
        %v1621 = vadd.f32 %v1493, 1.0
        %v1622 = vadd.f32 %v1494, 1.0
        %v1623 = vadd.f32 %v1495, 1.0
        %v1624 = vadd.f32 %v1496, 1.0
        %v1625 = vadd.f32 %v1497, 1.0
        %v1626 = vadd.f32 %v1498, 1.0
        %v1627 = vadd.f32 %v1499, 1.0
        %v1628 = vadd.f32 %v1500, 1.0
        %v1629 = vadd.f32 %v1501, 1.0
        %v1630 = vadd.f32 %v1502, 1.0
        %v1631 = vadd.f32 %v1503, 1.0
        %v1632 = vadd.f32 %v1504, 1.0
        %v1633 = vadd.f32 %v1505, 1.0
        %v1634 = vadd.f32 %v1506, 1.0
        %v1635 = vadd.f32 %v1507, 1.0
        %v1636 = vadd.f32 %v1508, 1.0
        %v1637 = vadd.f32 %v1509, 1.0
        %v1638 = vadd.f32 %v1510, 1.0
        %v1639 = vadd.f32 %v1511, 1.0
        %v1640 = vadd.f32 %v1512, 1.0
        %v1641 = vadd.f32 %v1513, 1.0
        %v1642 = vadd.f32 %v1514, 1.0
        %v1643 = vadd.f32 %v1515, 1.0
        %v1644 = vadd.f32 %v1516, 1.0
        %v1645 = vadd.f32 %v1517, 1.0
        %v1646 = vadd.f32 %v1518, 1.0
        %v1647 = vadd.f32 %v1519, 1.0
        %v1648 = vadd.f32 %v1520, 1.0
        %v1649 = vadd.f32 %v1521, 1.0
        %v1650 = vadd.f32 %v1522, 1.0
        %v1651 = vadd.f32 %v1523, 1.0
        %v1652 = vadd.f32 %v1524, 1.0
        %v1653 = vadd.f32 %v1525, 1.0
        %v1654 = vadd.f32 %v1526, 1.0
        %v1655 = vadd.f32 %v1527, 1.0
        %v1656 = vadd.f32 %v1528, 1.0
        %v1657 = vadd.f32 %v1529, 1.0
        %v1658 = vadd.f32 %v1530, 1.0
        %v1659 = vadd.f32 %v1531, 1.0
        %v1660 = vadd.f32 %v1532, 1.0
        %v1661 = vadd.f32 %v1533, 1.0
        %v1662 = vadd.f32 %v1534, 1.0
        %v1663 = vadd.f32 %v1535, 1.0
        %v1664 = vadd.f32 %v1536, 1.0
        %v1665 = vadd.f32 %v1537, 1.0
        %v1666 = vadd.f32 %v1538, 1.0
        %v1667 = vadd.f32 %v1539, 1.0
        %v1668 = vadd.f32 %v1540, 1.0
        %v1669 = vadd.f32 %v1541, 1.0
        %v1670 = vadd.f32 %v1542, 1.0
        %v1671 = vadd.f32 %v1543, 1.0
        %v1672 = vadd.f32 %v1544, 1.0
        %v1673 = vadd.f32 %v1545, 1.0
        %v1674 = vadd.f32 %v1546, 1.0
        %v1675 = vadd.f32 %v1547, 1.0
        %v1676 = vadd.f32 %v1548, 1.0
        %v1677 = vadd.f32 %v1549, 1.0
        %v1678 = vadd.f32 %v1550, 1.0
        %v1679 = vadd.f32 %v1551, 1.0
        %v1680 = vadd.f32 %v1552, 1.0
        %v1681 = vadd.f32 %v1553, 1.0
        %v1682 = vadd.f32 %v1554, 1.0
        %v1683 = vadd.f32 %v1555, 1.0
        %v1684 = vadd.f32 %v1556, 1.0
        %v1685 = vadd.f32 %v1557, 1.0
        %v1686 = vadd.f32 %v1558, 1.0
        %v1687 = vadd.f32 %v1559, 1.0
        %v1688 = vadd.f32 %v1560, 1.0
        %v1689 = vadd.f32 %v1561, 1.0
        %v1690 = vadd.f32 %v1562, 1.0
        %v1691 = vadd.f32 %v1563, 1.0
        %v1692 = vadd.f32 %v1564, 1.0
        %v1693 = vadd.f32 %v1565, 1.0
        %v1694 = vadd.f32 %v1566, 1.0
        %v1695 = vadd.f32 %v1567, 1.0
        %v1696 = vadd.f32 %v1568, 1.0
        %v1697 = vadd.f32 %v1569, 1.0
        %v1698 = vadd.f32 %v1570, 1.0
        %v1699 = vadd.f32 %v1571, 1.0
        %v1700 = vadd.f32 %v1572, 1.0
        %v1701 = vadd.f32 %v1573, 1.0
        %v1702 = vadd.f32 %v1574, 1.0
        %v1703 = vadd.f32 %v1575, 1.0
        %v1704 = vadd.f32 %v1576, 1.0
        %v1705 = vadd.f32 %v1577, 1.0
        %v1706 = vadd.f32 %v1578, 1.0
        %v1707 = vadd.f32 %v1579, 1.0
        %v1708 = vadd.f32 %v1580, 1.0
        %v1709 = vadd.f32 %v1581, 1.0
        %v1710 = vadd.f32 %v1582, 1.0
        %v1711 = vadd.f32 %v1583, 1.0
        %v1712 = vadd.f32 %v1584, 1.0
        %v1713 = vadd.f32 %v1585, 1.0
        %v1714 = vadd.f32 %v1586, 1.0
        %v1715 = vadd.f32 %v1587, 1.0
        %v1716 = vadd.f32 %v1588, 1.0
        %v1717 = vadd.f32 %v1589, 1.0
        %v1718 = vadd.f32 %v1590, 1.0
        %v1719 = vadd.f32 %v1591, 1.0
        %v1720 = vadd.f32 %v1592, 1.0
        %v1721 = vadd.f32 %v1593, 1.0
        %v1722 = vadd.f32 %v1594, 1.0
        %v1723 = vadd.f32 %v1595, 1.0
        %v1724 = vadd.f32 %v1596, 1.0
        %v1725 = vadd.f32 %v1597, 1.0
        %v1726 = vadd.f32 %v1598, 1.0
        %v1727 = vadd.f32 %v1599, 1.0
        %v1728 = vmul.f32 %v960, %v1600
        %v1729 = vmul.f32 %v961, %v1601
        %v1730 = vmul.f32 %v962, %v1602
        %v1731 = vmul.f32 %v963, %v1603
        %v1732 = vmul.f32 %v964, %v1604
        %v1733 = vmul.f32 %v965, %v1605
        %v1734 = vmul.f32 %v966, %v1606
        %v1735 = vmul.f32 %v967, %v1607
        %v1736 = vmul.f32 %v968, %v1608
        %v1737 = vmul.f32 %v969, %v1609
        %v1738 = vmul.f32 %v970, %v1610
        %v1739 = vmul.f32 %v971, %v1611
        %v1740 = vmul.f32 %v972, %v1612
        %v1741 = vmul.f32 %v973, %v1613
        %v1742 = vmul.f32 %v974, %v1614
        %v1743 = vmul.f32 %v975, %v1615
        %v1744 = vmul.f32 %v976, %v1616
        %v1745 = vmul.f32 %v977, %v1617
        %v1746 = vmul.f32 %v978, %v1618
        %v1747 = vmul.f32 %v979, %v1619
        %v1748 = vmul.f32 %v980, %v1620
        %v1749 = vmul.f32 %v981, %v1621
        %v1750 = vmul.f32 %v982, %v1622
        %v1751 = vmul.f32 %v983, %v1623
        %v1752 = vmul.f32 %v984, %v1624
        %v1753 = vmul.f32 %v985, %v1625
        %v1754 = vmul.f32 %v986, %v1626
        %v1755 = vmul.f32 %v987, %v1627
        %v1756 = vmul.f32 %v988, %v1628
        %v1757 = vmul.f32 %v989, %v1629
        %v1758 = vmul.f32 %v990, %v1630
        %v1759 = vmul.f32 %v991, %v1631
        %v1760 = vmul.f32 %v992, %v1632
        %v1761 = vmul.f32 %v993, %v1633
        %v1762 = vmul.f32 %v994, %v1634
        %v1763 = vmul.f32 %v995, %v1635
        %v1764 = vmul.f32 %v996, %v1636
        %v1765 = vmul.f32 %v997, %v1637
        %v1766 = vmul.f32 %v998, %v1638
        %v1767 = vmul.f32 %v999, %v1639
        %v1768 = vmul.f32 %v1000, %v1640
        %v1769 = vmul.f32 %v1001, %v1641
        %v1770 = vmul.f32 %v1002, %v1642
        %v1771 = vmul.f32 %v1003, %v1643
        %v1772 = vmul.f32 %v1004, %v1644
        %v1773 = vmul.f32 %v1005, %v1645
        %v1774 = vmul.f32 %v1006, %v1646
        %v1775 = vmul.f32 %v1007, %v1647
        %v1776 = vmul.f32 %v1008, %v1648
        %v1777 = vmul.f32 %v1009, %v1649
        %v1778 = vmul.f32 %v1010, %v1650
        %v1779 = vmul.f32 %v1011, %v1651
        %v1780 = vmul.f32 %v1012, %v1652
        %v1781 = vmul.f32 %v1013, %v1653
        %v1782 = vmul.f32 %v1014, %v1654
        %v1783 = vmul.f32 %v1015, %v1655
        %v1784 = vmul.f32 %v1016, %v1656
        %v1785 = vmul.f32 %v1017, %v1657
        %v1786 = vmul.f32 %v1018, %v1658
        %v1787 = vmul.f32 %v1019, %v1659
        %v1788 = vmul.f32 %v1020, %v1660
        %v1789 = vmul.f32 %v1021, %v1661
        %v1790 = vmul.f32 %v1022, %v1662
        %v1791 = vmul.f32 %v1023, %v1663
        %v1792 = vmul.f32 %v1024, %v1664
        %v1793 = vmul.f32 %v1025, %v1665
        %v1794 = vmul.f32 %v1026, %v1666
        %v1795 = vmul.f32 %v1027, %v1667
        %v1796 = vmul.f32 %v1028, %v1668
        %v1797 = vmul.f32 %v1029, %v1669
        %v1798 = vmul.f32 %v1030, %v1670
        %v1799 = vmul.f32 %v1031, %v1671
        %v1800 = vmul.f32 %v1032, %v1672
        %v1801 = vmul.f32 %v1033, %v1673
        %v1802 = vmul.f32 %v1034, %v1674
        %v1803 = vmul.f32 %v1035, %v1675
        %v1804 = vmul.f32 %v1036, %v1676
        %v1805 = vmul.f32 %v1037, %v1677
        %v1806 = vmul.f32 %v1038, %v1678
        %v1807 = vmul.f32 %v1039, %v1679
        %v1808 = vmul.f32 %v1040, %v1680
        %v1809 = vmul.f32 %v1041, %v1681
        %v1810 = vmul.f32 %v1042, %v1682
        %v1811 = vmul.f32 %v1043, %v1683
        %v1812 = vmul.f32 %v1044, %v1684
        %v1813 = vmul.f32 %v1045, %v1685
        %v1814 = vmul.f32 %v1046, %v1686
        %v1815 = vmul.f32 %v1047, %v1687
        %v1816 = vmul.f32 %v1048, %v1688
        %v1817 = vmul.f32 %v1049, %v1689
        %v1818 = vmul.f32 %v1050, %v1690
        %v1819 = vmul.f32 %v1051, %v1691
        %v1820 = vmul.f32 %v1052, %v1692
        %v1821 = vmul.f32 %v1053, %v1693
        %v1822 = vmul.f32 %v1054, %v1694
        %v1823 = vmul.f32 %v1055, %v1695
        %v1824 = vmul.f32 %v1056, %v1696
        %v1825 = vmul.f32 %v1057, %v1697
        %v1826 = vmul.f32 %v1058, %v1698
        %v1827 = vmul.f32 %v1059, %v1699
        %v1828 = vmul.f32 %v1060, %v1700
        %v1829 = vmul.f32 %v1061, %v1701
        %v1830 = vmul.f32 %v1062, %v1702
        %v1831 = vmul.f32 %v1063, %v1703
        %v1832 = vmul.f32 %v1064, %v1704
        %v1833 = vmul.f32 %v1065, %v1705
        %v1834 = vmul.f32 %v1066, %v1706
        %v1835 = vmul.f32 %v1067, %v1707
        %v1836 = vmul.f32 %v1068, %v1708
        %v1837 = vmul.f32 %v1069, %v1709
        %v1838 = vmul.f32 %v1070, %v1710
        %v1839 = vmul.f32 %v1071, %v1711
        %v1840 = vmul.f32 %v1072, %v1712
        %v1841 = vmul.f32 %v1073, %v1713
        %v1842 = vmul.f32 %v1074, %v1714
        %v1843 = vmul.f32 %v1075, %v1715
        %v1844 = vmul.f32 %v1076, %v1716
        %v1845 = vmul.f32 %v1077, %v1717
        %v1846 = vmul.f32 %v1078, %v1718
        %v1847 = vmul.f32 %v1079, %v1719
        %v1848 = vmul.f32 %v1080, %v1720
        %v1849 = vmul.f32 %v1081, %v1721
        %v1850 = vmul.f32 %v1082, %v1722
        %v1851 = vmul.f32 %v1083, %v1723
        %v1852 = vmul.f32 %v1084, %v1724
        %v1853 = vmul.f32 %v1085, %v1725
        %v1854 = vmul.f32 %v1086, %v1726
        %v1855 = vmul.f32 %v1087, %v1727
        %v1856 = vpack.c.bf16 %v1730, %v1728
        %v1857 = vpack.c.bf16 %v1731, %v1729
        %v1858 = vpack.c.bf16 %v1734, %v1732
        %v1859 = vpack.c.bf16 %v1735, %v1733
        %v1860 = vpack.c.bf16 %v1738, %v1736
        %v1861 = vpack.c.bf16 %v1739, %v1737
        %v1862 = vpack.c.bf16 %v1742, %v1740
        %v1863 = vpack.c.bf16 %v1743, %v1741
        %v1864 = vpack.c.bf16 %v1746, %v1744
        %v1865 = vpack.c.bf16 %v1747, %v1745
        %v1866 = vpack.c.bf16 %v1750, %v1748
        %v1867 = vpack.c.bf16 %v1751, %v1749
        %v1868 = vpack.c.bf16 %v1754, %v1752
        %v1869 = vpack.c.bf16 %v1755, %v1753
        %v1870 = vpack.c.bf16 %v1758, %v1756
        %v1871 = vpack.c.bf16 %v1759, %v1757
        %v1872 = vpack.c.bf16 %v1762, %v1760
        %v1873 = vpack.c.bf16 %v1763, %v1761
        %v1874 = vpack.c.bf16 %v1766, %v1764
        %v1875 = vpack.c.bf16 %v1767, %v1765
        %v1876 = vpack.c.bf16 %v1770, %v1768
        %v1877 = vpack.c.bf16 %v1771, %v1769
        %v1878 = vpack.c.bf16 %v1774, %v1772
        %v1879 = vpack.c.bf16 %v1775, %v1773
        %v1880 = vpack.c.bf16 %v1778, %v1776
        %v1881 = vpack.c.bf16 %v1779, %v1777
        %v1882 = vpack.c.bf16 %v1782, %v1780
        %v1883 = vpack.c.bf16 %v1783, %v1781
        %v1884 = vpack.c.bf16 %v1786, %v1784
        %v1885 = vpack.c.bf16 %v1787, %v1785
        %v1886 = vpack.c.bf16 %v1790, %v1788
        %v1887 = vpack.c.bf16 %v1791, %v1789
        %v1888 = vpack.c.bf16 %v1794, %v1792
        %v1889 = vpack.c.bf16 %v1795, %v1793
        %v1890 = vpack.c.bf16 %v1798, %v1796
        %v1891 = vpack.c.bf16 %v1799, %v1797
        %v1892 = vpack.c.bf16 %v1802, %v1800
        %v1893 = vpack.c.bf16 %v1803, %v1801
        %v1894 = vpack.c.bf16 %v1806, %v1804
        %v1895 = vpack.c.bf16 %v1807, %v1805
        %v1896 = vpack.c.bf16 %v1810, %v1808
        %v1897 = vpack.c.bf16 %v1811, %v1809
        %v1898 = vpack.c.bf16 %v1814, %v1812
        %v1899 = vpack.c.bf16 %v1815, %v1813
        %v1900 = vpack.c.bf16 %v1818, %v1816
        %v1901 = vpack.c.bf16 %v1819, %v1817
        %v1902 = vpack.c.bf16 %v1822, %v1820
        %v1903 = vpack.c.bf16 %v1823, %v1821
        %v1904 = vpack.c.bf16 %v1826, %v1824
        %v1905 = vpack.c.bf16 %v1827, %v1825
        %v1906 = vpack.c.bf16 %v1830, %v1828
        %v1907 = vpack.c.bf16 %v1831, %v1829
        %v1908 = vpack.c.bf16 %v1834, %v1832
        %v1909 = vpack.c.bf16 %v1835, %v1833
        %v1910 = vpack.c.bf16 %v1838, %v1836
        %v1911 = vpack.c.bf16 %v1839, %v1837
        %v1912 = vpack.c.bf16 %v1842, %v1840
        %v1913 = vpack.c.bf16 %v1843, %v1841
        %v1914 = vpack.c.bf16 %v1846, %v1844
        %v1915 = vpack.c.bf16 %v1847, %v1845
        %v1916 = vpack.c.bf16 %v1850, %v1848
        %v1917 = vpack.c.bf16 %v1851, %v1849
        %v1918 = vpack.c.bf16 %v1854, %v1852
        %v1919 = vpack.c.bf16 %v1855, %v1853
        %v1920 = vld [vmem:[#allocation7] sm:$0xf]
        %v1921 = vld [vmem:[#allocation7 + $0x4] sm:$0xf]
        %v1922 = vld [vmem:[#allocation7 + $0x8] sm:$0xf]
        %v1923 = vld [vmem:[#allocation7 + $0xc] sm:$0xf]
        %v1924 = vld [vmem:[#allocation7 + $0x10] sm:$0xf]
        %v1925 = vld [vmem:[#allocation7 + $0x14] sm:$0xf]
        %v1926 = vld [vmem:[#allocation7 + $0x18] sm:$0xf]
        %v1927 = vld [vmem:[#allocation7 + $0x1c] sm:$0xf]
        %v1928 = vld [vmem:[#allocation7 + $0x20] sm:$0xf]
        %v1929 = vld [vmem:[#allocation7 + $0x24] sm:$0xf]
        %v1930 = vld [vmem:[#allocation7 + $0x28] sm:$0xf]
        %v1931 = vld [vmem:[#allocation7 + $0x2c] sm:$0xf]
        %v1932 = vld [vmem:[#allocation7 + $0x30] sm:$0xf]
        %v1933 = vld [vmem:[#allocation7 + $0x34] sm:$0xf]
        %v1934 = vld [vmem:[#allocation7 + $0x38] sm:$0xf]
        %v1935 = vld [vmem:[#allocation7 + $0x3c] sm:$0xf]
        %v1936 = vld [vmem:[#allocation7 + $0x40] sm:$0xf]
        %v1937 = vld [vmem:[#allocation7 + $0x44] sm:$0xf]
        %v1938 = vld [vmem:[#allocation7 + $0x48] sm:$0xf]
        %v1939 = vld [vmem:[#allocation7 + $0x4c] sm:$0xf]
        %v1940 = vld [vmem:[#allocation7 + $0x50] sm:$0xf]
        %v1941 = vld [vmem:[#allocation7 + $0x54] sm:$0xf]
        %v1942 = vld [vmem:[#allocation7 + $0x58] sm:$0xf]
        %v1943 = vld [vmem:[#allocation7 + $0x5c] sm:$0xf]
        %v1944 = vld [vmem:[#allocation7 + $0x60] sm:$0xf]
        %v1945 = vld [vmem:[#allocation7 + $0x64] sm:$0xf]
        %v1946 = vld [vmem:[#allocation7 + $0x68] sm:$0xf]
        %v1947 = vld [vmem:[#allocation7 + $0x6c] sm:$0xf]
        %v1948 = vld [vmem:[#allocation7 + $0x70] sm:$0xf]
        %v1949 = vld [vmem:[#allocation7 + $0x74] sm:$0xf]
        %v1950 = vld [vmem:[#allocation7 + $0x78] sm:$0xf]
        %v1951 = vld [vmem:[#allocation7 + $0x7c] sm:$0xf]
        %v1952 = vld [vmem:[%s4] sm:$0x1]
        %v1954 = vlaneseq
        %v1955 = vshrl.u32 %v1954, 7
        %v1956 = vsub.s32 0, %v1955
        %v1957 = vrot.slane %v1952, %v1956
        %v1991 = vunpack.c.l.b16 %v1920
        %v1992 = vunpack.c.l.b16 %v1921
        %v1993 = vunpack.c.l.b16 %v1922
        %v1994 = vunpack.c.l.b16 %v1923
        %v1995 = vunpack.c.l.b16 %v1924
        %v1996 = vunpack.c.l.b16 %v1925
        %v1997 = vunpack.c.l.b16 %v1926
        %v1998 = vunpack.c.l.b16 %v1927
        %v1999 = vunpack.c.l.b16 %v1928
        %v2000 = vunpack.c.l.b16 %v1929
        %v2001 = vunpack.c.l.b16 %v1930
        %v2002 = vunpack.c.l.b16 %v1931
        %v2003 = vunpack.c.l.b16 %v1932
        %v2004 = vunpack.c.l.b16 %v1933
        %v2005 = vunpack.c.l.b16 %v1934
        %v2006 = vunpack.c.l.b16 %v1935
        %v2007 = vunpack.c.l.b16 %v1936
        %v2008 = vunpack.c.l.b16 %v1937
        %v2009 = vunpack.c.l.b16 %v1938
        %v2010 = vunpack.c.l.b16 %v1939
        %v2011 = vunpack.c.l.b16 %v1940
        %v2012 = vunpack.c.l.b16 %v1941
        %v2013 = vunpack.c.l.b16 %v1942
        %v2014 = vunpack.c.l.b16 %v1943
        %v2015 = vunpack.c.l.b16 %v1944
        %v2016 = vunpack.c.l.b16 %v1945
        %v2017 = vunpack.c.l.b16 %v1946
        %v2018 = vunpack.c.l.b16 %v1947
        %v2019 = vunpack.c.l.b16 %v1948
        %v2020 = vunpack.c.l.b16 %v1949
        %v2021 = vunpack.c.l.b16 %v1950
        %v2022 = vunpack.c.l.b16 %v1951
        %v2023 = vpack.c.b16 %v1992, %v1991
        %v2024 = vpack.c.b16 %v1994, %v1993
        %v2025 = vpack.c.b16 %v1996, %v1995
        %v2026 = vpack.c.b16 %v1998, %v1997
        %v2027 = vpack.c.b16 %v2000, %v1999
        %v2028 = vpack.c.b16 %v2002, %v2001
        %v2029 = vpack.c.b16 %v2004, %v2003
        %v2030 = vpack.c.b16 %v2006, %v2005
        %v2031 = vpack.c.b16 %v2008, %v2007
        %v2032 = vpack.c.b16 %v2010, %v2009
        %v2033 = vpack.c.b16 %v2012, %v2011
        %v2034 = vpack.c.b16 %v2014, %v2013
        %v2035 = vpack.c.b16 %v2016, %v2015
        %v2036 = vpack.c.b16 %v2018, %v2017
        %v2037 = vpack.c.b16 %v2020, %v2019
        %v2038 = vpack.c.b16 %v2022, %v2021
        %2055 = vmatprep.subr.bf16.mxu0 0
        %2056 = vmatpush1.bf16.msra.mxu0 %v2023
        %2057 = vmatprep.subr.bf16.mxu0 0
        %2058 = vmatpush1.bf16.msra.mxu0 %v2024
        %2059 = vmatprep.subr.bf16.mxu0 0
        %2060 = vmatpush1.bf16.msra.mxu0 %v2025
        %2061 = vmatprep.subr.bf16.mxu0 0
        %2062 = vmatpush1.bf16.msra.mxu0 %v2026
        %2063 = vmatprep.subr.bf16.mxu0 0
        %2064 = vmatpush1.bf16.msra.mxu0 %v2027
        %2065 = vmatprep.subr.bf16.mxu0 0
        %2066 = vmatpush1.bf16.msra.mxu0 %v2028
        %2067 = vmatprep.subr.bf16.mxu0 0
        %2068 = vmatpush1.bf16.msra.mxu0 %v2029
        %2069 = vmatprep.subr.bf16.mxu0 0
        %2070 = vmatpush1.bf16.msra.mxu0 %v2030
        %2071 = vmatprep.subr.bf16.mxu0 0
        %2072 = vmatpush1.bf16.msra.mxu0 %v2031
        %2073 = vmatprep.subr.bf16.mxu0 0
        %2074 = vmatpush1.bf16.msra.mxu0 %v2032
        %2075 = vmatprep.subr.bf16.mxu0 0
        %2076 = vmatpush1.bf16.msra.mxu0 %v2033
        %2077 = vmatprep.subr.bf16.mxu0 0
        %2078 = vmatpush1.bf16.msra.mxu0 %v2034
        %2079 = vmatprep.subr.bf16.mxu0 0
        %2080 = vmatpush1.bf16.msra.mxu0 %v2035
        %2081 = vmatprep.subr.bf16.mxu0 0
        %2082 = vmatpush1.bf16.msra.mxu0 %v2036
        %2083 = vmatprep.subr.bf16.mxu0 0
        %2084 = vmatpush1.bf16.msra.mxu0 %v2037
        %2085 = vmatprep.subr.bf16.mxu0 0
        %2086 = vmatpush1.bf16.msra.mxu0 %v2038
        %2087 = vmatprep.mubr.bf16.mxu0 %v1857
        %2088 = vmatmul.mubr.bf16.gmra.mrb[0].mxu0 %v1856
        %v2089 = vpop.f32.mrb[0].mxu0
        %v2090 = vadd.f32 %v1957, %v2089
        %v2091 = vpop.f32.mrb[0].mxu0
        %v2092 = vpop.f32.mrb[0].mxu0
        %v2093 = vadd.f32 %v1957, %v2092
        %v2094 = vpop.f32.mrb[0].mxu0
        %2095 = vmatprep.mubr.bf16.mxu0 %v1859
        %2096 = vmatmul.mubr.bf16.gmra.mrb[0].mxu0 %v1858
        %v2097 = vpop.f32.mrb[0].mxu0
        %v2098 = vadd.f32 %v1957, %v2097
        %v2099 = vpop.f32.mrb[0].mxu0
        %v2100 = vpop.f32.mrb[0].mxu0
        %v2101 = vadd.f32 %v1957, %v2100
        %v2102 = vpop.f32.mrb[0].mxu0
        %2103 = vmatprep.mubr.bf16.mxu0 %v1861
        %2104 = vmatmul.mubr.bf16.gmra.mrb[0].mxu0 %v1860
        %v2105 = vpop.f32.mrb[0].mxu0
        %v2106 = vadd.f32 %v1957, %v2105
        %v2107 = vpop.f32.mrb[0].mxu0
        %v2108 = vpop.f32.mrb[0].mxu0
        %v2109 = vadd.f32 %v1957, %v2108
        %v2110 = vpop.f32.mrb[0].mxu0
        %2111 = vmatprep.mubr.bf16.mxu0 %v1863
        %2112 = vmatmul.mubr.bf16.gmra.mrb[0].mxu0 %v1862
        %v2113 = vpop.f32.mrb[0].mxu0
        %v2114 = vadd.f32 %v1957, %v2113
        %v2115 = vpop.f32.mrb[0].mxu0
        %v2116 = vpop.f32.mrb[0].mxu0
        %v2117 = vadd.f32 %v1957, %v2116
        %v2118 = vpop.f32.mrb[0].mxu0
        %2119 = vmatprep.mubr.bf16.mxu0 %v1865
        %2120 = vmatmul.mubr.bf16.gmra.mrb[0].mxu0 %v1864
        %v2121 = vpop.f32.mrb[0].mxu0
        %v2122 = vadd.f32 %v1957, %v2121
        %v2123 = vpop.f32.mrb[0].mxu0
        %v2124 = vpop.f32.mrb[0].mxu0
        %v2125 = vadd.f32 %v1957, %v2124
        %v2126 = vpop.f32.mrb[0].mxu0
        %2127 = vmatprep.mubr.bf16.mxu0 %v1867
        %2128 = vmatmul.mubr.bf16.gmra.mrb[0].mxu0 %v1866
        %v2129 = vpop.f32.mrb[0].mxu0
        %v2130 = vadd.f32 %v1957, %v2129
        %v2131 = vpop.f32.mrb[0].mxu0
        %v2132 = vpop.f32.mrb[0].mxu0
        %v2133 = vadd.f32 %v1957, %v2132
        %v2134 = vpop.f32.mrb[0].mxu0
        %2135 = vmatprep.mubr.bf16.mxu0 %v1869
        %2136 = vmatmul.mubr.bf16.gmra.mrb[0].mxu0 %v1868
        %v2137 = vpop.f32.mrb[0].mxu0
        %v2138 = vadd.f32 %v1957, %v2137
        %v2139 = vpop.f32.mrb[0].mxu0
        %v2140 = vpop.f32.mrb[0].mxu0
        %v2141 = vadd.f32 %v1957, %v2140
        %v2142 = vpop.f32.mrb[0].mxu0
        %2143 = vmatprep.mubr.bf16.mxu0 %v1871
        %2144 = vmatmul.mubr.bf16.gmra.mrb[0].mxu0 %v1870
        %v2145 = vpop.f32.mrb[0].mxu0
        %v2146 = vadd.f32 %v1957, %v2145
        %v2147 = vpop.f32.mrb[0].mxu0
        %v2148 = vpop.f32.mrb[0].mxu0
        %v2149 = vadd.f32 %v1957, %v2148
        %v2150 = vpop.f32.mrb[0].mxu0
        %2151 = vmatprep.mubr.bf16.mxu0 %v1873
        %2152 = vmatmul.mubr.bf16.gmra.mrb[0].mxu0 %v1872
        %v2153 = vpop.f32.mrb[0].mxu0
        %v2154 = vadd.f32 %v1957, %v2153
        %v2155 = vpop.f32.mrb[0].mxu0
        %v2156 = vpop.f32.mrb[0].mxu0
        %v2157 = vadd.f32 %v1957, %v2156
        %v2158 = vpop.f32.mrb[0].mxu0
        %2159 = vmatprep.mubr.bf16.mxu0 %v1875
        %2160 = vmatmul.mubr.bf16.gmra.mrb[0].mxu0 %v1874
        %v2161 = vpop.f32.mrb[0].mxu0
        %v2162 = vadd.f32 %v1957, %v2161
        %v2163 = vpop.f32.mrb[0].mxu0
        %v2164 = vpop.f32.mrb[0].mxu0
        %v2165 = vadd.f32 %v1957, %v2164
        %v2166 = vpop.f32.mrb[0].mxu0
        %2167 = vmatprep.mubr.bf16.mxu0 %v1877
        %2168 = vmatmul.mubr.bf16.gmra.mrb[0].mxu0 %v1876
        %v2169 = vpop.f32.mrb[0].mxu0
        %v2170 = vadd.f32 %v1957, %v2169
        %v2171 = vpop.f32.mrb[0].mxu0
        %v2172 = vpop.f32.mrb[0].mxu0
        %v2173 = vadd.f32 %v1957, %v2172
        %v2174 = vpop.f32.mrb[0].mxu0
        %2175 = vmatprep.mubr.bf16.mxu0 %v1879
        %2176 = vmatmul.mubr.bf16.gmra.mrb[0].mxu0 %v1878
        %v2177 = vpop.f32.mrb[0].mxu0
        %v2178 = vadd.f32 %v1957, %v2177
        %v2179 = vpop.f32.mrb[0].mxu0
        %v2180 = vpop.f32.mrb[0].mxu0
        %v2181 = vadd.f32 %v1957, %v2180
        %v2182 = vpop.f32.mrb[0].mxu0
        %2183 = vmatprep.mubr.bf16.mxu0 %v1881
        %2184 = vmatmul.mubr.bf16.gmra.mrb[0].mxu0 %v1880
        %v2185 = vpop.f32.mrb[0].mxu0
        %v2186 = vadd.f32 %v1957, %v2185
        %v2187 = vpop.f32.mrb[0].mxu0
        %v2188 = vpop.f32.mrb[0].mxu0
        %v2189 = vadd.f32 %v1957, %v2188
        %v2190 = vpop.f32.mrb[0].mxu0
        %2191 = vmatprep.mubr.bf16.mxu0 %v1883
        %2192 = vmatmul.mubr.bf16.gmra.mrb[0].mxu0 %v1882
        %v2193 = vpop.f32.mrb[0].mxu0
        %v2194 = vadd.f32 %v1957, %v2193
        %v2195 = vpop.f32.mrb[0].mxu0
        %v2196 = vpop.f32.mrb[0].mxu0
        %v2197 = vadd.f32 %v1957, %v2196
        %v2198 = vpop.f32.mrb[0].mxu0
        %2199 = vmatprep.mubr.bf16.mxu0 %v1885
        %2200 = vmatmul.mubr.bf16.gmra.mrb[0].mxu0 %v1884
        %v2201 = vpop.f32.mrb[0].mxu0
        %v2202 = vadd.f32 %v1957, %v2201
        %v2203 = vpop.f32.mrb[0].mxu0
        %v2204 = vpop.f32.mrb[0].mxu0
        %v2205 = vadd.f32 %v1957, %v2204
        %v2206 = vpop.f32.mrb[0].mxu0
        %2207 = vmatprep.mubr.bf16.mxu0 %v1887
        %2208 = vmatmul.mubr.bf16.gmra.mrb[0].mxu0 %v1886
        %v2209 = vpop.f32.mrb[0].mxu0
        %v2210 = vadd.f32 %v1957, %v2209
        %v2211 = vpop.f32.mrb[0].mxu0
        %v2212 = vpop.f32.mrb[0].mxu0
        %v2213 = vadd.f32 %v1957, %v2212
        %v2214 = vpop.f32.mrb[0].mxu0
        %2215 = vmatprep.mubr.bf16.mxu0 %v1889
        %2216 = vmatmul.mubr.bf16.gmra.mrb[0].mxu0 %v1888
        %v2217 = vpop.f32.mrb[0].mxu0
        %v2218 = vadd.f32 %v1957, %v2217
        %v2219 = vpop.f32.mrb[0].mxu0
        %v2220 = vpop.f32.mrb[0].mxu0
        %v2221 = vadd.f32 %v1957, %v2220
        %v2222 = vpop.f32.mrb[0].mxu0
        %2223 = vmatprep.mubr.bf16.mxu0 %v1891
        %2224 = vmatmul.mubr.bf16.gmra.mrb[0].mxu0 %v1890
        %v2225 = vpop.f32.mrb[0].mxu0
        %v2226 = vadd.f32 %v1957, %v2225
        %v2227 = vpop.f32.mrb[0].mxu0
        %v2228 = vpop.f32.mrb[0].mxu0
        %v2229 = vadd.f32 %v1957, %v2228
        %v2230 = vpop.f32.mrb[0].mxu0
        %2231 = vmatprep.mubr.bf16.mxu0 %v1893
        %2232 = vmatmul.mubr.bf16.gmra.mrb[0].mxu0 %v1892
        %v2233 = vpop.f32.mrb[0].mxu0
        %v2234 = vadd.f32 %v1957, %v2233
        %v2235 = vpop.f32.mrb[0].mxu0
        %v2236 = vpop.f32.mrb[0].mxu0
        %v2237 = vadd.f32 %v1957, %v2236
        %v2238 = vpop.f32.mrb[0].mxu0
        %2239 = vmatprep.mubr.bf16.mxu0 %v1895
        %2240 = vmatmul.mubr.bf16.gmra.mrb[0].mxu0 %v1894
        %v2241 = vpop.f32.mrb[0].mxu0
        %v2242 = vadd.f32 %v1957, %v2241
        %v2243 = vpop.f32.mrb[0].mxu0
        %v2244 = vpop.f32.mrb[0].mxu0
        %v2245 = vadd.f32 %v1957, %v2244
        %v2246 = vpop.f32.mrb[0].mxu0
        %2247 = vmatprep.mubr.bf16.mxu0 %v1897
        %2248 = vmatmul.mubr.bf16.gmra.mrb[0].mxu0 %v1896
        %v2249 = vpop.f32.mrb[0].mxu0
        %v2250 = vadd.f32 %v1957, %v2249
        %v2251 = vpop.f32.mrb[0].mxu0
        %v2252 = vpop.f32.mrb[0].mxu0
        %v2253 = vadd.f32 %v1957, %v2252
        %v2254 = vpop.f32.mrb[0].mxu0
        %2255 = vmatprep.mubr.bf16.mxu0 %v1899
        %2256 = vmatmul.mubr.bf16.gmra.mrb[0].mxu0 %v1898
        %v2257 = vpop.f32.mrb[0].mxu0
        %v2258 = vadd.f32 %v1957, %v2257
        %v2259 = vpop.f32.mrb[0].mxu0
        %v2260 = vpop.f32.mrb[0].mxu0
        %v2261 = vadd.f32 %v1957, %v2260
        %v2262 = vpop.f32.mrb[0].mxu0
        %2263 = vmatprep.mubr.bf16.mxu0 %v1901
        %2264 = vmatmul.mubr.bf16.gmra.mrb[0].mxu0 %v1900
        %v2265 = vpop.f32.mrb[0].mxu0
        %v2266 = vadd.f32 %v1957, %v2265
        %v2267 = vpop.f32.mrb[0].mxu0
        %v2268 = vpop.f32.mrb[0].mxu0
        %v2269 = vadd.f32 %v1957, %v2268
        %v2270 = vpop.f32.mrb[0].mxu0
        %2271 = vmatprep.mubr.bf16.mxu0 %v1903
        %2272 = vmatmul.mubr.bf16.gmra.mrb[0].mxu0 %v1902
        %v2273 = vpop.f32.mrb[0].mxu0
        %v2274 = vadd.f32 %v1957, %v2273
        %v2275 = vpop.f32.mrb[0].mxu0
        %v2276 = vpop.f32.mrb[0].mxu0
        %v2277 = vadd.f32 %v1957, %v2276
        %v2278 = vpop.f32.mrb[0].mxu0
        %2279 = vmatprep.mubr.bf16.mxu0 %v1905
        %2280 = vmatmul.mubr.bf16.gmra.mrb[0].mxu0 %v1904
        %v2281 = vpop.f32.mrb[0].mxu0
        %v2282 = vadd.f32 %v1957, %v2281
        %v2283 = vpop.f32.mrb[0].mxu0
        %v2284 = vpop.f32.mrb[0].mxu0
        %v2285 = vadd.f32 %v1957, %v2284
        %v2286 = vpop.f32.mrb[0].mxu0
        %2287 = vmatprep.mubr.bf16.mxu0 %v1907
        %2288 = vmatmul.mubr.bf16.gmra.mrb[0].mxu0 %v1906
        %v2289 = vpop.f32.mrb[0].mxu0
        %v2290 = vadd.f32 %v1957, %v2289
        %v2291 = vpop.f32.mrb[0].mxu0
        %v2292 = vpop.f32.mrb[0].mxu0
        %v2293 = vadd.f32 %v1957, %v2292
        %v2294 = vpop.f32.mrb[0].mxu0
        %2295 = vmatprep.mubr.bf16.mxu0 %v1909
        %2296 = vmatmul.mubr.bf16.gmra.mrb[0].mxu0 %v1908
        %v2297 = vpop.f32.mrb[0].mxu0
        %v2298 = vadd.f32 %v1957, %v2297
        %v2299 = vpop.f32.mrb[0].mxu0
        %v2300 = vpop.f32.mrb[0].mxu0
        %v2301 = vadd.f32 %v1957, %v2300
        %v2302 = vpop.f32.mrb[0].mxu0
        %2303 = vmatprep.mubr.bf16.mxu0 %v1911
        %2304 = vmatmul.mubr.bf16.gmra.mrb[0].mxu0 %v1910
        %v2305 = vpop.f32.mrb[0].mxu0
        %v2306 = vadd.f32 %v1957, %v2305
        %v2307 = vpop.f32.mrb[0].mxu0
        %v2308 = vpop.f32.mrb[0].mxu0
        %v2309 = vadd.f32 %v1957, %v2308
        %v2310 = vpop.f32.mrb[0].mxu0
        %2311 = vmatprep.mubr.bf16.mxu0 %v1913
        %2312 = vmatmul.mubr.bf16.gmra.mrb[0].mxu0 %v1912
        %v2313 = vpop.f32.mrb[0].mxu0
        %v2314 = vadd.f32 %v1957, %v2313
        %v2315 = vpop.f32.mrb[0].mxu0
        %v2316 = vpop.f32.mrb[0].mxu0
        %v2317 = vadd.f32 %v1957, %v2316
        %v2318 = vpop.f32.mrb[0].mxu0
        %2319 = vmatprep.mubr.bf16.mxu0 %v1915
        %2320 = vmatmul.mubr.bf16.gmra.mrb[0].mxu0 %v1914
        %v2321 = vpop.f32.mrb[0].mxu0
        %v2322 = vadd.f32 %v1957, %v2321
        %v2323 = vpop.f32.mrb[0].mxu0
        %v2324 = vpop.f32.mrb[0].mxu0
        %v2325 = vadd.f32 %v1957, %v2324
        %v2326 = vpop.f32.mrb[0].mxu0
        %2327 = vmatprep.mubr.bf16.mxu0 %v1917
        %2328 = vmatmul.mubr.bf16.gmra.mrb[0].mxu0 %v1916
        %v2329 = vpop.f32.mrb[0].mxu0
        %v2330 = vadd.f32 %v1957, %v2329
        %v2331 = vpop.f32.mrb[0].mxu0
        %v2332 = vpop.f32.mrb[0].mxu0
        %v2333 = vadd.f32 %v1957, %v2332
        %v2334 = vpop.f32.mrb[0].mxu0
        %2335 = vmatprep.mubr.bf16.mxu0 %v1919
        %2336 = vmatmul.mubr.bf16.gmra.mrb[0].mxu0 %v1918
        %v2337 = vpop.f32.mrb[0].mxu0
        %v2338 = vadd.f32 %v1957, %v2337
        %v2339 = vpop.f32.mrb[0].mxu0
        %v2340 = vpop.f32.mrb[0].mxu0
        %v2341 = vadd.f32 %v1957, %v2340
        %v2342 = vpop.f32.mrb[0].mxu0
        %2343 = vdwg.mxu0
        %2344 = vst [vmem:[%s271] sm:$0xff] %v2090
        %2345 = vst [vmem:[%s271 + $0x8] sm:$0xff] %v2093
        %2346 = vst [vmem:[%s271 + $0x10] sm:$0xff] %v2098
        %2347 = vst [vmem:[%s271 + $0x18] sm:$0xff] %v2101
        %2348 = vst [vmem:[%s271 + $0x20] sm:$0xff] %v2106
        %2349 = vst [vmem:[%s271 + $0x28] sm:$0xff] %v2109
        %2350 = vst [vmem:[%s271 + $0x30] sm:$0xff] %v2114
        %2351 = vst [vmem:[%s271 + $0x38] sm:$0xff] %v2117
        %2352 = vst [vmem:[%s271 + $0x40] sm:$0xff] %v2122
        %2353 = vst [vmem:[%s271 + $0x48] sm:$0xff] %v2125
        %2354 = vst [vmem:[%s271 + $0x50] sm:$0xff] %v2130
        %2355 = vst [vmem:[%s271 + $0x58] sm:$0xff] %v2133
        %2356 = vst [vmem:[%s271 + $0x60] sm:$0xff] %v2138
        %2357 = vst [vmem:[%s271 + $0x68] sm:$0xff] %v2141
        %2358 = vst [vmem:[%s271 + $0x70] sm:$0xff] %v2146
        %2359 = vst [vmem:[%s271 + $0x78] sm:$0xff] %v2149
        %2360 = vst [vmem:[%s271 + $0x80] sm:$0xff] %v2154
        %2361 = vst [vmem:[%s271 + $0x88] sm:$0xff] %v2157
        %2362 = vst [vmem:[%s271 + $0x90] sm:$0xff] %v2162
        %2363 = vst [vmem:[%s271 + $0x98] sm:$0xff] %v2165
        %2364 = vst [vmem:[%s271 + $0xa0] sm:$0xff] %v2170
        %2365 = vst [vmem:[%s271 + $0xa8] sm:$0xff] %v2173
        %2366 = vst [vmem:[%s271 + $0xb0] sm:$0xff] %v2178
        %2367 = vst [vmem:[%s271 + $0xb8] sm:$0xff] %v2181
        %2368 = vst [vmem:[%s271 + $0xc0] sm:$0xff] %v2186
        %2369 = vst [vmem:[%s271 + $0xc8] sm:$0xff] %v2189
        %2370 = vst [vmem:[%s271 + $0xd0] sm:$0xff] %v2194
        %2371 = vst [vmem:[%s271 + $0xd8] sm:$0xff] %v2197
        %2372 = vst [vmem:[%s271 + $0xe0] sm:$0xff] %v2202
        %2373 = vst [vmem:[%s271 + $0xe8] sm:$0xff] %v2205
        %2374 = vst [vmem:[%s271 + $0xf0] sm:$0xff] %v2210
        %2375 = vst [vmem:[%s271 + $0xf8] sm:$0xff] %v2213
        %2376 = vst [vmem:[%s271 + $0x100] sm:$0xff] %v2218
        %2377 = vst [vmem:[%s271 + $0x108] sm:$0xff] %v2221
        %2378 = vst [vmem:[%s271 + $0x110] sm:$0xff] %v2226
        %2379 = vst [vmem:[%s271 + $0x118] sm:$0xff] %v2229
        %2380 = vst [vmem:[%s271 + $0x120] sm:$0xff] %v2234
        %2381 = vst [vmem:[%s271 + $0x128] sm:$0xff] %v2237
        %2382 = vst [vmem:[%s271 + $0x130] sm:$0xff] %v2242
        %2383 = vst [vmem:[%s271 + $0x138] sm:$0xff] %v2245
        %2384 = vst [vmem:[%s271 + $0x140] sm:$0xff] %v2250
        %2385 = vst [vmem:[%s271 + $0x148] sm:$0xff] %v2253
        %2386 = vst [vmem:[%s271 + $0x150] sm:$0xff] %v2258
        %2387 = vst [vmem:[%s271 + $0x158] sm:$0xff] %v2261
        %2388 = vst [vmem:[%s271 + $0x160] sm:$0xff] %v2266
        %2389 = vst [vmem:[%s271 + $0x168] sm:$0xff] %v2269
        %2390 = vst [vmem:[%s271 + $0x170] sm:$0xff] %v2274
        %2391 = vst [vmem:[%s271 + $0x178] sm:$0xff] %v2277
        %2392 = vst [vmem:[%s271 + $0x180] sm:$0xff] %v2282
        %2393 = vst [vmem:[%s271 + $0x188] sm:$0xff] %v2285
        %2394 = vst [vmem:[%s271 + $0x190] sm:$0xff] %v2290
        %2395 = vst [vmem:[%s271 + $0x198] sm:$0xff] %v2293
        %2396 = vst [vmem:[%s271 + $0x1a0] sm:$0xff] %v2298
        %2397 = vst [vmem:[%s271 + $0x1a8] sm:$0xff] %v2301
        %2398 = vst [vmem:[%s271 + $0x1b0] sm:$0xff] %v2306
        %2399 = vst [vmem:[%s271 + $0x1b8] sm:$0xff] %v2309
        %2400 = vst [vmem:[%s271 + $0x1c0] sm:$0xff] %v2314
        %2401 = vst [vmem:[%s271 + $0x1c8] sm:$0xff] %v2317
        %2402 = vst [vmem:[%s271 + $0x1d0] sm:$0xff] %v2322
        %2403 = vst [vmem:[%s271 + $0x1d8] sm:$0xff] %v2325
        %2404 = vst [vmem:[%s271 + $0x1e0] sm:$0xff] %v2330
        %2405 = vst [vmem:[%s271 + $0x1e8] sm:$0xff] %v2333
        %2406 = vst [vmem:[%s271 + $0x1f0] sm:$0xff] %v2338
        %2407 = vst [vmem:[%s271 + $0x1f8] sm:$0xff] %v2341
        %s2408 = sand.u32 %s141, 1
        %s2409 = scalar_lea.sflag [#allocation4], %s2408
        %s2410 = sand.u32 %s141, 1
        %s2411 = smul.addr %s2410, 512
        %s2412 = scalar_lea.vmem [#allocation8], %s2411
        // Predicated region
        $region53: #{tpu_custom_call.1} parent=39 // pred_check
          %p2413 = pneg %p151
        $region54: #{tpu_custom_call.1} parent=39 // pred_check_branch
          %2415 = sbr.rel (%p2413) target = $region56
        $region55: #{tpu_custom_call.1} parent=39 // pred_region
          %s2416 = smul.u32 64, %s23
          %s2418 = ssub.s32 8192, 8192
          %2419 = vsyncadd %s2409, %s2418
          %s2420 = smul.addr %s2416, 128
          %s2421 = scalar_lea.hbm %s5, %s2420
          %s2422 = sshll.u32 %s2412, 4
          %s2423 = int_to_ptr.vmem [resolvable:$true] %s2422
          %2428 = dma.vmem_to_hbm [thread:$0]  %s2423, 8192, %s2421, %s2409, 128, 128, 8
        $region56: #{tpu_custom_call.1} parent=39 // pred_fallthru
          _
      $region40: #{tpu_custom_call.1} parent=5 // pred_fallthru
        _
      %p2429 = scmp.le.s32.totalorder 2, %s18
      // Predicated region
      $region57: #{tpu_custom_call.1} parent=5 // pred_check
        %p2430 = pneg %p2429
      $region58: #{tpu_custom_call.1} parent=5 // pred_check_branch
        %2432 = sbr.rel (%p2430) target = $region60
      $region59: #{tpu_custom_call.1} parent=5 // pred_region
        %s2433 = ssub.s32 %s18, 2
        // Predicated region
        $region61: #{tpu_custom_call.1} parent=59 // pred_check
          %p2434 = pneg %p157
        $region62: #{tpu_custom_call.1} parent=59 // pred_check_branch
          %2436 = sbr.rel (%p2434) target = $region64
        $region63: #{tpu_custom_call.1} parent=59 // pred_region
          %s2437 = sand.u32 %s142, 1
          %s2438 = scalar_lea.sflag [#allocation4], %s2437
          %s2439 = sand.u32 %s142, 1
          %s2440 = smul.addr %s2439, 512
          %s2441 = scalar_lea.vmem [#allocation8], %s2440
          %2442 = dma.done %s2438, 8192
        $region64: #{tpu_custom_call.1} parent=59 // pred_fallthru
          _
      $region60: #{tpu_custom_call.1} parent=5 // pred_fallthru
        _
    $region6: #{tpu_custom_call.1} parent=1 // loop_footer
      %s22 = sadd.s32 1, %s18
    $region7: #{tpu_custom_call.1} parent=1 // loop_footer_branch
      %17 = sbr.rel target = $region3
    $region8: #{tpu_custom_call.1} parent=1 // loop_exit
      _
    %2443 = vsyncpa [#allocation3], 1
    %s2444 = scalar_lea.sflag [#allocation3], 1
    %2445 = vsyncpa %s2444, 1
    %2446 = vsyncpa [#allocation6], 1
    %2447 = vsyncpa [#allocation4], 1
    %s2448 = scalar_lea.sflag [#allocation4], 1
    %2449 = vsyncpa %s2448, 1

// kernel: tpu_custom_call.1
$region0: #{tpu_custom_call.1}
  #allocation0 [shape = 'u32[]', space=smem, size = 0x4, offset = 0x4, fixed_abs, tag = 'smem constant byte address 0x4 - core index']
  #allocation1 [shape = 'u32[144,128]{1,0:T(1,128)}', space=vmem, size = 0x12000, scoped, tag = 'internal scratch']
  %s0 = inlined_call_operand.hbm [shape: f32[1024,128], index: 0, kind: input, shape index: {}]
  %s1 = inlined_call_operand.hbm [shape: bf16[128,256], index: 1, kind: input, shape index: {}]
  %s2 = inlined_call_operand.vmem [shape: f32[1,256], index: 2, kind: input, shape index: {}]
  %s3 = inlined_call_operand.hbm [shape: bf16[256,128], index: 3, kind: input, shape index: {}]
  %s4 = inlined_call_operand.vmem [shape: f32[1,128], index: 4, kind: input, shape index: {}]
  %s5 = inlined_call_operand.hbm [shape: f32[1024,128], index: 5, kind: output, shape index: {}]
  %s6 = sld [smem:[#allocation0]]
  $region65: #{tpu_custom_call.1} parent=0
    _
  %s8 = ssub.s32 1, %s6
  %s9 = scalar_select 0, %s8, %s6
  $region1: #{tpu_custom_call.1} parent=0
    #allocation2 [shape = 'u8[524288]{0}', space=vmem, size = 0x80000, scoped, tag = 'input window, operand 0']
    #allocation3 [shape = 's32[2]{0}', space=sflag, size = 0x8, scoped, tag = 'scoped memory for tpu_custom_call.1']
    #allocation4 [shape = 's32[2]{0}', space=sflag, size = 0x8, scoped, tag = 'scoped memory for tpu_custom_call.1']
    #allocation5 [shape = 'u8[65536]{0}', space=vmem, size = 0x10000, scoped, tag = 'input window, operand 1, single buffered']
    #allocation6 [shape = 's32[1]{0}', space=sflag, size = 0x4, scoped, tag = 'scoped memory for tpu_custom_call.1']
    #allocation7 [shape = 'u8[65536]{0}', space=vmem, size = 0x10000, scoped, tag = 'input window, operand 3, single buffered']
    #allocation8 [shape = 'u8[524288]{0}', space=vmem, size = 0x80000, scoped, tag = 'output window, operand 0']
    %10 = vsyncpa [#allocation3], 0
    %s11 = scalar_lea.sflag [#allocation3], 1
    %12 = vsyncpa %s11, 0
    %13 = vsyncpa [#allocation6], 0
    %14 = vsyncpa [#allocation4], 0
    %s15 = scalar_lea.sflag [#allocation4], 1
    %16 = vsyncpa %s15, 0
    loop: start=0, step=1, limit=4
    $region2: #{tpu_custom_call.1} parent=1 // loop_pre_header
      _
    $region3: #{tpu_custom_call.1} parent=1 // loop_header
      %s18 = sphi 0, %s22
      %p19 = scmp.ge.s32.totalorder %s18, 4
      %s28 = sphi 0, %s30
      %s31 = sphi 0, %s28
      %s32 = sphi 0, %s31
      %s48 = sphi 0, %s32
      %s52 = sphi 0, %s52
      %s54 = sphi 0, %s52
      %s55 = sphi 0, %s54
      %s69 = sphi 0, %s55
      %s73 = sphi 0, %s73
      %s75 = sphi 0, %s73
      %s76 = sphi 0, %s75
      %s90 = sphi 0, %s76
      %s94 = sphi 0, %s94
      %s96 = sphi 0, %s94
      %s97 = sphi 0, %s96
      %s111 = sphi 0, %s97
      %s115 = sphi 0, %s115
      %s117 = sphi 0, %s115
      %s118 = sphi 0, %s117
      %s132 = sphi 0, %s118
      %s138 = sphi 0, %s140
      %s141 = sphi 0, %s138
      %s142 = sphi 0, %s141
      %s158 = sphi 0, %s142
    $region4: #{tpu_custom_call.1} parent=1 // loop_header_branch
      %21 = sbr.rel (%p19) target = $region8
    $region5: #{tpu_custom_call.1} parent=1 // loop_body
      %s23 = ssub.s32 %s18, 1
      %s24 = ssub.s32 %s18, 2
      %s25 = sadd.s32 %s18, 1
      %s26 = ssub.s32 %s18, %s25
      %p27 = scmp.eq.s32.totalorder %s26, 0
      %s29 = sadd.s32 %s28, 1
      %s30 = scalar_select %p27, %s28, %s29
      %p33 = pneg %p27
      %p34 = scmp.eq.s32.totalorder %s18, 1
      %p35 = por %p33, %p34
      %p36 = scmp.ne.s32.totalorder %s28, %s31
      %p37 = scmp.eq.s32.totalorder %s18, 0
      %p38 = por %p36, %p37
      %p39 = scmp.ne.s32.totalorder %s28, %s31
      %p40 = scmp.eq.s32.totalorder %s23, 1
      %p41 = por %p39, %p40
      %p42 = scmp.ne.s32.totalorder %s31, %s32
      %p43 = scmp.eq.s32.totalorder %s23, 0
      %p44 = por %p42, %p43
      %p45 = scmp.ne.s32.totalorder %s31, %s32
      %p46 = scmp.eq.s32.totalorder %s24, 1
      %p47 = por %p45, %p46
      %p49 = scmp.ne.s32.totalorder %s32, %s48
      %p50 = scmp.eq.s32.totalorder %s24, 0
      %p51 = por %p49, %p50
      %s53 = sadd.s32 %s52, 1
      %p56 = scmp.eq.s32.totalorder %s18, 1
      %p57 = scmp.ne.s32.totalorder %s52, %s54
      %p58 = scmp.eq.s32.totalorder %s18, 0
      %p59 = por %p57, %p58
      %p60 = scmp.ne.s32.totalorder %s52, %s54
      %p61 = scmp.eq.s32.totalorder %s23, 1
      %p62 = por %p60, %p61
      %p63 = scmp.ne.s32.totalorder %s54, %s55
      %p64 = scmp.eq.s32.totalorder %s23, 0
      %p65 = por %p63, %p64
      %p66 = scmp.ne.s32.totalorder %s54, %s55
      %p67 = scmp.eq.s32.totalorder %s24, 1
      %p68 = por %p66, %p67
      %p70 = scmp.ne.s32.totalorder %s55, %s69
      %p71 = scmp.eq.s32.totalorder %s24, 0
      %p72 = por %p70, %p71
      %s74 = sadd.s32 %s73, 1
      %p77 = scmp.eq.s32.totalorder %s18, 1
      %p78 = scmp.ne.s32.totalorder %s73, %s75
      %p79 = scmp.eq.s32.totalorder %s18, 0
      %p80 = por %p78, %p79
      %p81 = scmp.ne.s32.totalorder %s73, %s75
      %p82 = scmp.eq.s32.totalorder %s23, 1
      %p83 = por %p81, %p82
      %p84 = scmp.ne.s32.totalorder %s75, %s76
      %p85 = scmp.eq.s32.totalorder %s23, 0
      %p86 = por %p84, %p85
      %p87 = scmp.ne.s32.totalorder %s75, %s76
      %p88 = scmp.eq.s32.totalorder %s24, 1
      %p89 = por %p87, %p88
      %p91 = scmp.ne.s32.totalorder %s76, %s90
      %p92 = scmp.eq.s32.totalorder %s24, 0
      %p93 = por %p91, %p92
      %s95 = sadd.s32 %s94, 1
      %p98 = scmp.eq.s32.totalorder %s18, 1
      %p99 = scmp.ne.s32.totalorder %s94, %s96
      %p100 = scmp.eq.s32.totalorder %s18, 0
      %p101 = por %p99, %p100
      %p102 = scmp.ne.s32.totalorder %s94, %s96
      %p103 = scmp.eq.s32.totalorder %s23, 1
      %p104 = por %p102, %p103
      %p105 = scmp.ne.s32.totalorder %s96, %s97
      %p106 = scmp.eq.s32.totalorder %s23, 0
      %p107 = por %p105, %p106
      %p108 = scmp.ne.s32.totalorder %s96, %s97
      %p109 = scmp.eq.s32.totalorder %s24, 1
      %p110 = por %p108, %p109
      %p112 = scmp.ne.s32.totalorder %s97, %s111
      %p113 = scmp.eq.s32.totalorder %s24, 0
      %p114 = por %p112, %p113
      %s116 = sadd.s32 %s115, 1
      %p119 = scmp.eq.s32.totalorder %s18, 1
      %p120 = scmp.ne.s32.totalorder %s115, %s117
      %p121 = scmp.eq.s32.totalorder %s18, 0
      %p122 = por %p120, %p121
      %p123 = scmp.ne.s32.totalorder %s115, %s117
      %p124 = scmp.eq.s32.totalorder %s23, 1
      %p125 = por %p123, %p124
      %p126 = scmp.ne.s32.totalorder %s117, %s118
      %p127 = scmp.eq.s32.totalorder %s23, 0
      %p128 = por %p126, %p127
      %p129 = scmp.ne.s32.totalorder %s117, %s118
      %p130 = scmp.eq.s32.totalorder %s24, 1
      %p131 = por %p129, %p130
      %p133 = scmp.ne.s32.totalorder %s118, %s132
      %p134 = scmp.eq.s32.totalorder %s24, 0
      %p135 = por %p133, %p134
      %s136 = ssub.s32 %s18, %s25
      %p137 = scmp.eq.s32.totalorder %s136, 0
      %s139 = sadd.s32 %s138, 1
      %s140 = scalar_select %p137, %s138, %s139
      %p143 = pneg %p137
      %p144 = scmp.eq.s32.totalorder %s18, 1
      %p145 = por %p143, %p144
      %p146 = scmp.ne.s32.totalorder %s138, %s141
      %p147 = scmp.eq.s32.totalorder %s18, 0
      %p148 = por %p146, %p147
      %p149 = scmp.ne.s32.totalorder %s138, %s141
      %p150 = scmp.eq.s32.totalorder %s23, 1
      %p151 = por %p149, %p150
      %p152 = scmp.ne.s32.totalorder %s141, %s142
      %p153 = scmp.eq.s32.totalorder %s23, 0
      %p154 = por %p152, %p153
      %p155 = scmp.ne.s32.totalorder %s141, %s142
      %p156 = scmp.eq.s32.totalorder %s24, 1
      %p157 = por %p155, %p156
      %p159 = scmp.ne.s32.totalorder %s142, %s158
      %p160 = scmp.eq.s32.totalorder %s24, 0
      %p161 = por %p159, %p160
      %p162 = scmp.le.s32.totalorder 1, %s18
      %p163 = scmp.lt.s32.totalorder %s18, 3
      %p164 = pnand %p162, %p163
      %p165 = pneg %p164
      // Predicated region
      $region9: #{tpu_custom_call.1} parent=5 // pred_check
        _
      $region10: #{tpu_custom_call.1} parent=5 // pred_check_branch
        %167 = sbr.rel (%p164) target = $region12
      $region11: #{tpu_custom_call.1} parent=5 // pred_region
        %s168 = ssub.s32 %s18, 1
        // Predicated region
        $region13: #{tpu_custom_call.1} parent=11 // pred_check
          %p169 = pneg %p65
        $region14: #{tpu_custom_call.1} parent=11 // pred_check_branch
          %171 = sbr.rel (%p169) target = $region16
        $region15: #{tpu_custom_call.1} parent=11 // pred_region
          %s173 = ssub.s32 2048, 2048
          %174 = vsyncadd [#allocation6], %s173
          %s175 = sshll.u32 [#allocation5], 4
          %s176 = int_to_ptr.vmem [resolvable:$true] %s175
          %181 = dma.hbm_to_vmem [thread:$0]  %s1, 2048, %s176, [#allocation6], 128, 128, 8
        $region16: #{tpu_custom_call.1} parent=11 // pred_fallthru
          _
        // Predicated region
        $region17: #{tpu_custom_call.1} parent=11 // pred_check
          %p182 = pneg %p86
        $region18: #{tpu_custom_call.1} parent=11 // pred_check_branch
          %184 = sbr.rel (%p182) target = $region20
        $region19: #{tpu_custom_call.1} parent=11 // pred_region
          _
        $region20: #{tpu_custom_call.1} parent=11 // pred_fallthru
          _
        // Predicated region
        $region21: #{tpu_custom_call.1} parent=11 // pred_check
          %p185 = pneg %p107
        $region22: #{tpu_custom_call.1} parent=11 // pred_check_branch
          %187 = sbr.rel (%p185) target = $region24
        $region23: #{tpu_custom_call.1} parent=11 // pred_region
          %s189 = ssub.s32 2048, 2048
          %190 = vsyncadd [#allocation6], %s189
          %s191 = sshll.u32 [#allocation7], 4
          %s192 = int_to_ptr.vmem [resolvable:$true] %s191
          %197 = dma.hbm_to_vmem [thread:$0]  %s3, 2048, %s192, [#allocation6], 64, 64, 4
        $region24: #{tpu_custom_call.1} parent=11 // pred_fallthru
          _
        // Predicated region
        $region25: #{tpu_custom_call.1} parent=11 // pred_check
          %p198 = pneg %p128
        $region26: #{tpu_custom_call.1} parent=11 // pred_check_branch
          %200 = sbr.rel (%p198) target = $region28
        $region27: #{tpu_custom_call.1} parent=11 // pred_region
          _
        $region28: #{tpu_custom_call.1} parent=11 // pred_fallthru
          _
      $region12: #{tpu_custom_call.1} parent=5 // pred_fallthru
        _
      %p201 = scmp.lt.s32.totalorder %s18, 2
      // Predicated region
      $region29: #{tpu_custom_call.1} parent=5 // pred_check
        %p202 = pneg %p201
      $region30: #{tpu_custom_call.1} parent=5 // pred_check_branch
        %204 = sbr.rel (%p202) target = $region32
      $region31: #{tpu_custom_call.1} parent=5 // pred_region
        // Predicated region
        $region33: #{tpu_custom_call.1} parent=31 // pred_check
          %p205 = pneg %p38
        $region34: #{tpu_custom_call.1} parent=31 // pred_check_branch
          %207 = sbr.rel (%p205) target = $region36
        $region35: #{tpu_custom_call.1} parent=31 // pred_region
          %s208 = sand.u32 %s28, 1
          %s209 = scalar_lea.sflag [#allocation3], %s208
          %s210 = sand.u32 %s28, 1
          %s211 = smul.addr %s210, 512
          %s212 = scalar_lea.vmem [#allocation2], %s211
          %s213 = smul.u32 64, %s18
          %s215 = ssub.s32 8192, 8192
          %216 = vsyncadd %s209, %s215
          %s217 = smul.addr %s213, 128
          %s218 = scalar_lea.hbm %s0, %s217
          %s219 = sshll.u32 %s212, 4
          %s220 = int_to_ptr.vmem [resolvable:$true] %s219
          %225 = dma.hbm_to_vmem [thread:$0]  %s218, 8192, %s220, %s209, 128, 128, 8
        $region36: #{tpu_custom_call.1} parent=31 // pred_fallthru
          _
      $region32: #{tpu_custom_call.1} parent=5 // pred_fallthru
        _
      %p226 = scmp.le.s32.totalorder 1, %s18
      %p227 = scmp.lt.s32.totalorder %s18, 3
      %p228 = pnand %p226, %p227
      %p229 = pneg %p228
      // Predicated region
      $region37: #{tpu_custom_call.1} parent=5 // pred_check
        _
      $region38: #{tpu_custom_call.1} parent=5 // pred_check_branch
        %231 = sbr.rel (%p228) target = $region40
      $region39: #{tpu_custom_call.1} parent=5 // pred_region
        %s232 = ssub.s32 %s18, 1
        %s233 = sand.u32 %s31, 1
        %s234 = scalar_lea.sflag [#allocation3], %s233
        %s235 = sand.u32 %s31, 1
        %s236 = smul.addr %s235, 512
        %s237 = scalar_lea.vmem [#allocation2], %s236
        // Predicated region
        $region41: #{tpu_custom_call.1} parent=39 // pred_check
          %p238 = pneg %p44
        $region42: #{tpu_custom_call.1} parent=39 // pred_check_branch
          %240 = sbr.rel (%p238) target = $region44
        $region43: #{tpu_custom_call.1} parent=39 // pred_region
          %241 = dma.done %s234, 8192
        $region44: #{tpu_custom_call.1} parent=39 // pred_fallthru
          _
        // Predicated region
        $region45: #{tpu_custom_call.1} parent=39 // pred_check
          %p242 = pneg %p65
        $region46: #{tpu_custom_call.1} parent=39 // pred_check_branch
          %244 = sbr.rel (%p242) target = $region48
        $region47: #{tpu_custom_call.1} parent=39 // pred_region
          %245 = dma.done [#allocation6], 2048
        $region48: #{tpu_custom_call.1} parent=39 // pred_fallthru
          _
        // Predicated region
        $region49: #{tpu_custom_call.1} parent=39 // pred_check
          %p246 = pneg %p107
        $region50: #{tpu_custom_call.1} parent=39 // pred_check_branch
          %248 = sbr.rel (%p246) target = $region52
        $region51: #{tpu_custom_call.1} parent=39 // pred_region
          %249 = dma.done [#allocation6], 2048
        $region52: #{tpu_custom_call.1} parent=39 // pred_fallthru
          _
        %s250 = sand.u32 %s31, 1
        %s251 = scalar_lea.sflag [#allocation3], %s250
        %s252 = sand.u32 %s31, 1
        %s253 = smul.addr %s252, 512
        %s254 = scalar_lea.vmem [#allocation2], %s253
        %p255 = pneg %p44
        %p256 = pneg %p41
        %p257 = pneg %p65
        %p258 = pneg %p62
        %p259 = pneg %p86
        %p260 = pneg %p83
        %p261 = pneg %p107
        %p262 = pneg %p104
        %p263 = pneg %p128
        %p264 = pneg %p125
        %p265 = pneg %p154
        %p266 = pneg %p151
        %s267 = sand.u32 %s141, 1
        %s268 = scalar_lea.sflag [#allocation4], %s267
        %s269 = sand.u32 %s141, 1
        %s270 = smul.addr %s269, 512
        %s271 = scalar_lea.vmem [#allocation8], %s270
        %s272 = smul.u32 64, %s23
        %s273 = smul.u32 64, %s23
        %v275 = vld [vmem:[%s237] sm:$0xff]
        %v276 = vld [vmem:[%s237 + $0x8] sm:$0xff]
        %v277 = vld [vmem:[%s237 + $0x10] sm:$0xff]
        %v278 = vld [vmem:[%s237 + $0x18] sm:$0xff]
        %v279 = vld [vmem:[%s237 + $0x20] sm:$0xff]
        %v280 = vld [vmem:[%s237 + $0x28] sm:$0xff]
        %v281 = vld [vmem:[%s237 + $0x30] sm:$0xff]
        %v282 = vld [vmem:[%s237 + $0x38] sm:$0xff]
        %v283 = vld [vmem:[%s237 + $0x40] sm:$0xff]
        %v284 = vld [vmem:[%s237 + $0x48] sm:$0xff]
        %v285 = vld [vmem:[%s237 + $0x50] sm:$0xff]
        %v286 = vld [vmem:[%s237 + $0x58] sm:$0xff]
        %v287 = vld [vmem:[%s237 + $0x60] sm:$0xff]
        %v288 = vld [vmem:[%s237 + $0x68] sm:$0xff]
        %v289 = vld [vmem:[%s237 + $0x70] sm:$0xff]
        %v290 = vld [vmem:[%s237 + $0x78] sm:$0xff]
        %v291 = vld [vmem:[%s237 + $0x80] sm:$0xff]
        %v292 = vld [vmem:[%s237 + $0x88] sm:$0xff]
        %v293 = vld [vmem:[%s237 + $0x90] sm:$0xff]
        %v294 = vld [vmem:[%s237 + $0x98] sm:$0xff]
        %v295 = vld [vmem:[%s237 + $0xa0] sm:$0xff]
        %v296 = vld [vmem:[%s237 + $0xa8] sm:$0xff]
        %v297 = vld [vmem:[%s237 + $0xb0] sm:$0xff]
        %v298 = vld [vmem:[%s237 + $0xb8] sm:$0xff]
        %v299 = vld [vmem:[%s237 + $0xc0] sm:$0xff]
        %v300 = vld [vmem:[%s237 + $0xc8] sm:$0xff]
        %v301 = vld [vmem:[%s237 + $0xd0] sm:$0xff]
        %v302 = vld [vmem:[%s237 + $0xd8] sm:$0xff]
        %v303 = vld [vmem:[%s237 + $0xe0] sm:$0xff]
        %v304 = vld [vmem:[%s237 + $0xe8] sm:$0xff]
        %v305 = vld [vmem:[%s237 + $0xf0] sm:$0xff]
        %v306 = vld [vmem:[%s237 + $0xf8] sm:$0xff]
        %v307 = vld [vmem:[%s237 + $0x100] sm:$0xff]
        %v308 = vld [vmem:[%s237 + $0x108] sm:$0xff]
        %v309 = vld [vmem:[%s237 + $0x110] sm:$0xff]
        %v310 = vld [vmem:[%s237 + $0x118] sm:$0xff]
        %v311 = vld [vmem:[%s237 + $0x120] sm:$0xff]
        %v312 = vld [vmem:[%s237 + $0x128] sm:$0xff]
        %v313 = vld [vmem:[%s237 + $0x130] sm:$0xff]
        %v314 = vld [vmem:[%s237 + $0x138] sm:$0xff]
        %v315 = vld [vmem:[%s237 + $0x140] sm:$0xff]
        %v316 = vld [vmem:[%s237 + $0x148] sm:$0xff]
        %v317 = vld [vmem:[%s237 + $0x150] sm:$0xff]
        %v318 = vld [vmem:[%s237 + $0x158] sm:$0xff]
        %v319 = vld [vmem:[%s237 + $0x160] sm:$0xff]
        %v320 = vld [vmem:[%s237 + $0x168] sm:$0xff]
        %v321 = vld [vmem:[%s237 + $0x170] sm:$0xff]
        %v322 = vld [vmem:[%s237 + $0x178] sm:$0xff]
        %v323 = vld [vmem:[%s237 + $0x180] sm:$0xff]
        %v324 = vld [vmem:[%s237 + $0x188] sm:$0xff]
        %v325 = vld [vmem:[%s237 + $0x190] sm:$0xff]
        %v326 = vld [vmem:[%s237 + $0x198] sm:$0xff]
        %v327 = vld [vmem:[%s237 + $0x1a0] sm:$0xff]
        %v328 = vld [vmem:[%s237 + $0x1a8] sm:$0xff]
        %v329 = vld [vmem:[%s237 + $0x1b0] sm:$0xff]
        %v330 = vld [vmem:[%s237 + $0x1b8] sm:$0xff]
        %v331 = vld [vmem:[%s237 + $0x1c0] sm:$0xff]
        %v332 = vld [vmem:[%s237 + $0x1c8] sm:$0xff]
        %v333 = vld [vmem:[%s237 + $0x1d0] sm:$0xff]
        %v334 = vld [vmem:[%s237 + $0x1d8] sm:$0xff]
        %v335 = vld [vmem:[%s237 + $0x1e0] sm:$0xff]
        %v336 = vld [vmem:[%s237 + $0x1e8] sm:$0xff]
        %v337 = vld [vmem:[%s237 + $0x1f0] sm:$0xff]
        %v338 = vld [vmem:[%s237 + $0x1f8] sm:$0xff]
        %v339 = vpack.c.bf16 %v276, %v275
        %v340 = vpack.c.bf16 %v278, %v277
        %v341 = vpack.c.bf16 %v280, %v279
        %v342 = vpack.c.bf16 %v282, %v281
        %v343 = vpack.c.bf16 %v284, %v283
        %v344 = vpack.c.bf16 %v286, %v285
        %v345 = vpack.c.bf16 %v288, %v287
        %v346 = vpack.c.bf16 %v290, %v289
        %v347 = vpack.c.bf16 %v292, %v291
        %v348 = vpack.c.bf16 %v294, %v293
        %v349 = vpack.c.bf16 %v296, %v295
        %v350 = vpack.c.bf16 %v298, %v297
        %v351 = vpack.c.bf16 %v300, %v299
        %v352 = vpack.c.bf16 %v302, %v301
        %v353 = vpack.c.bf16 %v304, %v303
        %v354 = vpack.c.bf16 %v306, %v305
        %v355 = vpack.c.bf16 %v308, %v307
        %v356 = vpack.c.bf16 %v310, %v309
        %v357 = vpack.c.bf16 %v312, %v311
        %v358 = vpack.c.bf16 %v314, %v313
        %v359 = vpack.c.bf16 %v316, %v315
        %v360 = vpack.c.bf16 %v318, %v317
        %v361 = vpack.c.bf16 %v320, %v319
        %v362 = vpack.c.bf16 %v322, %v321
        %v363 = vpack.c.bf16 %v324, %v323
        %v364 = vpack.c.bf16 %v326, %v325
        %v365 = vpack.c.bf16 %v328, %v327
        %v366 = vpack.c.bf16 %v330, %v329
        %v367 = vpack.c.bf16 %v332, %v331
        %v368 = vpack.c.bf16 %v334, %v333
        %v369 = vpack.c.bf16 %v336, %v335
        %v370 = vpack.c.bf16 %v338, %v337
        %v371 = vld [vmem:[#allocation5] sm:$0xff]
        %v372 = vld [vmem:[#allocation5 + $0x8] sm:$0xff]
        %v373 = vld [vmem:[#allocation5 + $0x10] sm:$0xff]
        %v374 = vld [vmem:[#allocation5 + $0x18] sm:$0xff]
        %v375 = vld [vmem:[#allocation5 + $0x20] sm:$0xff]
        %v376 = vld [vmem:[#allocation5 + $0x28] sm:$0xff]
        %v377 = vld [vmem:[#allocation5 + $0x30] sm:$0xff]
        %v378 = vld [vmem:[#allocation5 + $0x38] sm:$0xff]
        %v379 = vld [vmem:[#allocation5 + $0x40] sm:$0xff]
        %v380 = vld [vmem:[#allocation5 + $0x48] sm:$0xff]
        %v381 = vld [vmem:[#allocation5 + $0x50] sm:$0xff]
        %v382 = vld [vmem:[#allocation5 + $0x58] sm:$0xff]
        %v383 = vld [vmem:[#allocation5 + $0x60] sm:$0xff]
        %v384 = vld [vmem:[#allocation5 + $0x68] sm:$0xff]
        %v385 = vld [vmem:[#allocation5 + $0x70] sm:$0xff]
        %v386 = vld [vmem:[#allocation5 + $0x78] sm:$0xff]
        %v387 = vld [vmem:[%s2] sm:$0x3]
        %v389 = vlaneseq
        %v390 = vshrl.u32 %v389, 7
        %v391 = vsub.s32 0, %v390
        %v392 = vrot.slane %v387, %v391
        %v393 = vlaneseq
        %v394 = vshrl.u32 %v393, 7
        %v395 = vsub.s32 1, %v394
        %v396 = vrot.slane %v387, %v395
        %v415 = vunpack.c.l.b16 %v371
        %v416 = vunpack.c.h.b16 %v371
        %v417 = vunpack.c.l.b16 %v372
        %v418 = vunpack.c.h.b16 %v372
        %v419 = vunpack.c.l.b16 %v373
        %v420 = vunpack.c.h.b16 %v373
        %v421 = vunpack.c.l.b16 %v374
        %v422 = vunpack.c.h.b16 %v374
        %v423 = vunpack.c.l.b16 %v375
        %v424 = vunpack.c.h.b16 %v375
        %v425 = vunpack.c.l.b16 %v376
        %v426 = vunpack.c.h.b16 %v376
        %v427 = vunpack.c.l.b16 %v377
        %v428 = vunpack.c.h.b16 %v377
        %v429 = vunpack.c.l.b16 %v378
        %v430 = vunpack.c.h.b16 %v378
        %v431 = vunpack.c.l.b16 %v379
        %v432 = vunpack.c.h.b16 %v379
        %v433 = vunpack.c.l.b16 %v380
        %v434 = vunpack.c.h.b16 %v380
        %v435 = vunpack.c.l.b16 %v381
        %v436 = vunpack.c.h.b16 %v381
        %v437 = vunpack.c.l.b16 %v382
        %v438 = vunpack.c.h.b16 %v382
        %v439 = vunpack.c.l.b16 %v383
        %v440 = vunpack.c.h.b16 %v383
        %v441 = vunpack.c.l.b16 %v384
        %v442 = vunpack.c.h.b16 %v384
        %v443 = vunpack.c.l.b16 %v385
        %v444 = vunpack.c.h.b16 %v385
        %v445 = vunpack.c.l.b16 %v386
        %v446 = vunpack.c.h.b16 %v386
        %v447 = vpack.c.b16 %v417, %v415
        %v448 = vpack.c.b16 %v418, %v416
        %v449 = vpack.c.b16 %v421, %v419
        %v450 = vpack.c.b16 %v422, %v420
        %v451 = vpack.c.b16 %v425, %v423
        %v452 = vpack.c.b16 %v426, %v424
        %v453 = vpack.c.b16 %v429, %v427
        %v454 = vpack.c.b16 %v430, %v428
        %v455 = vpack.c.b16 %v433, %v431
        %v456 = vpack.c.b16 %v434, %v432
        %v457 = vpack.c.b16 %v437, %v435
        %v458 = vpack.c.b16 %v438, %v436
        %v459 = vpack.c.b16 %v441, %v439
        %v460 = vpack.c.b16 %v442, %v440
        %v461 = vpack.c.b16 %v445, %v443
        %v462 = vpack.c.b16 %v446, %v444
        %479 = vmatprep.subr.bf16.mxu0 %v448
        %480 = vmatpush1.bf16.msra.mxu0 %v447
        %481 = vmatprep.subr.bf16.mxu0 %v450
        %482 = vmatpush1.bf16.msra.mxu0 %v449
        %483 = vmatprep.subr.bf16.mxu0 %v452
        %484 = vmatpush1.bf16.msra.mxu0 %v451
        %485 = vmatprep.subr.bf16.mxu0 %v454
        %486 = vmatpush1.bf16.msra.mxu0 %v453
        %487 = vmatprep.subr.bf16.mxu0 %v456
        %488 = vmatpush1.bf16.msra.mxu0 %v455
        %489 = vmatprep.subr.bf16.mxu0 %v458
        %490 = vmatpush1.bf16.msra.mxu0 %v457
        %491 = vmatprep.subr.bf16.mxu0 %v460
        %492 = vmatpush1.bf16.msra.mxu0 %v459
        %493 = vmatprep.subr.bf16.mxu0 %v462
        %494 = vmatpush1.bf16.msra.mxu0 %v461
        %495 = vmatprep.subr.bf16.mxu0 0
        %496 = vmatpush1.bf16.msra.mxu0 0
        %497 = vmatprep.subr.bf16.mxu0 0
        %498 = vmatpush1.bf16.msra.mxu0 0
        %499 = vmatprep.subr.bf16.mxu0 0
        %500 = vmatpush1.bf16.msra.mxu0 0
        %501 = vmatprep.subr.bf16.mxu0 0
        %502 = vmatpush1.bf16.msra.mxu0 0
        %503 = vmatprep.subr.bf16.mxu0 0
        %504 = vmatpush1.bf16.msra.mxu0 0
        %505 = vmatprep.subr.bf16.mxu0 0
        %506 = vmatpush1.bf16.msra.mxu0 0
        %507 = vmatprep.subr.bf16.mxu0 0
        %508 = vmatpush1.bf16.msra.mxu0 0
        %509 = vmatprep.subr.bf16.mxu0 0
        %510 = vmatpush1.bf16.msra.mxu0 0
        %511 = vmatprep.mubr.bf16.mxu0 0
        %512 = vmatmul.mubr.bf16.gmra.mrb[0].mxu0 %v339
        %v513 = vpop.f32.mrb[0].mxu0
        %v514 = vadd.f32 %v392, %v513
        %v515 = vpop.f32.mrb[0].mxu0
        %v516 = vadd.f32 %v396, %v515
        %v517 = vpop.f32.mrb[0].mxu0
        %v518 = vadd.f32 %v392, %v517
        %v519 = vpop.f32.mrb[0].mxu0
        %v520 = vadd.f32 %v396, %v519
        %521 = vmatprep.mubr.bf16.mxu0 0
        %522 = vmatmul.mubr.bf16.gmra.mrb[0].mxu0 %v340
        %v523 = vpop.f32.mrb[0].mxu0
        %v524 = vadd.f32 %v392, %v523
        %v525 = vpop.f32.mrb[0].mxu0
        %v526 = vadd.f32 %v396, %v525
        %v527 = vpop.f32.mrb[0].mxu0
        %v528 = vadd.f32 %v392, %v527
        %v529 = vpop.f32.mrb[0].mxu0
        %v530 = vadd.f32 %v396, %v529
        %531 = vmatprep.mubr.bf16.mxu0 0
        %532 = vmatmul.mubr.bf16.gmra.mrb[0].mxu0 %v341
        %v533 = vpop.f32.mrb[0].mxu0
        %v534 = vadd.f32 %v392, %v533
        %v535 = vpop.f32.mrb[0].mxu0
        %v536 = vadd.f32 %v396, %v535
        %v537 = vpop.f32.mrb[0].mxu0
        %v538 = vadd.f32 %v392, %v537
        %v539 = vpop.f32.mrb[0].mxu0
        %v540 = vadd.f32 %v396, %v539
        %541 = vmatprep.mubr.bf16.mxu0 0
        %542 = vmatmul.mubr.bf16.gmra.mrb[0].mxu0 %v342
        %v543 = vpop.f32.mrb[0].mxu0
        %v544 = vadd.f32 %v392, %v543
        %v545 = vpop.f32.mrb[0].mxu0
        %v546 = vadd.f32 %v396, %v545
        %v547 = vpop.f32.mrb[0].mxu0
        %v548 = vadd.f32 %v392, %v547
        %v549 = vpop.f32.mrb[0].mxu0
        %v550 = vadd.f32 %v396, %v549
        %551 = vmatprep.mubr.bf16.mxu0 0
        %552 = vmatmul.mubr.bf16.gmra.mrb[0].mxu0 %v343
        %v553 = vpop.f32.mrb[0].mxu0
        %v554 = vadd.f32 %v392, %v553
        %v555 = vpop.f32.mrb[0].mxu0
        %v556 = vadd.f32 %v396, %v555
        %v557 = vpop.f32.mrb[0].mxu0
        %v558 = vadd.f32 %v392, %v557
        %v559 = vpop.f32.mrb[0].mxu0
        %v560 = vadd.f32 %v396, %v559
        %561 = vmatprep.mubr.bf16.mxu0 0
        %562 = vmatmul.mubr.bf16.gmra.mrb[0].mxu0 %v344
        %v563 = vpop.f32.mrb[0].mxu0
        %v564 = vadd.f32 %v392, %v563
        %v565 = vpop.f32.mrb[0].mxu0
        %v566 = vadd.f32 %v396, %v565
        %v567 = vpop.f32.mrb[0].mxu0
        %v568 = vadd.f32 %v392, %v567
        %v569 = vpop.f32.mrb[0].mxu0
        %v570 = vadd.f32 %v396, %v569
        %571 = vmatprep.mubr.bf16.mxu0 0
        %572 = vmatmul.mubr.bf16.gmra.mrb[0].mxu0 %v345
        %v573 = vpop.f32.mrb[0].mxu0
        %v574 = vadd.f32 %v392, %v573
        %v575 = vpop.f32.mrb[0].mxu0
        %v576 = vadd.f32 %v396, %v575
        %v577 = vpop.f32.mrb[0].mxu0
        %v578 = vadd.f32 %v392, %v577
        %v579 = vpop.f32.mrb[0].mxu0
        %v580 = vadd.f32 %v396, %v579
        %581 = vmatprep.mubr.bf16.mxu0 0
        %582 = vmatmul.mubr.bf16.gmra.mrb[0].mxu0 %v346
        %v583 = vpop.f32.mrb[0].mxu0
        %v584 = vadd.f32 %v392, %v583
        %v585 = vpop.f32.mrb[0].mxu0
        %v586 = vadd.f32 %v396, %v585
        %v587 = vpop.f32.mrb[0].mxu0
        %v588 = vadd.f32 %v392, %v587
        %v589 = vpop.f32.mrb[0].mxu0
        %v590 = vadd.f32 %v396, %v589
        %591 = vmatprep.mubr.bf16.mxu0 0
        %592 = vmatmul.mubr.bf16.gmra.mrb[0].mxu0 %v347
        %v593 = vpop.f32.mrb[0].mxu0
        %v594 = vadd.f32 %v392, %v593
        %v595 = vpop.f32.mrb[0].mxu0
        %v596 = vadd.f32 %v396, %v595
        %v597 = vpop.f32.mrb[0].mxu0
        %v598 = vadd.f32 %v392, %v597
        %v599 = vpop.f32.mrb[0].mxu0
        %v600 = vadd.f32 %v396, %v599
        %601 = vmatprep.mubr.bf16.mxu0 0
        %602 = vmatmul.mubr.bf16.gmra.mrb[0].mxu0 %v348
        %v603 = vpop.f32.mrb[0].mxu0
        %v604 = vadd.f32 %v392, %v603
        %v605 = vpop.f32.mrb[0].mxu0
        %v606 = vadd.f32 %v396, %v605
        %v607 = vpop.f32.mrb[0].mxu0
        %v608 = vadd.f32 %v392, %v607
        %v609 = vpop.f32.mrb[0].mxu0
        %v610 = vadd.f32 %v396, %v609
        %611 = vmatprep.mubr.bf16.mxu0 0
        %612 = vmatmul.mubr.bf16.gmra.mrb[0].mxu0 %v349
        %v613 = vpop.f32.mrb[0].mxu0
        %v614 = vadd.f32 %v392, %v613
        %v615 = vpop.f32.mrb[0].mxu0
        %v616 = vadd.f32 %v396, %v615
        %v617 = vpop.f32.mrb[0].mxu0
        %v618 = vadd.f32 %v392, %v617
        %v619 = vpop.f32.mrb[0].mxu0
        %v620 = vadd.f32 %v396, %v619
        %621 = vmatprep.mubr.bf16.mxu0 0
        %622 = vmatmul.mubr.bf16.gmra.mrb[0].mxu0 %v350
        %v623 = vpop.f32.mrb[0].mxu0
        %v624 = vadd.f32 %v392, %v623
        %v625 = vpop.f32.mrb[0].mxu0
        %v626 = vadd.f32 %v396, %v625
        %v627 = vpop.f32.mrb[0].mxu0
        %v628 = vadd.f32 %v392, %v627
        %v629 = vpop.f32.mrb[0].mxu0
        %v630 = vadd.f32 %v396, %v629
        %631 = vmatprep.mubr.bf16.mxu0 0
        %632 = vmatmul.mubr.bf16.gmra.mrb[0].mxu0 %v351
        %v633 = vpop.f32.mrb[0].mxu0
        %v634 = vadd.f32 %v392, %v633
        %v635 = vpop.f32.mrb[0].mxu0
        %v636 = vadd.f32 %v396, %v635
        %v637 = vpop.f32.mrb[0].mxu0
        %v638 = vadd.f32 %v392, %v637
        %v639 = vpop.f32.mrb[0].mxu0
        %v640 = vadd.f32 %v396, %v639
        %641 = vmatprep.mubr.bf16.mxu0 0
        %642 = vmatmul.mubr.bf16.gmra.mrb[0].mxu0 %v352
        %v643 = vpop.f32.mrb[0].mxu0
        %v644 = vadd.f32 %v392, %v643
        %v645 = vpop.f32.mrb[0].mxu0
        %v646 = vadd.f32 %v396, %v645
        %v647 = vpop.f32.mrb[0].mxu0
        %v648 = vadd.f32 %v392, %v647
        %v649 = vpop.f32.mrb[0].mxu0
        %v650 = vadd.f32 %v396, %v649
        %651 = vmatprep.mubr.bf16.mxu0 0
        %652 = vmatmul.mubr.bf16.gmra.mrb[0].mxu0 %v353
        %v653 = vpop.f32.mrb[0].mxu0
        %v654 = vadd.f32 %v392, %v653
        %v655 = vpop.f32.mrb[0].mxu0
        %v656 = vadd.f32 %v396, %v655
        %v657 = vpop.f32.mrb[0].mxu0
        %v658 = vadd.f32 %v392, %v657
        %v659 = vpop.f32.mrb[0].mxu0
        %v660 = vadd.f32 %v396, %v659
        %661 = vmatprep.mubr.bf16.mxu0 0
        %662 = vmatmul.mubr.bf16.gmra.mrb[0].mxu0 %v354
        %v663 = vpop.f32.mrb[0].mxu0
        %v664 = vadd.f32 %v392, %v663
        %v665 = vpop.f32.mrb[0].mxu0
        %v666 = vadd.f32 %v396, %v665
        %v667 = vpop.f32.mrb[0].mxu0
        %v668 = vadd.f32 %v392, %v667
        %v669 = vpop.f32.mrb[0].mxu0
        %v670 = vadd.f32 %v396, %v669
        %671 = vmatprep.mubr.bf16.mxu0 0
        %672 = vmatmul.mubr.bf16.gmra.mrb[0].mxu0 %v355
        %v673 = vpop.f32.mrb[0].mxu0
        %v674 = vadd.f32 %v392, %v673
        %v675 = vpop.f32.mrb[0].mxu0
        %v676 = vadd.f32 %v396, %v675
        %v677 = vpop.f32.mrb[0].mxu0
        %v678 = vadd.f32 %v392, %v677
        %v679 = vpop.f32.mrb[0].mxu0
        %v680 = vadd.f32 %v396, %v679
        %681 = vmatprep.mubr.bf16.mxu0 0
        %682 = vmatmul.mubr.bf16.gmra.mrb[0].mxu0 %v356
        %v683 = vpop.f32.mrb[0].mxu0
        %v684 = vadd.f32 %v392, %v683
        %v685 = vpop.f32.mrb[0].mxu0
        %v686 = vadd.f32 %v396, %v685
        %v687 = vpop.f32.mrb[0].mxu0
        %v688 = vadd.f32 %v392, %v687
        %v689 = vpop.f32.mrb[0].mxu0
        %v690 = vadd.f32 %v396, %v689
        %691 = vmatprep.mubr.bf16.mxu0 0
        %692 = vmatmul.mubr.bf16.gmra.mrb[0].mxu0 %v357
        %v693 = vpop.f32.mrb[0].mxu0
        %v694 = vadd.f32 %v392, %v693
        %v695 = vpop.f32.mrb[0].mxu0
        %v696 = vadd.f32 %v396, %v695
        %v697 = vpop.f32.mrb[0].mxu0
        %v698 = vadd.f32 %v392, %v697
        %v699 = vpop.f32.mrb[0].mxu0
        %v700 = vadd.f32 %v396, %v699
        %701 = vmatprep.mubr.bf16.mxu0 0
        %702 = vmatmul.mubr.bf16.gmra.mrb[0].mxu0 %v358
        %v703 = vpop.f32.mrb[0].mxu0
        %v704 = vadd.f32 %v392, %v703
        %v705 = vpop.f32.mrb[0].mxu0
        %v706 = vadd.f32 %v396, %v705
        %v707 = vpop.f32.mrb[0].mxu0
        %v708 = vadd.f32 %v392, %v707
        %v709 = vpop.f32.mrb[0].mxu0
        %v710 = vadd.f32 %v396, %v709
        %711 = vmatprep.mubr.bf16.mxu0 0
        %712 = vmatmul.mubr.bf16.gmra.mrb[0].mxu0 %v359
        %v713 = vpop.f32.mrb[0].mxu0
        %v714 = vadd.f32 %v392, %v713
        %v715 = vpop.f32.mrb[0].mxu0
        %v716 = vadd.f32 %v396, %v715
        %v717 = vpop.f32.mrb[0].mxu0
        %v718 = vadd.f32 %v392, %v717
        %v719 = vpop.f32.mrb[0].mxu0
        %v720 = vadd.f32 %v396, %v719
        %721 = vmatprep.mubr.bf16.mxu0 0
        %722 = vmatmul.mubr.bf16.gmra.mrb[0].mxu0 %v360
        %v723 = vpop.f32.mrb[0].mxu0
        %v724 = vadd.f32 %v392, %v723
        %v725 = vpop.f32.mrb[0].mxu0
        %v726 = vadd.f32 %v396, %v725
        %v727 = vpop.f32.mrb[0].mxu0
        %v728 = vadd.f32 %v392, %v727
        %v729 = vpop.f32.mrb[0].mxu0
        %v730 = vadd.f32 %v396, %v729
        %731 = vmatprep.mubr.bf16.mxu0 0
        %732 = vmatmul.mubr.bf16.gmra.mrb[0].mxu0 %v361
        %v733 = vpop.f32.mrb[0].mxu0
        %v734 = vadd.f32 %v392, %v733
        %v735 = vpop.f32.mrb[0].mxu0
        %v736 = vadd.f32 %v396, %v735
        %v737 = vpop.f32.mrb[0].mxu0
        %v738 = vadd.f32 %v392, %v737
        %v739 = vpop.f32.mrb[0].mxu0
        %v740 = vadd.f32 %v396, %v739
        %741 = vmatprep.mubr.bf16.mxu0 0
        %742 = vmatmul.mubr.bf16.gmra.mrb[0].mxu0 %v362
        %v743 = vpop.f32.mrb[0].mxu0
        %v744 = vadd.f32 %v392, %v743
        %v745 = vpop.f32.mrb[0].mxu0
        %v746 = vadd.f32 %v396, %v745
        %v747 = vpop.f32.mrb[0].mxu0
        %v748 = vadd.f32 %v392, %v747
        %v749 = vpop.f32.mrb[0].mxu0
        %v750 = vadd.f32 %v396, %v749
        %751 = vmatprep.mubr.bf16.mxu0 0
        %752 = vmatmul.mubr.bf16.gmra.mrb[0].mxu0 %v363
        %v753 = vpop.f32.mrb[0].mxu0
        %v754 = vadd.f32 %v392, %v753
        %v755 = vpop.f32.mrb[0].mxu0
        %v756 = vadd.f32 %v396, %v755
        %v757 = vpop.f32.mrb[0].mxu0
        %v758 = vadd.f32 %v392, %v757
        %v759 = vpop.f32.mrb[0].mxu0
        %v760 = vadd.f32 %v396, %v759
        %761 = vmatprep.mubr.bf16.mxu0 0
        %762 = vmatmul.mubr.bf16.gmra.mrb[0].mxu0 %v364
        %v763 = vpop.f32.mrb[0].mxu0
        %v764 = vadd.f32 %v392, %v763
        %v765 = vpop.f32.mrb[0].mxu0
        %v766 = vadd.f32 %v396, %v765
        %v767 = vpop.f32.mrb[0].mxu0
        %v768 = vadd.f32 %v392, %v767
        %v769 = vpop.f32.mrb[0].mxu0
        %v770 = vadd.f32 %v396, %v769
        %771 = vmatprep.mubr.bf16.mxu0 0
        %772 = vmatmul.mubr.bf16.gmra.mrb[0].mxu0 %v365
        %v773 = vpop.f32.mrb[0].mxu0
        %v774 = vadd.f32 %v392, %v773
        %v775 = vpop.f32.mrb[0].mxu0
        %v776 = vadd.f32 %v396, %v775
        %v777 = vpop.f32.mrb[0].mxu0
        %v778 = vadd.f32 %v392, %v777
        %v779 = vpop.f32.mrb[0].mxu0
        %v780 = vadd.f32 %v396, %v779
        %781 = vmatprep.mubr.bf16.mxu0 0
        %782 = vmatmul.mubr.bf16.gmra.mrb[0].mxu0 %v366
        %v783 = vpop.f32.mrb[0].mxu0
        %v784 = vadd.f32 %v392, %v783
        %v785 = vpop.f32.mrb[0].mxu0
        %v786 = vadd.f32 %v396, %v785
        %v787 = vpop.f32.mrb[0].mxu0
        %v788 = vadd.f32 %v392, %v787
        %v789 = vpop.f32.mrb[0].mxu0
        %v790 = vadd.f32 %v396, %v789
        %791 = vmatprep.mubr.bf16.mxu0 0
        %792 = vmatmul.mubr.bf16.gmra.mrb[0].mxu0 %v367
        %v793 = vpop.f32.mrb[0].mxu0
        %v794 = vadd.f32 %v392, %v793
        %v795 = vpop.f32.mrb[0].mxu0
        %v796 = vadd.f32 %v396, %v795
        %v797 = vpop.f32.mrb[0].mxu0
        %v798 = vadd.f32 %v392, %v797
        %v799 = vpop.f32.mrb[0].mxu0
        %v800 = vadd.f32 %v396, %v799
        %801 = vmatprep.mubr.bf16.mxu0 0
        %802 = vmatmul.mubr.bf16.gmra.mrb[0].mxu0 %v368
        %v803 = vpop.f32.mrb[0].mxu0
        %v804 = vadd.f32 %v392, %v803
        %v805 = vpop.f32.mrb[0].mxu0
        %v806 = vadd.f32 %v396, %v805
        %v807 = vpop.f32.mrb[0].mxu0
        %v808 = vadd.f32 %v392, %v807
        %v809 = vpop.f32.mrb[0].mxu0
        %v810 = vadd.f32 %v396, %v809
        %811 = vmatprep.mubr.bf16.mxu0 0
        %812 = vmatmul.mubr.bf16.gmra.mrb[0].mxu0 %v369
        %v813 = vpop.f32.mrb[0].mxu0
        %v814 = vadd.f32 %v392, %v813
        %v815 = vpop.f32.mrb[0].mxu0
        %v816 = vadd.f32 %v396, %v815
        %v817 = vpop.f32.mrb[0].mxu0
        %v818 = vadd.f32 %v392, %v817
        %v819 = vpop.f32.mrb[0].mxu0
        %v820 = vadd.f32 %v396, %v819
        %821 = vmatprep.mubr.bf16.mxu0 0
        %822 = vmatmul.mubr.bf16.gmra.mrb[0].mxu0 %v370
        %v823 = vpop.f32.mrb[0].mxu0
        %v824 = vadd.f32 %v392, %v823
        %v825 = vpop.f32.mrb[0].mxu0
        %v826 = vadd.f32 %v396, %v825
        %v827 = vpop.f32.mrb[0].mxu0
        %v828 = vadd.f32 %v392, %v827
        %v829 = vpop.f32.mrb[0].mxu0
        %v830 = vadd.f32 %v396, %v829
        %831 = vdwg.mxu0
        %v832 = vmul.f32 %v514, %v514
        %v833 = vmul.f32 %v516, %v516
        %v834 = vmul.f32 %v518, %v518
        %v835 = vmul.f32 %v520, %v520
        %v836 = vmul.f32 %v524, %v524
        %v837 = vmul.f32 %v526, %v526
        %v838 = vmul.f32 %v528, %v528
        %v839 = vmul.f32 %v530, %v530
        %v840 = vmul.f32 %v534, %v534
        %v841 = vmul.f32 %v536, %v536
        %v842 = vmul.f32 %v538, %v538
        %v843 = vmul.f32 %v540, %v540
        %v844 = vmul.f32 %v544, %v544
        %v845 = vmul.f32 %v546, %v546
        %v846 = vmul.f32 %v548, %v548
        %v847 = vmul.f32 %v550, %v550
        %v848 = vmul.f32 %v554, %v554
        %v849 = vmul.f32 %v556, %v556
        %v850 = vmul.f32 %v558, %v558
        %v851 = vmul.f32 %v560, %v560
        %v852 = vmul.f32 %v564, %v564
        %v853 = vmul.f32 %v566, %v566
        %v854 = vmul.f32 %v568, %v568
        %v855 = vmul.f32 %v570, %v570
        %v856 = vmul.f32 %v574, %v574
        %v857 = vmul.f32 %v576, %v576
        %v858 = vmul.f32 %v578, %v578
        %v859 = vmul.f32 %v580, %v580
        %v860 = vmul.f32 %v584, %v584
        %v861 = vmul.f32 %v586, %v586
        %v862 = vmul.f32 %v588, %v588
        %v863 = vmul.f32 %v590, %v590
        %v864 = vmul.f32 %v594, %v594
        %v865 = vmul.f32 %v596, %v596
        %v866 = vmul.f32 %v598, %v598
        %v867 = vmul.f32 %v600, %v600
        %v868 = vmul.f32 %v604, %v604
        %v869 = vmul.f32 %v606, %v606
        %v870 = vmul.f32 %v608, %v608
        %v871 = vmul.f32 %v610, %v610
        %v872 = vmul.f32 %v614, %v614
        %v873 = vmul.f32 %v616, %v616
        %v874 = vmul.f32 %v618, %v618
        %v875 = vmul.f32 %v620, %v620
        %v876 = vmul.f32 %v624, %v624
        %v877 = vmul.f32 %v626, %v626
        %v878 = vmul.f32 %v628, %v628
        %v879 = vmul.f32 %v630, %v630
        %v880 = vmul.f32 %v634, %v634
        %v881 = vmul.f32 %v636, %v636
        %v882 = vmul.f32 %v638, %v638
        %v883 = vmul.f32 %v640, %v640
        %v884 = vmul.f32 %v644, %v644
        %v885 = vmul.f32 %v646, %v646
        %v886 = vmul.f32 %v648, %v648
        %v887 = vmul.f32 %v650, %v650
        %v888 = vmul.f32 %v654, %v654
        %v889 = vmul.f32 %v656, %v656
        %v890 = vmul.f32 %v658, %v658
        %v891 = vmul.f32 %v660, %v660
        %v892 = vmul.f32 %v664, %v664
        %v893 = vmul.f32 %v666, %v666
        %v894 = vmul.f32 %v668, %v668
        %v895 = vmul.f32 %v670, %v670
        %v896 = vmul.f32 %v674, %v674
        %v897 = vmul.f32 %v676, %v676
        %v898 = vmul.f32 %v678, %v678
        %v899 = vmul.f32 %v680, %v680
        %v900 = vmul.f32 %v684, %v684
        %v901 = vmul.f32 %v686, %v686
        %v902 = vmul.f32 %v688, %v688
        %v903 = vmul.f32 %v690, %v690
        %v904 = vmul.f32 %v694, %v694
        %v905 = vmul.f32 %v696, %v696
        %v906 = vmul.f32 %v698, %v698
        %v907 = vmul.f32 %v700, %v700
        %v908 = vmul.f32 %v704, %v704
        %v909 = vmul.f32 %v706, %v706
        %v910 = vmul.f32 %v708, %v708
        %v911 = vmul.f32 %v710, %v710
        %v912 = vmul.f32 %v714, %v714
        %v913 = vmul.f32 %v716, %v716
        %v914 = vmul.f32 %v718, %v718
        %v915 = vmul.f32 %v720, %v720
        %v916 = vmul.f32 %v724, %v724
        %v917 = vmul.f32 %v726, %v726
        %v918 = vmul.f32 %v728, %v728
        %v919 = vmul.f32 %v730, %v730
        %v920 = vmul.f32 %v734, %v734
        %v921 = vmul.f32 %v736, %v736
        %v922 = vmul.f32 %v738, %v738
        %v923 = vmul.f32 %v740, %v740
        %v924 = vmul.f32 %v744, %v744
        %v925 = vmul.f32 %v746, %v746
        %v926 = vmul.f32 %v748, %v748
        %v927 = vmul.f32 %v750, %v750
        %v928 = vmul.f32 %v754, %v754
        %v929 = vmul.f32 %v756, %v756
        %v930 = vmul.f32 %v758, %v758
        %v931 = vmul.f32 %v760, %v760
        %v932 = vmul.f32 %v764, %v764
        %v933 = vmul.f32 %v766, %v766
        %v934 = vmul.f32 %v768, %v768
        %v935 = vmul.f32 %v770, %v770
        %v936 = vmul.f32 %v774, %v774
        %v937 = vmul.f32 %v776, %v776
        %v938 = vmul.f32 %v778, %v778
        %v939 = vmul.f32 %v780, %v780
        %v940 = vmul.f32 %v784, %v784
        %v941 = vmul.f32 %v786, %v786
        %v942 = vmul.f32 %v788, %v788
        %v943 = vmul.f32 %v790, %v790
        %v944 = vmul.f32 %v794, %v794
        %v945 = vmul.f32 %v796, %v796
        %v946 = vmul.f32 %v798, %v798
        %v947 = vmul.f32 %v800, %v800
        %v948 = vmul.f32 %v804, %v804
        %v949 = vmul.f32 %v806, %v806
        %v950 = vmul.f32 %v808, %v808
        %v951 = vmul.f32 %v810, %v810
        %v952 = vmul.f32 %v814, %v814
        %v953 = vmul.f32 %v816, %v816
        %v954 = vmul.f32 %v818, %v818
        %v955 = vmul.f32 %v820, %v820
        %v956 = vmul.f32 %v824, %v824
        %v957 = vmul.f32 %v826, %v826
        %v958 = vmul.f32 %v828, %v828
        %v959 = vmul.f32 %v830, %v830
        %v960 = vmul.f32 %v514, 0.5
        %v961 = vmul.f32 %v516, 0.5
        %v962 = vmul.f32 %v518, 0.5
        %v963 = vmul.f32 %v520, 0.5
        %v964 = vmul.f32 %v524, 0.5
        %v965 = vmul.f32 %v526, 0.5
        %v966 = vmul.f32 %v528, 0.5
        %v967 = vmul.f32 %v530, 0.5
        %v968 = vmul.f32 %v534, 0.5
        %v969 = vmul.f32 %v536, 0.5
        %v970 = vmul.f32 %v538, 0.5
        %v971 = vmul.f32 %v540, 0.5
        %v972 = vmul.f32 %v544, 0.5
        %v973 = vmul.f32 %v546, 0.5
        %v974 = vmul.f32 %v548, 0.5
        %v975 = vmul.f32 %v550, 0.5
        %v976 = vmul.f32 %v554, 0.5
        %v977 = vmul.f32 %v556, 0.5
        %v978 = vmul.f32 %v558, 0.5
        %v979 = vmul.f32 %v560, 0.5
        %v980 = vmul.f32 %v564, 0.5
        %v981 = vmul.f32 %v566, 0.5
        %v982 = vmul.f32 %v568, 0.5
        %v983 = vmul.f32 %v570, 0.5
        %v984 = vmul.f32 %v574, 0.5
        %v985 = vmul.f32 %v576, 0.5
        %v986 = vmul.f32 %v578, 0.5
        %v987 = vmul.f32 %v580, 0.5
        %v988 = vmul.f32 %v584, 0.5
        %v989 = vmul.f32 %v586, 0.5
        %v990 = vmul.f32 %v588, 0.5
        %v991 = vmul.f32 %v590, 0.5
        %v992 = vmul.f32 %v594, 0.5
        %v993 = vmul.f32 %v596, 0.5
        %v994 = vmul.f32 %v598, 0.5
        %v995 = vmul.f32 %v600, 0.5
        %v996 = vmul.f32 %v604, 0.5
        %v997 = vmul.f32 %v606, 0.5
        %v998 = vmul.f32 %v608, 0.5
        %v999 = vmul.f32 %v610, 0.5
        %v1000 = vmul.f32 %v614, 0.5
        %v1001 = vmul.f32 %v616, 0.5
        %v1002 = vmul.f32 %v618, 0.5
        %v1003 = vmul.f32 %v620, 0.5
        %v1004 = vmul.f32 %v624, 0.5
        %v1005 = vmul.f32 %v626, 0.5
        %v1006 = vmul.f32 %v628, 0.5
        %v1007 = vmul.f32 %v630, 0.5
        %v1008 = vmul.f32 %v634, 0.5
        %v1009 = vmul.f32 %v636, 0.5
        %v1010 = vmul.f32 %v638, 0.5
        %v1011 = vmul.f32 %v640, 0.5
        %v1012 = vmul.f32 %v644, 0.5
        %v1013 = vmul.f32 %v646, 0.5
        %v1014 = vmul.f32 %v648, 0.5
        %v1015 = vmul.f32 %v650, 0.5
        %v1016 = vmul.f32 %v654, 0.5
        %v1017 = vmul.f32 %v656, 0.5
        %v1018 = vmul.f32 %v658, 0.5
        %v1019 = vmul.f32 %v660, 0.5
        %v1020 = vmul.f32 %v664, 0.5
        %v1021 = vmul.f32 %v666, 0.5
        %v1022 = vmul.f32 %v668, 0.5
        %v1023 = vmul.f32 %v670, 0.5
        %v1024 = vmul.f32 %v674, 0.5
        %v1025 = vmul.f32 %v676, 0.5
        %v1026 = vmul.f32 %v678, 0.5
        %v1027 = vmul.f32 %v680, 0.5
        %v1028 = vmul.f32 %v684, 0.5
        %v1029 = vmul.f32 %v686, 0.5
        %v1030 = vmul.f32 %v688, 0.5
        %v1031 = vmul.f32 %v690, 0.5
        %v1032 = vmul.f32 %v694, 0.5
        %v1033 = vmul.f32 %v696, 0.5
        %v1034 = vmul.f32 %v698, 0.5
        %v1035 = vmul.f32 %v700, 0.5
        %v1036 = vmul.f32 %v704, 0.5
        %v1037 = vmul.f32 %v706, 0.5
        %v1038 = vmul.f32 %v708, 0.5
        %v1039 = vmul.f32 %v710, 0.5
        %v1040 = vmul.f32 %v714, 0.5
        %v1041 = vmul.f32 %v716, 0.5
        %v1042 = vmul.f32 %v718, 0.5
        %v1043 = vmul.f32 %v720, 0.5
        %v1044 = vmul.f32 %v724, 0.5
        %v1045 = vmul.f32 %v726, 0.5
        %v1046 = vmul.f32 %v728, 0.5
        %v1047 = vmul.f32 %v730, 0.5
        %v1048 = vmul.f32 %v734, 0.5
        %v1049 = vmul.f32 %v736, 0.5
        %v1050 = vmul.f32 %v738, 0.5
        %v1051 = vmul.f32 %v740, 0.5
        %v1052 = vmul.f32 %v744, 0.5
        %v1053 = vmul.f32 %v746, 0.5
        %v1054 = vmul.f32 %v748, 0.5
        %v1055 = vmul.f32 %v750, 0.5
        %v1056 = vmul.f32 %v754, 0.5
        %v1057 = vmul.f32 %v756, 0.5
        %v1058 = vmul.f32 %v758, 0.5
        %v1059 = vmul.f32 %v760, 0.5
        %v1060 = vmul.f32 %v764, 0.5
        %v1061 = vmul.f32 %v766, 0.5
        %v1062 = vmul.f32 %v768, 0.5
        %v1063 = vmul.f32 %v770, 0.5
        %v1064 = vmul.f32 %v774, 0.5
        %v1065 = vmul.f32 %v776, 0.5
        %v1066 = vmul.f32 %v778, 0.5
        %v1067 = vmul.f32 %v780, 0.5
        %v1068 = vmul.f32 %v784, 0.5
        %v1069 = vmul.f32 %v786, 0.5
        %v1070 = vmul.f32 %v788, 0.5
        %v1071 = vmul.f32 %v790, 0.5
        %v1072 = vmul.f32 %v794, 0.5
        %v1073 = vmul.f32 %v796, 0.5
        %v1074 = vmul.f32 %v798, 0.5
        %v1075 = vmul.f32 %v800, 0.5
        %v1076 = vmul.f32 %v804, 0.5
        %v1077 = vmul.f32 %v806, 0.5
        %v1078 = vmul.f32 %v808, 0.5
        %v1079 = vmul.f32 %v810, 0.5
        %v1080 = vmul.f32 %v814, 0.5
        %v1081 = vmul.f32 %v816, 0.5
        %v1082 = vmul.f32 %v818, 0.5
        %v1083 = vmul.f32 %v820, 0.5
        %v1084 = vmul.f32 %v824, 0.5
        %v1085 = vmul.f32 %v826, 0.5
        %v1086 = vmul.f32 %v828, 0.5
        %v1087 = vmul.f32 %v830, 0.5
        %v1088 = vmul.f32 %v832, 0.035677407
        %v1089 = vmul.f32 %v833, 0.035677407
        %v1090 = vmul.f32 %v834, 0.035677407
        %v1091 = vmul.f32 %v835, 0.035677407
        %v1092 = vmul.f32 %v836, 0.035677407
        %v1093 = vmul.f32 %v837, 0.035677407
        %v1094 = vmul.f32 %v838, 0.035677407
        %v1095 = vmul.f32 %v839, 0.035677407
        %v1096 = vmul.f32 %v840, 0.035677407
        %v1097 = vmul.f32 %v841, 0.035677407
        %v1098 = vmul.f32 %v842, 0.035677407
        %v1099 = vmul.f32 %v843, 0.035677407
        %v1100 = vmul.f32 %v844, 0.035677407
        %v1101 = vmul.f32 %v845, 0.035677407
        %v1102 = vmul.f32 %v846, 0.035677407
        %v1103 = vmul.f32 %v847, 0.035677407
        %v1104 = vmul.f32 %v848, 0.035677407
        %v1105 = vmul.f32 %v849, 0.035677407
        %v1106 = vmul.f32 %v850, 0.035677407
        %v1107 = vmul.f32 %v851, 0.035677407
        %v1108 = vmul.f32 %v852, 0.035677407
        %v1109 = vmul.f32 %v853, 0.035677407
        %v1110 = vmul.f32 %v854, 0.035677407
        %v1111 = vmul.f32 %v855, 0.035677407
        %v1112 = vmul.f32 %v856, 0.035677407
        %v1113 = vmul.f32 %v857, 0.035677407
        %v1114 = vmul.f32 %v858, 0.035677407
        %v1115 = vmul.f32 %v859, 0.035677407
        %v1116 = vmul.f32 %v860, 0.035677407
        %v1117 = vmul.f32 %v861, 0.035677407
        %v1118 = vmul.f32 %v862, 0.035677407
        %v1119 = vmul.f32 %v863, 0.035677407
        %v1120 = vmul.f32 %v864, 0.035677407
        %v1121 = vmul.f32 %v865, 0.035677407
        %v1122 = vmul.f32 %v866, 0.035677407
        %v1123 = vmul.f32 %v867, 0.035677407
        %v1124 = vmul.f32 %v868, 0.035677407
        %v1125 = vmul.f32 %v869, 0.035677407
        %v1126 = vmul.f32 %v870, 0.035677407
        %v1127 = vmul.f32 %v871, 0.035677407
        %v1128 = vmul.f32 %v872, 0.035677407
        %v1129 = vmul.f32 %v873, 0.035677407
        %v1130 = vmul.f32 %v874, 0.035677407
        %v1131 = vmul.f32 %v875, 0.035677407
        %v1132 = vmul.f32 %v876, 0.035677407
        %v1133 = vmul.f32 %v877, 0.035677407
        %v1134 = vmul.f32 %v878, 0.035677407
        %v1135 = vmul.f32 %v879, 0.035677407
        %v1136 = vmul.f32 %v880, 0.035677407
        %v1137 = vmul.f32 %v881, 0.035677407
        %v1138 = vmul.f32 %v882, 0.035677407
        %v1139 = vmul.f32 %v883, 0.035677407
        %v1140 = vmul.f32 %v884, 0.035677407
        %v1141 = vmul.f32 %v885, 0.035677407
        %v1142 = vmul.f32 %v886, 0.035677407
        %v1143 = vmul.f32 %v887, 0.035677407
        %v1144 = vmul.f32 %v888, 0.035677407
        %v1145 = vmul.f32 %v889, 0.035677407
        %v1146 = vmul.f32 %v890, 0.035677407
        %v1147 = vmul.f32 %v891, 0.035677407
        %v1148 = vmul.f32 %v892, 0.035677407
        %v1149 = vmul.f32 %v893, 0.035677407
        %v1150 = vmul.f32 %v894, 0.035677407
        %v1151 = vmul.f32 %v895, 0.035677407
        %v1152 = vmul.f32 %v896, 0.035677407
        %v1153 = vmul.f32 %v897, 0.035677407
        %v1154 = vmul.f32 %v898, 0.035677407
        %v1155 = vmul.f32 %v899, 0.035677407
        %v1156 = vmul.f32 %v900, 0.035677407
        %v1157 = vmul.f32 %v901, 0.035677407
        %v1158 = vmul.f32 %v902, 0.035677407
        %v1159 = vmul.f32 %v903, 0.035677407
        %v1160 = vmul.f32 %v904, 0.035677407
        %v1161 = vmul.f32 %v905, 0.035677407
        %v1162 = vmul.f32 %v906, 0.035677407
        %v1163 = vmul.f32 %v907, 0.035677407
        %v1164 = vmul.f32 %v908, 0.035677407
        %v1165 = vmul.f32 %v909, 0.035677407
        %v1166 = vmul.f32 %v910, 0.035677407
        %v1167 = vmul.f32 %v911, 0.035677407
        %v1168 = vmul.f32 %v912, 0.035677407
        %v1169 = vmul.f32 %v913, 0.035677407
        %v1170 = vmul.f32 %v914, 0.035677407
        %v1171 = vmul.f32 %v915, 0.035677407
        %v1172 = vmul.f32 %v916, 0.035677407
        %v1173 = vmul.f32 %v917, 0.035677407
        %v1174 = vmul.f32 %v918, 0.035677407
        %v1175 = vmul.f32 %v919, 0.035677407
        %v1176 = vmul.f32 %v920, 0.035677407
        %v1177 = vmul.f32 %v921, 0.035677407
        %v1178 = vmul.f32 %v922, 0.035677407
        %v1179 = vmul.f32 %v923, 0.035677407
        %v1180 = vmul.f32 %v924, 0.035677407
        %v1181 = vmul.f32 %v925, 0.035677407
        %v1182 = vmul.f32 %v926, 0.035677407
        %v1183 = vmul.f32 %v927, 0.035677407
        %v1184 = vmul.f32 %v928, 0.035677407
        %v1185 = vmul.f32 %v929, 0.035677407
        %v1186 = vmul.f32 %v930, 0.035677407
        %v1187 = vmul.f32 %v931, 0.035677407
        %v1188 = vmul.f32 %v932, 0.035677407
        %v1189 = vmul.f32 %v933, 0.035677407
        %v1190 = vmul.f32 %v934, 0.035677407
        %v1191 = vmul.f32 %v935, 0.035677407
        %v1192 = vmul.f32 %v936, 0.035677407
        %v1193 = vmul.f32 %v937, 0.035677407
        %v1194 = vmul.f32 %v938, 0.035677407
        %v1195 = vmul.f32 %v939, 0.035677407
        %v1196 = vmul.f32 %v940, 0.035677407
        %v1197 = vmul.f32 %v941, 0.035677407
        %v1198 = vmul.f32 %v942, 0.035677407
        %v1199 = vmul.f32 %v943, 0.035677407
        %v1200 = vmul.f32 %v944, 0.035677407
        %v1201 = vmul.f32 %v945, 0.035677407
        %v1202 = vmul.f32 %v946, 0.035677407
        %v1203 = vmul.f32 %v947, 0.035677407
        %v1204 = vmul.f32 %v948, 0.035677407
        %v1205 = vmul.f32 %v949, 0.035677407
        %v1206 = vmul.f32 %v950, 0.035677407
        %v1207 = vmul.f32 %v951, 0.035677407
        %v1208 = vmul.f32 %v952, 0.035677407
        %v1209 = vmul.f32 %v953, 0.035677407
        %v1210 = vmul.f32 %v954, 0.035677407
        %v1211 = vmul.f32 %v955, 0.035677407
        %v1212 = vmul.f32 %v956, 0.035677407
        %v1213 = vmul.f32 %v957, 0.035677407
        %v1214 = vmul.f32 %v958, 0.035677407
        %v1215 = vmul.f32 %v959, 0.035677407
        %v1216 = vadd.f32 %v1088, 0.7978846
        %v1217 = vadd.f32 %v1089, 0.7978846
        %v1218 = vadd.f32 %v1090, 0.7978846
        %v1219 = vadd.f32 %v1091, 0.7978846
        %v1220 = vadd.f32 %v1092, 0.7978846
        %v1221 = vadd.f32 %v1093, 0.7978846
        %v1222 = vadd.f32 %v1094, 0.7978846
        %v1223 = vadd.f32 %v1095, 0.7978846
        %v1224 = vadd.f32 %v1096, 0.7978846
        %v1225 = vadd.f32 %v1097, 0.7978846
        %v1226 = vadd.f32 %v1098, 0.7978846
        %v1227 = vadd.f32 %v1099, 0.7978846
        %v1228 = vadd.f32 %v1100, 0.7978846
        %v1229 = vadd.f32 %v1101, 0.7978846
        %v1230 = vadd.f32 %v1102, 0.7978846
        %v1231 = vadd.f32 %v1103, 0.7978846
        %v1232 = vadd.f32 %v1104, 0.7978846
        %v1233 = vadd.f32 %v1105, 0.7978846
        %v1234 = vadd.f32 %v1106, 0.7978846
        %v1235 = vadd.f32 %v1107, 0.7978846
        %v1236 = vadd.f32 %v1108, 0.7978846
        %v1237 = vadd.f32 %v1109, 0.7978846
        %v1238 = vadd.f32 %v1110, 0.7978846
        %v1239 = vadd.f32 %v1111, 0.7978846
        %v1240 = vadd.f32 %v1112, 0.7978846
        %v1241 = vadd.f32 %v1113, 0.7978846
        %v1242 = vadd.f32 %v1114, 0.7978846
        %v1243 = vadd.f32 %v1115, 0.7978846
        %v1244 = vadd.f32 %v1116, 0.7978846
        %v1245 = vadd.f32 %v1117, 0.7978846
        %v1246 = vadd.f32 %v1118, 0.7978846
        %v1247 = vadd.f32 %v1119, 0.7978846
        %v1248 = vadd.f32 %v1120, 0.7978846
        %v1249 = vadd.f32 %v1121, 0.7978846
        %v1250 = vadd.f32 %v1122, 0.7978846
        %v1251 = vadd.f32 %v1123, 0.7978846
        %v1252 = vadd.f32 %v1124, 0.7978846
        %v1253 = vadd.f32 %v1125, 0.7978846
        %v1254 = vadd.f32 %v1126, 0.7978846
        %v1255 = vadd.f32 %v1127, 0.7978846
        %v1256 = vadd.f32 %v1128, 0.7978846
        %v1257 = vadd.f32 %v1129, 0.7978846
        %v1258 = vadd.f32 %v1130, 0.7978846
        %v1259 = vadd.f32 %v1131, 0.7978846
        %v1260 = vadd.f32 %v1132, 0.7978846
        %v1261 = vadd.f32 %v1133, 0.7978846
        %v1262 = vadd.f32 %v1134, 0.7978846
        %v1263 = vadd.f32 %v1135, 0.7978846
        %v1264 = vadd.f32 %v1136, 0.7978846
        %v1265 = vadd.f32 %v1137, 0.7978846
        %v1266 = vadd.f32 %v1138, 0.7978846
        %v1267 = vadd.f32 %v1139, 0.7978846
        %v1268 = vadd.f32 %v1140, 0.7978846
        %v1269 = vadd.f32 %v1141, 0.7978846
        %v1270 = vadd.f32 %v1142, 0.7978846
        %v1271 = vadd.f32 %v1143, 0.7978846
        %v1272 = vadd.f32 %v1144, 0.7978846
        %v1273 = vadd.f32 %v1145, 0.7978846
        %v1274 = vadd.f32 %v1146, 0.7978846
        %v1275 = vadd.f32 %v1147, 0.7978846
        %v1276 = vadd.f32 %v1148, 0.7978846
        %v1277 = vadd.f32 %v1149, 0.7978846
        %v1278 = vadd.f32 %v1150, 0.7978846
        %v1279 = vadd.f32 %v1151, 0.7978846
        %v1280 = vadd.f32 %v1152, 0.7978846
        %v1281 = vadd.f32 %v1153, 0.7978846
        %v1282 = vadd.f32 %v1154, 0.7978846
        %v1283 = vadd.f32 %v1155, 0.7978846
        %v1284 = vadd.f32 %v1156, 0.7978846
        %v1285 = vadd.f32 %v1157, 0.7978846
        %v1286 = vadd.f32 %v1158, 0.7978846
        %v1287 = vadd.f32 %v1159, 0.7978846
        %v1288 = vadd.f32 %v1160, 0.7978846
        %v1289 = vadd.f32 %v1161, 0.7978846
        %v1290 = vadd.f32 %v1162, 0.7978846
        %v1291 = vadd.f32 %v1163, 0.7978846
        %v1292 = vadd.f32 %v1164, 0.7978846
        %v1293 = vadd.f32 %v1165, 0.7978846
        %v1294 = vadd.f32 %v1166, 0.7978846
        %v1295 = vadd.f32 %v1167, 0.7978846
        %v1296 = vadd.f32 %v1168, 0.7978846
        %v1297 = vadd.f32 %v1169, 0.7978846
        %v1298 = vadd.f32 %v1170, 0.7978846
        %v1299 = vadd.f32 %v1171, 0.7978846
        %v1300 = vadd.f32 %v1172, 0.7978846
        %v1301 = vadd.f32 %v1173, 0.7978846
        %v1302 = vadd.f32 %v1174, 0.7978846
        %v1303 = vadd.f32 %v1175, 0.7978846
        %v1304 = vadd.f32 %v1176, 0.7978846
        %v1305 = vadd.f32 %v1177, 0.7978846
        %v1306 = vadd.f32 %v1178, 0.7978846
        %v1307 = vadd.f32 %v1179, 0.7978846
        %v1308 = vadd.f32 %v1180, 0.7978846
        %v1309 = vadd.f32 %v1181, 0.7978846
        %v1310 = vadd.f32 %v1182, 0.7978846
        %v1311 = vadd.f32 %v1183, 0.7978846
        %v1312 = vadd.f32 %v1184, 0.7978846
        %v1313 = vadd.f32 %v1185, 0.7978846
        %v1314 = vadd.f32 %v1186, 0.7978846
        %v1315 = vadd.f32 %v1187, 0.7978846
        %v1316 = vadd.f32 %v1188, 0.7978846
        %v1317 = vadd.f32 %v1189, 0.7978846
        %v1318 = vadd.f32 %v1190, 0.7978846
        %v1319 = vadd.f32 %v1191, 0.7978846
        %v1320 = vadd.f32 %v1192, 0.7978846
        %v1321 = vadd.f32 %v1193, 0.7978846
        %v1322 = vadd.f32 %v1194, 0.7978846
        %v1323 = vadd.f32 %v1195, 0.7978846
        %v1324 = vadd.f32 %v1196, 0.7978846
        %v1325 = vadd.f32 %v1197, 0.7978846
        %v1326 = vadd.f32 %v1198, 0.7978846
        %v1327 = vadd.f32 %v1199, 0.7978846
        %v1328 = vadd.f32 %v1200, 0.7978846
        %v1329 = vadd.f32 %v1201, 0.7978846
        %v1330 = vadd.f32 %v1202, 0.7978846
        %v1331 = vadd.f32 %v1203, 0.7978846
        %v1332 = vadd.f32 %v1204, 0.7978846
        %v1333 = vadd.f32 %v1205, 0.7978846
        %v1334 = vadd.f32 %v1206, 0.7978846
        %v1335 = vadd.f32 %v1207, 0.7978846
        %v1336 = vadd.f32 %v1208, 0.7978846
        %v1337 = vadd.f32 %v1209, 0.7978846
        %v1338 = vadd.f32 %v1210, 0.7978846
        %v1339 = vadd.f32 %v1211, 0.7978846
        %v1340 = vadd.f32 %v1212, 0.7978846
        %v1341 = vadd.f32 %v1213, 0.7978846
        %v1342 = vadd.f32 %v1214, 0.7978846
        %v1343 = vadd.f32 %v1215, 0.7978846
        %v1344 = vmul.f32 %v514, %v1216
        %v1345 = vmul.f32 %v516, %v1217
        %v1346 = vmul.f32 %v518, %v1218
        %v1347 = vmul.f32 %v520, %v1219
        %v1348 = vmul.f32 %v524, %v1220
        %v1349 = vmul.f32 %v526, %v1221
        %v1350 = vmul.f32 %v528, %v1222
        %v1351 = vmul.f32 %v530, %v1223
        %v1352 = vmul.f32 %v534, %v1224
        %v1353 = vmul.f32 %v536, %v1225
        %v1354 = vmul.f32 %v538, %v1226
        %v1355 = vmul.f32 %v540, %v1227
        %v1356 = vmul.f32 %v544, %v1228
        %v1357 = vmul.f32 %v546, %v1229
        %v1358 = vmul.f32 %v548, %v1230
        %v1359 = vmul.f32 %v550, %v1231
        %v1360 = vmul.f32 %v554, %v1232
        %v1361 = vmul.f32 %v556, %v1233
        %v1362 = vmul.f32 %v558, %v1234
        %v1363 = vmul.f32 %v560, %v1235
        %v1364 = vmul.f32 %v564, %v1236
        %v1365 = vmul.f32 %v566, %v1237
        %v1366 = vmul.f32 %v568, %v1238
        %v1367 = vmul.f32 %v570, %v1239
        %v1368 = vmul.f32 %v574, %v1240
        %v1369 = vmul.f32 %v576, %v1241
        %v1370 = vmul.f32 %v578, %v1242
        %v1371 = vmul.f32 %v580, %v1243
        %v1372 = vmul.f32 %v584, %v1244
        %v1373 = vmul.f32 %v586, %v1245
        %v1374 = vmul.f32 %v588, %v1246
        %v1375 = vmul.f32 %v590, %v1247
        %v1376 = vmul.f32 %v594, %v1248
        %v1377 = vmul.f32 %v596, %v1249
        %v1378 = vmul.f32 %v598, %v1250
        %v1379 = vmul.f32 %v600, %v1251
        %v1380 = vmul.f32 %v604, %v1252
        %v1381 = vmul.f32 %v606, %v1253
        %v1382 = vmul.f32 %v608, %v1254
        %v1383 = vmul.f32 %v610, %v1255
        %v1384 = vmul.f32 %v614, %v1256
        %v1385 = vmul.f32 %v616, %v1257
        %v1386 = vmul.f32 %v618, %v1258
        %v1387 = vmul.f32 %v620, %v1259
        %v1388 = vmul.f32 %v624, %v1260
        %v1389 = vmul.f32 %v626, %v1261
        %v1390 = vmul.f32 %v628, %v1262
        %v1391 = vmul.f32 %v630, %v1263
        %v1392 = vmul.f32 %v634, %v1264
        %v1393 = vmul.f32 %v636, %v1265
        %v1394 = vmul.f32 %v638, %v1266
        %v1395 = vmul.f32 %v640, %v1267
        %v1396 = vmul.f32 %v644, %v1268
        %v1397 = vmul.f32 %v646, %v1269
        %v1398 = vmul.f32 %v648, %v1270
        %v1399 = vmul.f32 %v650, %v1271
        %v1400 = vmul.f32 %v654, %v1272
        %v1401 = vmul.f32 %v656, %v1273
        %v1402 = vmul.f32 %v658, %v1274
        %v1403 = vmul.f32 %v660, %v1275
        %v1404 = vmul.f32 %v664, %v1276
        %v1405 = vmul.f32 %v666, %v1277
        %v1406 = vmul.f32 %v668, %v1278
        %v1407 = vmul.f32 %v670, %v1279
        %v1408 = vmul.f32 %v674, %v1280
        %v1409 = vmul.f32 %v676, %v1281
        %v1410 = vmul.f32 %v678, %v1282
        %v1411 = vmul.f32 %v680, %v1283
        %v1412 = vmul.f32 %v684, %v1284
        %v1413 = vmul.f32 %v686, %v1285
        %v1414 = vmul.f32 %v688, %v1286
        %v1415 = vmul.f32 %v690, %v1287
        %v1416 = vmul.f32 %v694, %v1288
        %v1417 = vmul.f32 %v696, %v1289
        %v1418 = vmul.f32 %v698, %v1290
        %v1419 = vmul.f32 %v700, %v1291
        %v1420 = vmul.f32 %v704, %v1292
        %v1421 = vmul.f32 %v706, %v1293
        %v1422 = vmul.f32 %v708, %v1294
        %v1423 = vmul.f32 %v710, %v1295
        %v1424 = vmul.f32 %v714, %v1296
        %v1425 = vmul.f32 %v716, %v1297
        %v1426 = vmul.f32 %v718, %v1298
        %v1427 = vmul.f32 %v720, %v1299
        %v1428 = vmul.f32 %v724, %v1300
        %v1429 = vmul.f32 %v726, %v1301
        %v1430 = vmul.f32 %v728, %v1302
        %v1431 = vmul.f32 %v730, %v1303
        %v1432 = vmul.f32 %v734, %v1304
        %v1433 = vmul.f32 %v736, %v1305
        %v1434 = vmul.f32 %v738, %v1306
        %v1435 = vmul.f32 %v740, %v1307
        %v1436 = vmul.f32 %v744, %v1308
        %v1437 = vmul.f32 %v746, %v1309
        %v1438 = vmul.f32 %v748, %v1310
        %v1439 = vmul.f32 %v750, %v1311
        %v1440 = vmul.f32 %v754, %v1312
        %v1441 = vmul.f32 %v756, %v1313
        %v1442 = vmul.f32 %v758, %v1314
        %v1443 = vmul.f32 %v760, %v1315
        %v1444 = vmul.f32 %v764, %v1316
        %v1445 = vmul.f32 %v766, %v1317
        %v1446 = vmul.f32 %v768, %v1318
        %v1447 = vmul.f32 %v770, %v1319
        %v1448 = vmul.f32 %v774, %v1320
        %v1449 = vmul.f32 %v776, %v1321
        %v1450 = vmul.f32 %v778, %v1322
        %v1451 = vmul.f32 %v780, %v1323
        %v1452 = vmul.f32 %v784, %v1324
        %v1453 = vmul.f32 %v786, %v1325
        %v1454 = vmul.f32 %v788, %v1326
        %v1455 = vmul.f32 %v790, %v1327
        %v1456 = vmul.f32 %v794, %v1328
        %v1457 = vmul.f32 %v796, %v1329
        %v1458 = vmul.f32 %v798, %v1330
        %v1459 = vmul.f32 %v800, %v1331
        %v1460 = vmul.f32 %v804, %v1332
        %v1461 = vmul.f32 %v806, %v1333
        %v1462 = vmul.f32 %v808, %v1334
        %v1463 = vmul.f32 %v810, %v1335
        %v1464 = vmul.f32 %v814, %v1336
        %v1465 = vmul.f32 %v816, %v1337
        %v1466 = vmul.f32 %v818, %v1338
        %v1467 = vmul.f32 %v820, %v1339
        %v1468 = vmul.f32 %v824, %v1340
        %v1469 = vmul.f32 %v826, %v1341
        %v1470 = vmul.f32 %v828, %v1342
        %v1471 = vmul.f32 %v830, %v1343
        %v1472 = vtanh.pop %v1344
        %v1473 = vtanh.pop %v1345
        %v1474 = vtanh.pop %v1346
        %v1475 = vtanh.pop %v1347
        %v1476 = vtanh.pop %v1348
        %v1477 = vtanh.pop %v1349
        %v1478 = vtanh.pop %v1350
        %v1479 = vtanh.pop %v1351
        %v1480 = vtanh.pop %v1352
        %v1481 = vtanh.pop %v1353
        %v1482 = vtanh.pop %v1354
        %v1483 = vtanh.pop %v1355
        %v1484 = vtanh.pop %v1356
        %v1485 = vtanh.pop %v1357
        %v1486 = vtanh.pop %v1358
        %v1487 = vtanh.pop %v1359
        %v1488 = vtanh.pop %v1360
        %v1489 = vtanh.pop %v1361
        %v1490 = vtanh.pop %v1362
        %v1491 = vtanh.pop %v1363
        %v1492 = vtanh.pop %v1364
        %v1493 = vtanh.pop %v1365
        %v1494 = vtanh.pop %v1366
        %v1495 = vtanh.pop %v1367
        %v1496 = vtanh.pop %v1368
        %v1497 = vtanh.pop %v1369
        %v1498 = vtanh.pop %v1370
        %v1499 = vtanh.pop %v1371
        %v1500 = vtanh.pop %v1372
        %v1501 = vtanh.pop %v1373
        %v1502 = vtanh.pop %v1374
        %v1503 = vtanh.pop %v1375
        %v1504 = vtanh.pop %v1376
        %v1505 = vtanh.pop %v1377
        %v1506 = vtanh.pop %v1378
        %v1507 = vtanh.pop %v1379
        %v1508 = vtanh.pop %v1380
        %v1509 = vtanh.pop %v1381
        %v1510 = vtanh.pop %v1382
        %v1511 = vtanh.pop %v1383
        %v1512 = vtanh.pop %v1384
        %v1513 = vtanh.pop %v1385
        %v1514 = vtanh.pop %v1386
        %v1515 = vtanh.pop %v1387
        %v1516 = vtanh.pop %v1388
        %v1517 = vtanh.pop %v1389
        %v1518 = vtanh.pop %v1390
        %v1519 = vtanh.pop %v1391
        %v1520 = vtanh.pop %v1392
        %v1521 = vtanh.pop %v1393
        %v1522 = vtanh.pop %v1394
        %v1523 = vtanh.pop %v1395
        %v1524 = vtanh.pop %v1396
        %v1525 = vtanh.pop %v1397
        %v1526 = vtanh.pop %v1398
        %v1527 = vtanh.pop %v1399
        %v1528 = vtanh.pop %v1400
        %v1529 = vtanh.pop %v1401
        %v1530 = vtanh.pop %v1402
        %v1531 = vtanh.pop %v1403
        %v1532 = vtanh.pop %v1404
        %v1533 = vtanh.pop %v1405
        %v1534 = vtanh.pop %v1406
        %v1535 = vtanh.pop %v1407
        %v1536 = vtanh.pop %v1408
        %v1537 = vtanh.pop %v1409
        %v1538 = vtanh.pop %v1410
        %v1539 = vtanh.pop %v1411
        %v1540 = vtanh.pop %v1412
        %v1541 = vtanh.pop %v1413
        %v1542 = vtanh.pop %v1414
        %v1543 = vtanh.pop %v1415
        %v1544 = vtanh.pop %v1416
        %v1545 = vtanh.pop %v1417
        %v1546 = vtanh.pop %v1418
        %v1547 = vtanh.pop %v1419
        %v1548 = vtanh.pop %v1420
        %v1549 = vtanh.pop %v1421
        %v1550 = vtanh.pop %v1422
        %v1551 = vtanh.pop %v1423
        %v1552 = vtanh.pop %v1424
        %v1553 = vtanh.pop %v1425
        %v1554 = vtanh.pop %v1426
        %v1555 = vtanh.pop %v1427
        %v1556 = vtanh.pop %v1428
        %v1557 = vtanh.pop %v1429
        %v1558 = vtanh.pop %v1430
        %v1559 = vtanh.pop %v1431
        %v1560 = vtanh.pop %v1432
        %v1561 = vtanh.pop %v1433
        %v1562 = vtanh.pop %v1434
        %v1563 = vtanh.pop %v1435
        %v1564 = vtanh.pop %v1436
        %v1565 = vtanh.pop %v1437
        %v1566 = vtanh.pop %v1438
        %v1567 = vtanh.pop %v1439
        %v1568 = vtanh.pop %v1440
        %v1569 = vtanh.pop %v1441
        %v1570 = vtanh.pop %v1442
        %v1571 = vtanh.pop %v1443
        %v1572 = vtanh.pop %v1444
        %v1573 = vtanh.pop %v1445
        %v1574 = vtanh.pop %v1446
        %v1575 = vtanh.pop %v1447
        %v1576 = vtanh.pop %v1448
        %v1577 = vtanh.pop %v1449
        %v1578 = vtanh.pop %v1450
        %v1579 = vtanh.pop %v1451
        %v1580 = vtanh.pop %v1452
        %v1581 = vtanh.pop %v1453
        %v1582 = vtanh.pop %v1454
        %v1583 = vtanh.pop %v1455
        %v1584 = vtanh.pop %v1456
        %v1585 = vtanh.pop %v1457
        %v1586 = vtanh.pop %v1458
        %v1587 = vtanh.pop %v1459
        %v1588 = vtanh.pop %v1460
        %v1589 = vtanh.pop %v1461
        %v1590 = vtanh.pop %v1462
        %v1591 = vtanh.pop %v1463
        %v1592 = vtanh.pop %v1464
        %v1593 = vtanh.pop %v1465
        %v1594 = vtanh.pop %v1466
        %v1595 = vtanh.pop %v1467
        %v1596 = vtanh.pop %v1468
        %v1597 = vtanh.pop %v1469
        %v1598 = vtanh.pop %v1470
        %v1599 = vtanh.pop %v1471
        %v1600 = vadd.f32 %v1472, 1.0
        %v1601 = vadd.f32 %v1473, 1.0
        %v1602 = vadd.f32 %v1474, 1.0
        %v1603 = vadd.f32 %v1475, 1.0
        %v1604 = vadd.f32 %v1476, 1.0
        %v1605 = vadd.f32 %v1477, 1.0
        %v1606 = vadd.f32 %v1478, 1.0
        %v1607 = vadd.f32 %v1479, 1.0
        %v1608 = vadd.f32 %v1480, 1.0
        %v1609 = vadd.f32 %v1481, 1.0
        %v1610 = vadd.f32 %v1482, 1.0
        %v1611 = vadd.f32 %v1483, 1.0
        %v1612 = vadd.f32 %v1484, 1.0
        %v1613 = vadd.f32 %v1485, 1.0
        %v1614 = vadd.f32 %v1486, 1.0
        %v1615 = vadd.f32 %v1487, 1.0
        %v1616 = vadd.f32 %v1488, 1.0
        %v1617 = vadd.f32 %v1489, 1.0
        %v1618 = vadd.f32 %v1490, 1.0
        %v1619 = vadd.f32 %v1491, 1.0
        %v1620 = vadd.f32 %v1492, 1.0
        %v1621 = vadd.f32 %v1493, 1.0
        %v1622 = vadd.f32 %v1494, 1.0
        %v1623 = vadd.f32 %v1495, 1.0
        %v1624 = vadd.f32 %v1496, 1.0
        %v1625 = vadd.f32 %v1497, 1.0
        %v1626 = vadd.f32 %v1498, 1.0
        %v1627 = vadd.f32 %v1499, 1.0
        %v1628 = vadd.f32 %v1500, 1.0
        %v1629 = vadd.f32 %v1501, 1.0
        %v1630 = vadd.f32 %v1502, 1.0
        %v1631 = vadd.f32 %v1503, 1.0
        %v1632 = vadd.f32 %v1504, 1.0
        %v1633 = vadd.f32 %v1505, 1.0
        %v1634 = vadd.f32 %v1506, 1.0
        %v1635 = vadd.f32 %v1507, 1.0
        %v1636 = vadd.f32 %v1508, 1.0
        %v1637 = vadd.f32 %v1509, 1.0
        %v1638 = vadd.f32 %v1510, 1.0
        %v1639 = vadd.f32 %v1511, 1.0
        %v1640 = vadd.f32 %v1512, 1.0
        %v1641 = vadd.f32 %v1513, 1.0
        %v1642 = vadd.f32 %v1514, 1.0
        %v1643 = vadd.f32 %v1515, 1.0
        %v1644 = vadd.f32 %v1516, 1.0
        %v1645 = vadd.f32 %v1517, 1.0
        %v1646 = vadd.f32 %v1518, 1.0
        %v1647 = vadd.f32 %v1519, 1.0
        %v1648 = vadd.f32 %v1520, 1.0
        %v1649 = vadd.f32 %v1521, 1.0
        %v1650 = vadd.f32 %v1522, 1.0
        %v1651 = vadd.f32 %v1523, 1.0
        %v1652 = vadd.f32 %v1524, 1.0
        %v1653 = vadd.f32 %v1525, 1.0
        %v1654 = vadd.f32 %v1526, 1.0
        %v1655 = vadd.f32 %v1527, 1.0
        %v1656 = vadd.f32 %v1528, 1.0
        %v1657 = vadd.f32 %v1529, 1.0
        %v1658 = vadd.f32 %v1530, 1.0
        %v1659 = vadd.f32 %v1531, 1.0
        %v1660 = vadd.f32 %v1532, 1.0
        %v1661 = vadd.f32 %v1533, 1.0
        %v1662 = vadd.f32 %v1534, 1.0
        %v1663 = vadd.f32 %v1535, 1.0
        %v1664 = vadd.f32 %v1536, 1.0
        %v1665 = vadd.f32 %v1537, 1.0
        %v1666 = vadd.f32 %v1538, 1.0
        %v1667 = vadd.f32 %v1539, 1.0
        %v1668 = vadd.f32 %v1540, 1.0
        %v1669 = vadd.f32 %v1541, 1.0
        %v1670 = vadd.f32 %v1542, 1.0
        %v1671 = vadd.f32 %v1543, 1.0
        %v1672 = vadd.f32 %v1544, 1.0
        %v1673 = vadd.f32 %v1545, 1.0
        %v1674 = vadd.f32 %v1546, 1.0
        %v1675 = vadd.f32 %v1547, 1.0
        %v1676 = vadd.f32 %v1548, 1.0
        %v1677 = vadd.f32 %v1549, 1.0
        %v1678 = vadd.f32 %v1550, 1.0
        %v1679 = vadd.f32 %v1551, 1.0
        %v1680 = vadd.f32 %v1552, 1.0
        %v1681 = vadd.f32 %v1553, 1.0
        %v1682 = vadd.f32 %v1554, 1.0
        %v1683 = vadd.f32 %v1555, 1.0
        %v1684 = vadd.f32 %v1556, 1.0
        %v1685 = vadd.f32 %v1557, 1.0
        %v1686 = vadd.f32 %v1558, 1.0
        %v1687 = vadd.f32 %v1559, 1.0
        %v1688 = vadd.f32 %v1560, 1.0
        %v1689 = vadd.f32 %v1561, 1.0
        %v1690 = vadd.f32 %v1562, 1.0
        %v1691 = vadd.f32 %v1563, 1.0
        %v1692 = vadd.f32 %v1564, 1.0
        %v1693 = vadd.f32 %v1565, 1.0
        %v1694 = vadd.f32 %v1566, 1.0
        %v1695 = vadd.f32 %v1567, 1.0
        %v1696 = vadd.f32 %v1568, 1.0
        %v1697 = vadd.f32 %v1569, 1.0
        %v1698 = vadd.f32 %v1570, 1.0
        %v1699 = vadd.f32 %v1571, 1.0
        %v1700 = vadd.f32 %v1572, 1.0
        %v1701 = vadd.f32 %v1573, 1.0
        %v1702 = vadd.f32 %v1574, 1.0
        %v1703 = vadd.f32 %v1575, 1.0
        %v1704 = vadd.f32 %v1576, 1.0
        %v1705 = vadd.f32 %v1577, 1.0
        %v1706 = vadd.f32 %v1578, 1.0
        %v1707 = vadd.f32 %v1579, 1.0
        %v1708 = vadd.f32 %v1580, 1.0
        %v1709 = vadd.f32 %v1581, 1.0
        %v1710 = vadd.f32 %v1582, 1.0
        %v1711 = vadd.f32 %v1583, 1.0
        %v1712 = vadd.f32 %v1584, 1.0
        %v1713 = vadd.f32 %v1585, 1.0
        %v1714 = vadd.f32 %v1586, 1.0
        %v1715 = vadd.f32 %v1587, 1.0
        %v1716 = vadd.f32 %v1588, 1.0
        %v1717 = vadd.f32 %v1589, 1.0
        %v1718 = vadd.f32 %v1590, 1.0
        %v1719 = vadd.f32 %v1591, 1.0
        %v1720 = vadd.f32 %v1592, 1.0
        %v1721 = vadd.f32 %v1593, 1.0
        %v1722 = vadd.f32 %v1594, 1.0
        %v1723 = vadd.f32 %v1595, 1.0
        %v1724 = vadd.f32 %v1596, 1.0
        %v1725 = vadd.f32 %v1597, 1.0
        %v1726 = vadd.f32 %v1598, 1.0
        %v1727 = vadd.f32 %v1599, 1.0
        %v1728 = vmul.f32 %v960, %v1600
        %v1729 = vmul.f32 %v961, %v1601
        %v1730 = vmul.f32 %v962, %v1602
        %v1731 = vmul.f32 %v963, %v1603
        %v1732 = vmul.f32 %v964, %v1604
        %v1733 = vmul.f32 %v965, %v1605
        %v1734 = vmul.f32 %v966, %v1606
        %v1735 = vmul.f32 %v967, %v1607
        %v1736 = vmul.f32 %v968, %v1608
        %v1737 = vmul.f32 %v969, %v1609
        %v1738 = vmul.f32 %v970, %v1610
        %v1739 = vmul.f32 %v971, %v1611
        %v1740 = vmul.f32 %v972, %v1612
        %v1741 = vmul.f32 %v973, %v1613
        %v1742 = vmul.f32 %v974, %v1614
        %v1743 = vmul.f32 %v975, %v1615
        %v1744 = vmul.f32 %v976, %v1616
        %v1745 = vmul.f32 %v977, %v1617
        %v1746 = vmul.f32 %v978, %v1618
        %v1747 = vmul.f32 %v979, %v1619
        %v1748 = vmul.f32 %v980, %v1620
        %v1749 = vmul.f32 %v981, %v1621
        %v1750 = vmul.f32 %v982, %v1622
        %v1751 = vmul.f32 %v983, %v1623
        %v1752 = vmul.f32 %v984, %v1624
        %v1753 = vmul.f32 %v985, %v1625
        %v1754 = vmul.f32 %v986, %v1626
        %v1755 = vmul.f32 %v987, %v1627
        %v1756 = vmul.f32 %v988, %v1628
        %v1757 = vmul.f32 %v989, %v1629
        %v1758 = vmul.f32 %v990, %v1630
        %v1759 = vmul.f32 %v991, %v1631
        %v1760 = vmul.f32 %v992, %v1632
        %v1761 = vmul.f32 %v993, %v1633
        %v1762 = vmul.f32 %v994, %v1634
        %v1763 = vmul.f32 %v995, %v1635
        %v1764 = vmul.f32 %v996, %v1636
        %v1765 = vmul.f32 %v997, %v1637
        %v1766 = vmul.f32 %v998, %v1638
        %v1767 = vmul.f32 %v999, %v1639
        %v1768 = vmul.f32 %v1000, %v1640
        %v1769 = vmul.f32 %v1001, %v1641
        %v1770 = vmul.f32 %v1002, %v1642
        %v1771 = vmul.f32 %v1003, %v1643
        %v1772 = vmul.f32 %v1004, %v1644
        %v1773 = vmul.f32 %v1005, %v1645
        %v1774 = vmul.f32 %v1006, %v1646
        %v1775 = vmul.f32 %v1007, %v1647
        %v1776 = vmul.f32 %v1008, %v1648
        %v1777 = vmul.f32 %v1009, %v1649
        %v1778 = vmul.f32 %v1010, %v1650
        %v1779 = vmul.f32 %v1011, %v1651
        %v1780 = vmul.f32 %v1012, %v1652
        %v1781 = vmul.f32 %v1013, %v1653
        %v1782 = vmul.f32 %v1014, %v1654
        %v1783 = vmul.f32 %v1015, %v1655
        %v1784 = vmul.f32 %v1016, %v1656
        %v1785 = vmul.f32 %v1017, %v1657
        %v1786 = vmul.f32 %v1018, %v1658
        %v1787 = vmul.f32 %v1019, %v1659
        %v1788 = vmul.f32 %v1020, %v1660
        %v1789 = vmul.f32 %v1021, %v1661
        %v1790 = vmul.f32 %v1022, %v1662
        %v1791 = vmul.f32 %v1023, %v1663
        %v1792 = vmul.f32 %v1024, %v1664
        %v1793 = vmul.f32 %v1025, %v1665
        %v1794 = vmul.f32 %v1026, %v1666
        %v1795 = vmul.f32 %v1027, %v1667
        %v1796 = vmul.f32 %v1028, %v1668
        %v1797 = vmul.f32 %v1029, %v1669
        %v1798 = vmul.f32 %v1030, %v1670
        %v1799 = vmul.f32 %v1031, %v1671
        %v1800 = vmul.f32 %v1032, %v1672
        %v1801 = vmul.f32 %v1033, %v1673
        %v1802 = vmul.f32 %v1034, %v1674
        %v1803 = vmul.f32 %v1035, %v1675
        %v1804 = vmul.f32 %v1036, %v1676
        %v1805 = vmul.f32 %v1037, %v1677
        %v1806 = vmul.f32 %v1038, %v1678
        %v1807 = vmul.f32 %v1039, %v1679
        %v1808 = vmul.f32 %v1040, %v1680
        %v1809 = vmul.f32 %v1041, %v1681
        %v1810 = vmul.f32 %v1042, %v1682
        %v1811 = vmul.f32 %v1043, %v1683
        %v1812 = vmul.f32 %v1044, %v1684
        %v1813 = vmul.f32 %v1045, %v1685
        %v1814 = vmul.f32 %v1046, %v1686
        %v1815 = vmul.f32 %v1047, %v1687
        %v1816 = vmul.f32 %v1048, %v1688
        %v1817 = vmul.f32 %v1049, %v1689
        %v1818 = vmul.f32 %v1050, %v1690
        %v1819 = vmul.f32 %v1051, %v1691
        %v1820 = vmul.f32 %v1052, %v1692
        %v1821 = vmul.f32 %v1053, %v1693
        %v1822 = vmul.f32 %v1054, %v1694
        %v1823 = vmul.f32 %v1055, %v1695
        %v1824 = vmul.f32 %v1056, %v1696
        %v1825 = vmul.f32 %v1057, %v1697
        %v1826 = vmul.f32 %v1058, %v1698
        %v1827 = vmul.f32 %v1059, %v1699
        %v1828 = vmul.f32 %v1060, %v1700
        %v1829 = vmul.f32 %v1061, %v1701
        %v1830 = vmul.f32 %v1062, %v1702
        %v1831 = vmul.f32 %v1063, %v1703
        %v1832 = vmul.f32 %v1064, %v1704
        %v1833 = vmul.f32 %v1065, %v1705
        %v1834 = vmul.f32 %v1066, %v1706
        %v1835 = vmul.f32 %v1067, %v1707
        %v1836 = vmul.f32 %v1068, %v1708
        %v1837 = vmul.f32 %v1069, %v1709
        %v1838 = vmul.f32 %v1070, %v1710
        %v1839 = vmul.f32 %v1071, %v1711
        %v1840 = vmul.f32 %v1072, %v1712
        %v1841 = vmul.f32 %v1073, %v1713
        %v1842 = vmul.f32 %v1074, %v1714
        %v1843 = vmul.f32 %v1075, %v1715
        %v1844 = vmul.f32 %v1076, %v1716
        %v1845 = vmul.f32 %v1077, %v1717
        %v1846 = vmul.f32 %v1078, %v1718
        %v1847 = vmul.f32 %v1079, %v1719
        %v1848 = vmul.f32 %v1080, %v1720
        %v1849 = vmul.f32 %v1081, %v1721
        %v1850 = vmul.f32 %v1082, %v1722
        %v1851 = vmul.f32 %v1083, %v1723
        %v1852 = vmul.f32 %v1084, %v1724
        %v1853 = vmul.f32 %v1085, %v1725
        %v1854 = vmul.f32 %v1086, %v1726
        %v1855 = vmul.f32 %v1087, %v1727
        %v1856 = vpack.c.bf16 %v1730, %v1728
        %v1857 = vpack.c.bf16 %v1731, %v1729
        %v1858 = vpack.c.bf16 %v1734, %v1732
        %v1859 = vpack.c.bf16 %v1735, %v1733
        %v1860 = vpack.c.bf16 %v1738, %v1736
        %v1861 = vpack.c.bf16 %v1739, %v1737
        %v1862 = vpack.c.bf16 %v1742, %v1740
        %v1863 = vpack.c.bf16 %v1743, %v1741
        %v1864 = vpack.c.bf16 %v1746, %v1744
        %v1865 = vpack.c.bf16 %v1747, %v1745
        %v1866 = vpack.c.bf16 %v1750, %v1748
        %v1867 = vpack.c.bf16 %v1751, %v1749
        %v1868 = vpack.c.bf16 %v1754, %v1752
        %v1869 = vpack.c.bf16 %v1755, %v1753
        %v1870 = vpack.c.bf16 %v1758, %v1756
        %v1871 = vpack.c.bf16 %v1759, %v1757
        %v1872 = vpack.c.bf16 %v1762, %v1760
        %v1873 = vpack.c.bf16 %v1763, %v1761
        %v1874 = vpack.c.bf16 %v1766, %v1764
        %v1875 = vpack.c.bf16 %v1767, %v1765
        %v1876 = vpack.c.bf16 %v1770, %v1768
        %v1877 = vpack.c.bf16 %v1771, %v1769
        %v1878 = vpack.c.bf16 %v1774, %v1772
        %v1879 = vpack.c.bf16 %v1775, %v1773
        %v1880 = vpack.c.bf16 %v1778, %v1776
        %v1881 = vpack.c.bf16 %v1779, %v1777
        %v1882 = vpack.c.bf16 %v1782, %v1780
        %v1883 = vpack.c.bf16 %v1783, %v1781
        %v1884 = vpack.c.bf16 %v1786, %v1784
        %v1885 = vpack.c.bf16 %v1787, %v1785
        %v1886 = vpack.c.bf16 %v1790, %v1788
        %v1887 = vpack.c.bf16 %v1791, %v1789
        %v1888 = vpack.c.bf16 %v1794, %v1792
        %v1889 = vpack.c.bf16 %v1795, %v1793
        %v1890 = vpack.c.bf16 %v1798, %v1796
        %v1891 = vpack.c.bf16 %v1799, %v1797
        %v1892 = vpack.c.bf16 %v1802, %v1800
        %v1893 = vpack.c.bf16 %v1803, %v1801
        %v1894 = vpack.c.bf16 %v1806, %v1804
        %v1895 = vpack.c.bf16 %v1807, %v1805
        %v1896 = vpack.c.bf16 %v1810, %v1808
        %v1897 = vpack.c.bf16 %v1811, %v1809
        %v1898 = vpack.c.bf16 %v1814, %v1812
        %v1899 = vpack.c.bf16 %v1815, %v1813
        %v1900 = vpack.c.bf16 %v1818, %v1816
        %v1901 = vpack.c.bf16 %v1819, %v1817
        %v1902 = vpack.c.bf16 %v1822, %v1820
        %v1903 = vpack.c.bf16 %v1823, %v1821
        %v1904 = vpack.c.bf16 %v1826, %v1824
        %v1905 = vpack.c.bf16 %v1827, %v1825
        %v1906 = vpack.c.bf16 %v1830, %v1828
        %v1907 = vpack.c.bf16 %v1831, %v1829
        %v1908 = vpack.c.bf16 %v1834, %v1832
        %v1909 = vpack.c.bf16 %v1835, %v1833
        %v1910 = vpack.c.bf16 %v1838, %v1836
        %v1911 = vpack.c.bf16 %v1839, %v1837
        %v1912 = vpack.c.bf16 %v1842, %v1840
        %v1913 = vpack.c.bf16 %v1843, %v1841
        %v1914 = vpack.c.bf16 %v1846, %v1844
        %v1915 = vpack.c.bf16 %v1847, %v1845
        %v1916 = vpack.c.bf16 %v1850, %v1848
        %v1917 = vpack.c.bf16 %v1851, %v1849
        %v1918 = vpack.c.bf16 %v1854, %v1852
        %v1919 = vpack.c.bf16 %v1855, %v1853
        %v1920 = vld [vmem:[#allocation7] sm:$0xf]
        %v1921 = vld [vmem:[#allocation7 + $0x4] sm:$0xf]
        %v1922 = vld [vmem:[#allocation7 + $0x8] sm:$0xf]
        %v1923 = vld [vmem:[#allocation7 + $0xc] sm:$0xf]
        %v1924 = vld [vmem:[#allocation7 + $0x10] sm:$0xf]
        %v1925 = vld [vmem:[#allocation7 + $0x14] sm:$0xf]
        %v1926 = vld [vmem:[#allocation7 + $0x18] sm:$0xf]
        %v1927 = vld [vmem:[#allocation7 + $0x1c] sm:$0xf]
        %v1928 = vld [vmem:[#allocation7 + $0x20] sm:$0xf]
        %v1929 = vld [vmem:[#allocation7 + $0x24] sm:$0xf]
        %v1930 = vld [vmem:[#allocation7 + $0x28] sm:$0xf]
        %v1931 = vld [vmem:[#allocation7 + $0x2c] sm:$0xf]
        %v1932 = vld [vmem:[#allocation7 + $0x30] sm:$0xf]
        %v1933 = vld [vmem:[#allocation7 + $0x34] sm:$0xf]
        %v1934 = vld [vmem:[#allocation7 + $0x38] sm:$0xf]
        %v1935 = vld [vmem:[#allocation7 + $0x3c] sm:$0xf]
        %v1936 = vld [vmem:[#allocation7 + $0x40] sm:$0xf]
        %v1937 = vld [vmem:[#allocation7 + $0x44] sm:$0xf]
        %v1938 = vld [vmem:[#allocation7 + $0x48] sm:$0xf]
        %v1939 = vld [vmem:[#allocation7 + $0x4c] sm:$0xf]
        %v1940 = vld [vmem:[#allocation7 + $0x50] sm:$0xf]
        %v1941 = vld [vmem:[#allocation7 + $0x54] sm:$0xf]
        %v1942 = vld [vmem:[#allocation7 + $0x58] sm:$0xf]
        %v1943 = vld [vmem:[#allocation7 + $0x5c] sm:$0xf]
        %v1944 = vld [vmem:[#allocation7 + $0x60] sm:$0xf]
        %v1945 = vld [vmem:[#allocation7 + $0x64] sm:$0xf]
        %v1946 = vld [vmem:[#allocation7 + $0x68] sm:$0xf]
        %v1947 = vld [vmem:[#allocation7 + $0x6c] sm:$0xf]
        %v1948 = vld [vmem:[#allocation7 + $0x70] sm:$0xf]
        %v1949 = vld [vmem:[#allocation7 + $0x74] sm:$0xf]
        %v1950 = vld [vmem:[#allocation7 + $0x78] sm:$0xf]
        %v1951 = vld [vmem:[#allocation7 + $0x7c] sm:$0xf]
        %v1952 = vld [vmem:[%s4] sm:$0x1]
        %v1954 = vlaneseq
        %v1955 = vshrl.u32 %v1954, 7
        %v1956 = vsub.s32 0, %v1955
        %v1957 = vrot.slane %v1952, %v1956
        %v1991 = vunpack.c.l.b16 %v1920
        %v1992 = vunpack.c.l.b16 %v1921
        %v1993 = vunpack.c.l.b16 %v1922
        %v1994 = vunpack.c.l.b16 %v1923
        %v1995 = vunpack.c.l.b16 %v1924
        %v1996 = vunpack.c.l.b16 %v1925
        %v1997 = vunpack.c.l.b16 %v1926
        %v1998 = vunpack.c.l.b16 %v1927
        %v1999 = vunpack.c.l.b16 %v1928
        %v2000 = vunpack.c.l.b16 %v1929
        %v2001 = vunpack.c.l.b16 %v1930
        %v2002 = vunpack.c.l.b16 %v1931
        %v2003 = vunpack.c.l.b16 %v1932
        %v2004 = vunpack.c.l.b16 %v1933
        %v2005 = vunpack.c.l.b16 %v1934
        %v2006 = vunpack.c.l.b16 %v1935
        %v2007 = vunpack.c.l.b16 %v1936
        %v2008 = vunpack.c.l.b16 %v1937
        %v2009 = vunpack.c.l.b16 %v1938
        %v2010 = vunpack.c.l.b16 %v1939
        %v2011 = vunpack.c.l.b16 %v1940
        %v2012 = vunpack.c.l.b16 %v1941
        %v2013 = vunpack.c.l.b16 %v1942
        %v2014 = vunpack.c.l.b16 %v1943
        %v2015 = vunpack.c.l.b16 %v1944
        %v2016 = vunpack.c.l.b16 %v1945
        %v2017 = vunpack.c.l.b16 %v1946
        %v2018 = vunpack.c.l.b16 %v1947
        %v2019 = vunpack.c.l.b16 %v1948
        %v2020 = vunpack.c.l.b16 %v1949
        %v2021 = vunpack.c.l.b16 %v1950
        %v2022 = vunpack.c.l.b16 %v1951
        %v2023 = vpack.c.b16 %v1992, %v1991
        %v2024 = vpack.c.b16 %v1994, %v1993
        %v2025 = vpack.c.b16 %v1996, %v1995
        %v2026 = vpack.c.b16 %v1998, %v1997
        %v2027 = vpack.c.b16 %v2000, %v1999
        %v2028 = vpack.c.b16 %v2002, %v2001
        %v2029 = vpack.c.b16 %v2004, %v2003
        %v2030 = vpack.c.b16 %v2006, %v2005
        %v2031 = vpack.c.b16 %v2008, %v2007
        %v2032 = vpack.c.b16 %v2010, %v2009
        %v2033 = vpack.c.b16 %v2012, %v2011
        %v2034 = vpack.c.b16 %v2014, %v2013
        %v2035 = vpack.c.b16 %v2016, %v2015
        %v2036 = vpack.c.b16 %v2018, %v2017
        %v2037 = vpack.c.b16 %v2020, %v2019
        %v2038 = vpack.c.b16 %v2022, %v2021
        %2055 = vmatprep.subr.bf16.mxu0 0
        %2056 = vmatpush1.bf16.msra.mxu0 %v2023
        %2057 = vmatprep.subr.bf16.mxu0 0
        %2058 = vmatpush1.bf16.msra.mxu0 %v2024
        %2059 = vmatprep.subr.bf16.mxu0 0
        %2060 = vmatpush1.bf16.msra.mxu0 %v2025
        %2061 = vmatprep.subr.bf16.mxu0 0
        %2062 = vmatpush1.bf16.msra.mxu0 %v2026
        %2063 = vmatprep.subr.bf16.mxu0 0
        %2064 = vmatpush1.bf16.msra.mxu0 %v2027
        %2065 = vmatprep.subr.bf16.mxu0 0
        %2066 = vmatpush1.bf16.msra.mxu0 %v2028
        %2067 = vmatprep.subr.bf16.mxu0 0
        %2068 = vmatpush1.bf16.msra.mxu0 %v2029
        %2069 = vmatprep.subr.bf16.mxu0 0
        %2070 = vmatpush1.bf16.msra.mxu0 %v2030
        %2071 = vmatprep.subr.bf16.mxu0 0
        %2072 = vmatpush1.bf16.msra.mxu0 %v2031
        %2073 = vmatprep.subr.bf16.mxu0 0
        %2074 = vmatpush1.bf16.msra.mxu0 %v2032
        %2075 = vmatprep.subr.bf16.mxu0 0
        %2076 = vmatpush1.bf16.msra.mxu0 %v2033
        %2077 = vmatprep.subr.bf16.mxu0 0
        %2078 = vmatpush1.bf16.msra.mxu0 %v2034
        %2079 = vmatprep.subr.bf16.mxu0 0
        %2080 = vmatpush1.bf16.msra.mxu0 %v2035
        %2081 = vmatprep.subr.bf16.mxu0 0
        %2082 = vmatpush1.bf16.msra.mxu0 %v2036
        %2083 = vmatprep.subr.bf16.mxu0 0
        %2084 = vmatpush1.bf16.msra.mxu0 %v2037
        %2085 = vmatprep.subr.bf16.mxu0 0
        %2086 = vmatpush1.bf16.msra.mxu0 %v2038
        %2087 = vmatprep.mubr.bf16.mxu0 %v1857
        %2088 = vmatmul.mubr.bf16.gmra.mrb[0].mxu0 %v1856
        %v2089 = vpop.f32.mrb[0].mxu0
        %v2090 = vadd.f32 %v1957, %v2089
        %v2091 = vpop.f32.mrb[0].mxu0
        %v2092 = vpop.f32.mrb[0].mxu0
        %v2093 = vadd.f32 %v1957, %v2092
        %v2094 = vpop.f32.mrb[0].mxu0
        %2095 = vmatprep.mubr.bf16.mxu0 %v1859
        %2096 = vmatmul.mubr.bf16.gmra.mrb[0].mxu0 %v1858
        %v2097 = vpop.f32.mrb[0].mxu0
        %v2098 = vadd.f32 %v1957, %v2097
        %v2099 = vpop.f32.mrb[0].mxu0
        %v2100 = vpop.f32.mrb[0].mxu0
        %v2101 = vadd.f32 %v1957, %v2100
        %v2102 = vpop.f32.mrb[0].mxu0
        %2103 = vmatprep.mubr.bf16.mxu0 %v1861
        %2104 = vmatmul.mubr.bf16.gmra.mrb[0].mxu0 %v1860
        %v2105 = vpop.f32.mrb[0].mxu0
        %v2106 = vadd.f32 %v1957, %v2105
        %v2107 = vpop.f32.mrb[0].mxu0
        %v2108 = vpop.f32.mrb[0].mxu0
        %v2109 = vadd.f32 %v1957, %v2108
        %v2110 = vpop.f32.mrb[0].mxu0
        %2111 = vmatprep.mubr.bf16.mxu0 %v1863
        %2112 = vmatmul.mubr.bf16.gmra.mrb[0].mxu0 %v1862
        %v2113 = vpop.f32.mrb[0].mxu0
        %v2114 = vadd.f32 %v1957, %v2113
        %v2115 = vpop.f32.mrb[0].mxu0
        %v2116 = vpop.f32.mrb[0].mxu0
        %v2117 = vadd.f32 %v1957, %v2116
        %v2118 = vpop.f32.mrb[0].mxu0
        %2119 = vmatprep.mubr.bf16.mxu0 %v1865
        %2120 = vmatmul.mubr.bf16.gmra.mrb[0].mxu0 %v1864
        %v2121 = vpop.f32.mrb[0].mxu0
        %v2122 = vadd.f32 %v1957, %v2121
        %v2123 = vpop.f32.mrb[0].mxu0
        %v2124 = vpop.f32.mrb[0].mxu0
        %v2125 = vadd.f32 %v1957, %v2124
        %v2126 = vpop.f32.mrb[0].mxu0
        %2127 = vmatprep.mubr.bf16.mxu0 %v1867
        %2128 = vmatmul.mubr.bf16.gmra.mrb[0].mxu0 %v1866
        %v2129 = vpop.f32.mrb[0].mxu0
        %v2130 = vadd.f32 %v1957, %v2129
        %v2131 = vpop.f32.mrb[0].mxu0
        %v2132 = vpop.f32.mrb[0].mxu0
        %v2133 = vadd.f32 %v1957, %v2132
        %v2134 = vpop.f32.mrb[0].mxu0
        %2135 = vmatprep.mubr.bf16.mxu0 %v1869
        %2136 = vmatmul.mubr.bf16.gmra.mrb[0].mxu0 %v1868
        %v2137 = vpop.f32.mrb[0].mxu0
        %v2138 = vadd.f32 %v1957, %v2137
        %v2139 = vpop.f32.mrb[0].mxu0
        %v2140 = vpop.f32.mrb[0].mxu0
        %v2141 = vadd.f32 %v1957, %v2140
        %v2142 = vpop.f32.mrb[0].mxu0
        %2143 = vmatprep.mubr.bf16.mxu0 %v1871
        %2144 = vmatmul.mubr.bf16.gmra.mrb[0].mxu0 %v1870
        %v2145 = vpop.f32.mrb[0].mxu0
        %v2146 = vadd.f32 %v1957, %v2145
        %v2147 = vpop.f32.mrb[0].mxu0
        %v2148 = vpop.f32.mrb[0].mxu0
        %v2149 = vadd.f32 %v1957, %v2148
        %v2150 = vpop.f32.mrb[0].mxu0
        %2151 = vmatprep.mubr.bf16.mxu0 %v1873
        %2152 = vmatmul.mubr.bf16.gmra.mrb[0].mxu0 %v1872
        %v2153 = vpop.f32.mrb[0].mxu0
        %v2154 = vadd.f32 %v1957, %v2153
        %v2155 = vpop.f32.mrb[0].mxu0
        %v2156 = vpop.f32.mrb[0].mxu0
        %v2157 = vadd.f32 %v1957, %v2156
        %v2158 = vpop.f32.mrb[0].mxu0
        %2159 = vmatprep.mubr.bf16.mxu0 %v1875
        %2160 = vmatmul.mubr.bf16.gmra.mrb[0].mxu0 %v1874
        %v2161 = vpop.f32.mrb[0].mxu0
        %v2162 = vadd.f32 %v1957, %v2161
        %v2163 = vpop.f32.mrb[0].mxu0
        %v2164 = vpop.f32.mrb[0].mxu0
        %v2165 = vadd.f32 %v1957, %v2164
        %v2166 = vpop.f32.mrb[0].mxu0
        %2167 = vmatprep.mubr.bf16.mxu0 %v1877
        %2168 = vmatmul.mubr.bf16.gmra.mrb[0].mxu0 %v1876
        %v2169 = vpop.f32.mrb[0].mxu0
        %v2170 = vadd.f32 %v1957, %v2169
        %v2171 = vpop.f32.mrb[0].mxu0
        %v2172 = vpop.f32.mrb[0].mxu0
        %v2173 = vadd.f32 %v1957, %v2172
        %v2174 = vpop.f32.mrb[0].mxu0
        %2175 = vmatprep.mubr.bf16.mxu0 %v1879
        %2176 = vmatmul.mubr.bf16.gmra.mrb[0].mxu0 %v1878
        %v2177 = vpop.f32.mrb[0].mxu0
        %v2178 = vadd.f32 %v1957, %v2177
        %v2179 = vpop.f32.mrb[0].mxu0
        %v2180 = vpop.f32.mrb[0].mxu0
        %v2181 = vadd.f32 %v1957, %v2180
        %v2182 = vpop.f32.mrb[0].mxu0
        %2183 = vmatprep.mubr.bf16.mxu0 %v1881
        %2184 = vmatmul.mubr.bf16.gmra.mrb[0].mxu0 %v1880
        %v2185 = vpop.f32.mrb[0].mxu0
        %v2186 = vadd.f32 %v1957, %v2185
        %v2187 = vpop.f32.mrb[0].mxu0
        %v2188 = vpop.f32.mrb[0].mxu0
        %v2189 = vadd.f32 %v1957, %v2188
        %v2190 = vpop.f32.mrb[0].mxu0
        %2191 = vmatprep.mubr.bf16.mxu0 %v1883
        %2192 = vmatmul.mubr.bf16.gmra.mrb[0].mxu0 %v1882
        %v2193 = vpop.f32.mrb[0].mxu0
        %v2194 = vadd.f32 %v1957, %v2193
        %v2195 = vpop.f32.mrb[0].mxu0
        %v2196 = vpop.f32.mrb[0].mxu0
        %v2197 = vadd.f32 %v1957, %v2196
        %v2198 = vpop.f32.mrb[0].mxu0
        %2199 = vmatprep.mubr.bf16.mxu0 %v1885
        %2200 = vmatmul.mubr.bf16.gmra.mrb[0].mxu0 %v1884
        %v2201 = vpop.f32.mrb[0].mxu0
        %v2202 = vadd.f32 %v1957, %v2201
        %v2203 = vpop.f32.mrb[0].mxu0
        %v2204 = vpop.f32.mrb[0].mxu0
        %v2205 = vadd.f32 %v1957, %v2204
        %v2206 = vpop.f32.mrb[0].mxu0
        %2207 = vmatprep.mubr.bf16.mxu0 %v1887
        %2208 = vmatmul.mubr.bf16.gmra.mrb[0].mxu0 %v1886
        %v2209 = vpop.f32.mrb[0].mxu0
        %v2210 = vadd.f32 %v1957, %v2209
        %v2211 = vpop.f32.mrb[0].mxu0
        %v2212 = vpop.f32.mrb[0].mxu0
        %v2213 = vadd.f32 %v1957, %v2212
        %v2214 = vpop.f32.mrb[0].mxu0
        %2215 = vmatprep.mubr.bf16.mxu0 %v1889
        %2216 = vmatmul.mubr.bf16.gmra.mrb[0].mxu0 %v1888
        %v2217 = vpop.f32.mrb[0].mxu0
        %v2218 = vadd.f32 %v1957, %v2217
        %v2219 = vpop.f32.mrb[0].mxu0
        %v2220 = vpop.f32.mrb[0].mxu0
        %v2221 = vadd.f32 %v1957, %v2220
        %v2222 = vpop.f32.mrb[0].mxu0
        %2223 = vmatprep.mubr.bf16.mxu0 %v1891
        %2224 = vmatmul.mubr.bf16.gmra.mrb[0].mxu0 %v1890
        %v2225 = vpop.f32.mrb[0].mxu0
        %v2226 = vadd.f32 %v1957, %v2225
        %v2227 = vpop.f32.mrb[0].mxu0
        %v2228 = vpop.f32.mrb[0].mxu0
        %v2229 = vadd.f32 %v1957, %v2228
        %v2230 = vpop.f32.mrb[0].mxu0
        %2231 = vmatprep.mubr.bf16.mxu0 %v1893
        %2232 = vmatmul.mubr.bf16.gmra.mrb[0].mxu0 %v1892
        %v2233 = vpop.f32.mrb[0].mxu0
        %v2234 = vadd.f32 %v1957, %v2233
        %v2235 = vpop.f32.mrb[0].mxu0
        %v2236 = vpop.f32.mrb[0].mxu0
        %v2237 = vadd.f32 %v1957, %v2236
        %v2238 = vpop.f32.mrb[0].mxu0
        %2239 = vmatprep.mubr.bf16.mxu0 %v1895
        %2240 = vmatmul.mubr.bf16.gmra.mrb[0].mxu0 %v1894
        %v2241 = vpop.f32.mrb[0].mxu0
        %v2242 = vadd.f32 %v1957, %v2241
        %v2243 = vpop.f32.mrb[0].mxu0
        %v2244 = vpop.f32.mrb[0].mxu0
        %v2245 = vadd.f32 %v1957, %v2244
        %v2246 = vpop.f32.mrb[0].mxu0
        %2247 = vmatprep.mubr.bf16.mxu0 %v1897
        %2248 = vmatmul.mubr.bf16.gmra.mrb[0].mxu0 %v1896
        %v2249 = vpop.f32.mrb[0].mxu0
        %v2250 = vadd.f32 %v1957, %v2249
        %v2251 = vpop.f32.mrb[0].mxu0
        %v2252 = vpop.f32.mrb[0].mxu0
        %v2253 = vadd.f32 %v1957, %v2252
        %v2254 = vpop.f32.mrb[0].mxu0
        %2255 = vmatprep.mubr.bf16.mxu0 %v1899
        %2256 = vmatmul.mubr.bf16.gmra.mrb[0].mxu0 %v1898
        %v2257 = vpop.f32.mrb[0].mxu0
        %v2258 = vadd.f32 %v1957, %v2257
        %v2259 = vpop.f32.mrb[0].mxu0
        %v2260 = vpop.f32.mrb[0].mxu0
        %v2261 = vadd.f32 %v1957, %v2260
        %v2262 = vpop.f32.mrb[0].mxu0
        %2263 = vmatprep.mubr.bf16.mxu0 %v1901
        %2264 = vmatmul.mubr.bf16.gmra.mrb[0].mxu0 %v1900
        %v2265 = vpop.f32.mrb[0].mxu0
        %v2266 = vadd.f32 %v1957, %v2265
        %v2267 = vpop.f32.mrb[0].mxu0
        %v2268 = vpop.f32.mrb[0].mxu0
        %v2269 = vadd.f32 %v1957, %v2268
        %v2270 = vpop.f32.mrb[0].mxu0
        %2271 = vmatprep.mubr.bf16.mxu0 %v1903
        %2272 = vmatmul.mubr.bf16.gmra.mrb[0].mxu0 %v1902
        %v2273 = vpop.f32.mrb[0].mxu0
        %v2274 = vadd.f32 %v1957, %v2273
        %v2275 = vpop.f32.mrb[0].mxu0
        %v2276 = vpop.f32.mrb[0].mxu0
        %v2277 = vadd.f32 %v1957, %v2276
        %v2278 = vpop.f32.mrb[0].mxu0
        %2279 = vmatprep.mubr.bf16.mxu0 %v1905
        %2280 = vmatmul.mubr.bf16.gmra.mrb[0].mxu0 %v1904
        %v2281 = vpop.f32.mrb[0].mxu0
        %v2282 = vadd.f32 %v1957, %v2281
        %v2283 = vpop.f32.mrb[0].mxu0
        %v2284 = vpop.f32.mrb[0].mxu0
        %v2285 = vadd.f32 %v1957, %v2284
        %v2286 = vpop.f32.mrb[0].mxu0
        %2287 = vmatprep.mubr.bf16.mxu0 %v1907
        %2288 = vmatmul.mubr.bf16.gmra.mrb[0].mxu0 %v1906
        %v2289 = vpop.f32.mrb[0].mxu0
        %v2290 = vadd.f32 %v1957, %v2289
        %v2291 = vpop.f32.mrb[0].mxu0
        %v2292 = vpop.f32.mrb[0].mxu0
        %v2293 = vadd.f32 %v1957, %v2292
        %v2294 = vpop.f32.mrb[0].mxu0
        %2295 = vmatprep.mubr.bf16.mxu0 %v1909
        %2296 = vmatmul.mubr.bf16.gmra.mrb[0].mxu0 %v1908
        %v2297 = vpop.f32.mrb[0].mxu0
        %v2298 = vadd.f32 %v1957, %v2297
        %v2299 = vpop.f32.mrb[0].mxu0
        %v2300 = vpop.f32.mrb[0].mxu0
        %v2301 = vadd.f32 %v1957, %v2300
        %v2302 = vpop.f32.mrb[0].mxu0
        %2303 = vmatprep.mubr.bf16.mxu0 %v1911
        %2304 = vmatmul.mubr.bf16.gmra.mrb[0].mxu0 %v1910
        %v2305 = vpop.f32.mrb[0].mxu0
        %v2306 = vadd.f32 %v1957, %v2305
        %v2307 = vpop.f32.mrb[0].mxu0
        %v2308 = vpop.f32.mrb[0].mxu0
        %v2309 = vadd.f32 %v1957, %v2308
        %v2310 = vpop.f32.mrb[0].mxu0
        %2311 = vmatprep.mubr.bf16.mxu0 %v1913
        %2312 = vmatmul.mubr.bf16.gmra.mrb[0].mxu0 %v1912
        %v2313 = vpop.f32.mrb[0].mxu0
        %v2314 = vadd.f32 %v1957, %v2313
        %v2315 = vpop.f32.mrb[0].mxu0
        %v2316 = vpop.f32.mrb[0].mxu0
        %v2317 = vadd.f32 %v1957, %v2316
        %v2318 = vpop.f32.mrb[0].mxu0
        %2319 = vmatprep.mubr.bf16.mxu0 %v1915
        %2320 = vmatmul.mubr.bf16.gmra.mrb[0].mxu0 %v1914
        %v2321 = vpop.f32.mrb[0].mxu0
        %v2322 = vadd.f32 %v1957, %v2321
        %v2323 = vpop.f32.mrb[0].mxu0
        %v2324 = vpop.f32.mrb[0].mxu0
        %v2325 = vadd.f32 %v1957, %v2324
        %v2326 = vpop.f32.mrb[0].mxu0
        %2327 = vmatprep.mubr.bf16.mxu0 %v1917
        %2328 = vmatmul.mubr.bf16.gmra.mrb[0].mxu0 %v1916
        %v2329 = vpop.f32.mrb[0].mxu0
        %v2330 = vadd.f32 %v1957, %v2329
        %v2331 = vpop.f32.mrb[0].mxu0
        %v2332 = vpop.f32.mrb[0].mxu0
        %v2333 = vadd.f32 %v1957, %v2332
        %v2334 = vpop.f32.mrb[0].mxu0
        %2335 = vmatprep.mubr.bf16.mxu0 %v1919
        %2336 = vmatmul.mubr.bf16.gmra.mrb[0].mxu0 %v1918
        %v2337 = vpop.f32.mrb[0].mxu0
        %v2338 = vadd.f32 %v1957, %v2337
        %v2339 = vpop.f32.mrb[0].mxu0
        %v2340 = vpop.f32.mrb[0].mxu0
        %v2341 = vadd.f32 %v1957, %v2340
        %v2342 = vpop.f32.mrb[0].mxu0
        %2343 = vdwg.mxu0
        %2344 = vst [vmem:[%s271] sm:$0xff] %v2090
        %2345 = vst [vmem:[%s271 + $0x8] sm:$0xff] %v2093
        %2346 = vst [vmem:[%s271 + $0x10] sm:$0xff] %v2098
        %2347 = vst [vmem:[%s271 + $0x18] sm:$0xff] %v2101
        %2348 = vst [vmem:[%s271 + $0x20] sm:$0xff] %v2106
        %2349 = vst [vmem:[%s271 + $0x28] sm:$0xff] %v2109
        %2350 = vst [vmem:[%s271 + $0x30] sm:$0xff] %v2114
        %2351 = vst [vmem:[%s271 + $0x38] sm:$0xff] %v2117
        %2352 = vst [vmem:[%s271 + $0x40] sm:$0xff] %v2122
        %2353 = vst [vmem:[%s271 + $0x48] sm:$0xff] %v2125
        %2354 = vst [vmem:[%s271 + $0x50] sm:$0xff] %v2130
        %2355 = vst [vmem:[%s271 + $0x58] sm:$0xff] %v2133
        %2356 = vst [vmem:[%s271 + $0x60] sm:$0xff] %v2138
        %2357 = vst [vmem:[%s271 + $0x68] sm:$0xff] %v2141
        %2358 = vst [vmem:[%s271 + $0x70] sm:$0xff] %v2146
        %2359 = vst [vmem:[%s271 + $0x78] sm:$0xff] %v2149
        %2360 = vst [vmem:[%s271 + $0x80] sm:$0xff] %v2154
        %2361 = vst [vmem:[%s271 + $0x88] sm:$0xff] %v2157
        %2362 = vst [vmem:[%s271 + $0x90] sm:$0xff] %v2162
        %2363 = vst [vmem:[%s271 + $0x98] sm:$0xff] %v2165
        %2364 = vst [vmem:[%s271 + $0xa0] sm:$0xff] %v2170
        %2365 = vst [vmem:[%s271 + $0xa8] sm:$0xff] %v2173
        %2366 = vst [vmem:[%s271 + $0xb0] sm:$0xff] %v2178
        %2367 = vst [vmem:[%s271 + $0xb8] sm:$0xff] %v2181
        %2368 = vst [vmem:[%s271 + $0xc0] sm:$0xff] %v2186
        %2369 = vst [vmem:[%s271 + $0xc8] sm:$0xff] %v2189
        %2370 = vst [vmem:[%s271 + $0xd0] sm:$0xff] %v2194
        %2371 = vst [vmem:[%s271 + $0xd8] sm:$0xff] %v2197
        %2372 = vst [vmem:[%s271 + $0xe0] sm:$0xff] %v2202
        %2373 = vst [vmem:[%s271 + $0xe8] sm:$0xff] %v2205
        %2374 = vst [vmem:[%s271 + $0xf0] sm:$0xff] %v2210
        %2375 = vst [vmem:[%s271 + $0xf8] sm:$0xff] %v2213
        %2376 = vst [vmem:[%s271 + $0x100] sm:$0xff] %v2218
        %2377 = vst [vmem:[%s271 + $0x108] sm:$0xff] %v2221
        %2378 = vst [vmem:[%s271 + $0x110] sm:$0xff] %v2226
        %2379 = vst [vmem:[%s271 + $0x118] sm:$0xff] %v2229
        %2380 = vst [vmem:[%s271 + $0x120] sm:$0xff] %v2234
        %2381 = vst [vmem:[%s271 + $0x128] sm:$0xff] %v2237
        %2382 = vst [vmem:[%s271 + $0x130] sm:$0xff] %v2242
        %2383 = vst [vmem:[%s271 + $0x138] sm:$0xff] %v2245
        %2384 = vst [vmem:[%s271 + $0x140] sm:$0xff] %v2250
        %2385 = vst [vmem:[%s271 + $0x148] sm:$0xff] %v2253
        %2386 = vst [vmem:[%s271 + $0x150] sm:$0xff] %v2258
        %2387 = vst [vmem:[%s271 + $0x158] sm:$0xff] %v2261
        %2388 = vst [vmem:[%s271 + $0x160] sm:$0xff] %v2266
        %2389 = vst [vmem:[%s271 + $0x168] sm:$0xff] %v2269
        %2390 = vst [vmem:[%s271 + $0x170] sm:$0xff] %v2274
        %2391 = vst [vmem:[%s271 + $0x178] sm:$0xff] %v2277
        %2392 = vst [vmem:[%s271 + $0x180] sm:$0xff] %v2282
        %2393 = vst [vmem:[%s271 + $0x188] sm:$0xff] %v2285
        %2394 = vst [vmem:[%s271 + $0x190] sm:$0xff] %v2290
        %2395 = vst [vmem:[%s271 + $0x198] sm:$0xff] %v2293
        %2396 = vst [vmem:[%s271 + $0x1a0] sm:$0xff] %v2298
        %2397 = vst [vmem:[%s271 + $0x1a8] sm:$0xff] %v2301
        %2398 = vst [vmem:[%s271 + $0x1b0] sm:$0xff] %v2306
        %2399 = vst [vmem:[%s271 + $0x1b8] sm:$0xff] %v2309
        %2400 = vst [vmem:[%s271 + $0x1c0] sm:$0xff] %v2314
        %2401 = vst [vmem:[%s271 + $0x1c8] sm:$0xff] %v2317
        %2402 = vst [vmem:[%s271 + $0x1d0] sm:$0xff] %v2322
        %2403 = vst [vmem:[%s271 + $0x1d8] sm:$0xff] %v2325
        %2404 = vst [vmem:[%s271 + $0x1e0] sm:$0xff] %v2330
        %2405 = vst [vmem:[%s271 + $0x1e8] sm:$0xff] %v2333
        %2406 = vst [vmem:[%s271 + $0x1f0] sm:$0xff] %v2338
        %2407 = vst [vmem:[%s271 + $0x1f8] sm:$0xff] %v2341
        %s2408 = sand.u32 %s141, 1
        %s2409 = scalar_lea.sflag [#allocation4], %s2408
        %s2410 = sand.u32 %s141, 1
        %s2411 = smul.addr %s2410, 512
        %s2412 = scalar_lea.vmem [#allocation8], %s2411
        // Predicated region
        $region53: #{tpu_custom_call.1} parent=39 // pred_check
          %p2413 = pneg %p151
        $region54: #{tpu_custom_call.1} parent=39 // pred_check_branch
          %2415 = sbr.rel (%p2413) target = $region56
        $region55: #{tpu_custom_call.1} parent=39 // pred_region
          %s2416 = smul.u32 64, %s23
          %s2418 = ssub.s32 8192, 8192
          %2419 = vsyncadd %s2409, %s2418
          %s2420 = smul.addr %s2416, 128
          %s2421 = scalar_lea.hbm %s5, %s2420
          %s2422 = sshll.u32 %s2412, 4
          %s2423 = int_to_ptr.vmem [resolvable:$true] %s2422
          %2428 = dma.vmem_to_hbm [thread:$0]  %s2423, 8192, %s2421, %s2409, 128, 128, 8
        $region56: #{tpu_custom_call.1} parent=39 // pred_fallthru
          _
      $region40: #{tpu_custom_call.1} parent=5 // pred_fallthru
        _
      %p2429 = scmp.le.s32.totalorder 2, %s18
      // Predicated region
      $region57: #{tpu_custom_call.1} parent=5 // pred_check
        %p2430 = pneg %p2429
      $region58: #{tpu_custom_call.1} parent=5 // pred_check_branch
        %2432 = sbr.rel (%p2430) target = $region60
      $region59: #{tpu_custom_call.1} parent=5 // pred_region
        %s2433 = ssub.s32 %s18, 2
        // Predicated region
        $region61: #{tpu_custom_call.1} parent=59 // pred_check
          %p2434 = pneg %p157
        $region62: #{tpu_custom_call.1} parent=59 // pred_check_branch
          %2436 = sbr.rel (%p2434) target = $region64
        $region63: #{tpu_custom_call.1} parent=59 // pred_region
          %s2437 = sand.u32 %s142, 1
          %s2438 = scalar_lea.sflag [#allocation4], %s2437
          %s2439 = sand.u32 %s142, 1
          %s2440 = smul.addr %s2439, 512
          %s2441 = scalar_lea.vmem [#allocation8], %s2440
          %2442 = dma.done %s2438, 8192
        $region64: #{tpu_custom_call.1} parent=59 // pred_fallthru
          _
      $region60: #{tpu_custom_call.1} parent=5 // pred_fallthru
        _
    $region6: #{tpu_custom_call.1} parent=1 // loop_footer
      %s22 = sadd.s32 1, %s18
    $region7: #{tpu_custom_call.1} parent=1 // loop_footer_branch
      %17 = sbr.rel target = $region3
    $region8: #{tpu_custom_call.1} parent=1 // loop_exit
      _
    %2443 = vsyncpa [#allocation3], 1
    %s2444 = scalar_lea.sflag [#allocation3], 1
    %2445 = vsyncpa %s2444, 1
    %2446 = vsyncpa [#allocation6], 1
    %2447 = vsyncpa [#allocation4], 1
    %s2448 = scalar_lea.sflag [#allocation4], 1
    %2449 = vsyncpa %s2448, 1

</llo_original>
